<compile_context>
chip_gen: v7x
topology: tpu7x:2x2x1
jax: 0.10.0
libtpu: 0.0.40
codegen_flags: <defaults>
</compile_context>

<pallas_src>
import jax
import jax.numpy as jnp
from jax.experimental import pallas as pl
from jax.experimental.pallas import tpu as pltpu


def _gru_kernel(x_ref,
                wih_r_ref, wih_z_ref, wih_n_ref,
                whh_r_ref, whh_z_ref, whh_n_ref,
                b_r_ref, b_z_ref, b_in_ref, b_hn_ref,
                wfc_ref, bfc_ref,
                out_ref,
                gi_r_ref, gi_z_ref, gi_n_ref, hs_ref):
    """Single-invocation GRU + fc + sigmoid.

    x_ref      : (T, B, I)   time-major input, resident in VMEM
    wih_*_ref  : (I, H)      per-gate input->hidden weights (r, z, n)
    whh_*_ref  : (H, H)      per-gate hidden->hidden weights (r, z, n)
    b_r_ref    : (1, H)      b_ir + b_hr (pre-summed)
    b_z_ref    : (1, H)      b_iz + b_hz (pre-summed)
    b_in_ref   : (1, H)      b_in
    b_hn_ref   : (1, H)      b_hn (must stay inside r * (...))
    wfc_ref    : (H, O), bfc_ref : (1, O)
    out_ref    : (T, B) if O == 1 else (T, B, O)
    gi_*_ref   : (T, B, H)   VMEM scratch: hoisted input projections per gate
    hs_ref     : (T, B, H)   VMEM scratch: all hidden states
    """
    T, B, I = x_ref.shape
    H = whh_r_ref.shape[0]

    # ---- Prologue: hoisted input projections (no dependence on h) ----------
    # One well-shaped (T*B, I) x (I, H) matmul per gate; biases folded in.
    x2d = x_ref[...].reshape(T * B, I).astype(jnp.float32)
    gi_r_ref[...] = (jnp.dot(x2d, wih_r_ref[...],
                             preferred_element_type=jnp.float32)
                     + b_r_ref[...]).reshape(T, B, H)
    gi_z_ref[...] = (jnp.dot(x2d, wih_z_ref[...],
                             preferred_element_type=jnp.float32)
                     + b_z_ref[...]).reshape(T, B, H)
    gi_n_ref[...] = (jnp.dot(x2d, wih_n_ref[...],
                             preferred_element_type=jnp.float32)
                     + b_in_ref[...]).reshape(T, B, H)

    # Hoist weight / bias loads (and the bias broadcast) out of the loop.
    whh_r = whh_r_ref[...]
    whh_z = whh_z_ref[...]
    whh_n = whh_n_ref[...]
    b_hn = jnp.broadcast_to(b_hn_ref[...], (B, H))

    # ---- Serial recurrence: only h @ W_hh stays on the critical path -------
    def step(t, h):
        r = jax.nn.sigmoid(
            gi_r_ref[t] + jnp.dot(h, whh_r, preferred_element_type=jnp.float32))
        z = jax.nn.sigmoid(
            gi_z_ref[t] + jnp.dot(h, whh_z, preferred_element_type=jnp.float32))
        hn = jnp.dot(h, whh_n, preferred_element_type=jnp.float32) + b_hn
        n = jnp.tanh(gi_n_ref[t] + r * hn)
        h_new = (1.0 - z) * n + z * h
        hs_ref[t] = h_new
        return h_new

    h0 = jnp.zeros((B, H), dtype=jnp.float32)
    jax.lax.fori_loop(0, T, step, h0, unroll=True)

    # ---- Epilogue: batched fc + sigmoid, single writeback -------------------
    hs2d = hs_ref[...].reshape(T * B, H)
    y2d = jax.nn.sigmoid(
        jnp.dot(hs2d, wfc_ref[...], preferred_element_type=jnp.float32)
        + bfc_ref[...])                                   # (T*B, O)
    O = wfc_ref.shape[1]
    y = y2d.reshape(T, B, O)
    if out_ref.ndim == 2:          # O == 1: drop trailing size-1 dim in-kernel
        out_ref[...] = y[:, :, 0].astype(out_ref.dtype)
    else:
        out_ref[...] = y.astype(out_ref.dtype)


def knowledge_tracing_gru(x, w_ih, w_hh, b_ih, b_hh, w_fc, b_fc):
    """x: (B, T, I) batch-first, like the PyTorch module.

    Packed parameters use torch.nn.GRU gate order [r, z, n]:
      w_ih: (I, 3H), w_hh: (H, 3H), b_ih/b_hh: (1, 3H), w_fc: (H, O), b_fc: (1, O).
    Returns (B, T) for output_size == 1 (torch.squeeze(-1) semantics), else (B, T, O).
    """
    B, T, I = x.shape
    H = w_hh.shape[0]
    O = w_fc.shape[1]
    f32 = jnp.float32

    x_tm = jnp.transpose(x, (1, 0, 2)).astype(f32)          # (T, B, I) time-major

    # Split packed [r, z, n] weights into per-gate tiles; pre-sum r/z biases.
    wih_r, wih_z, wih_n = (w_ih[:, :H].astype(f32),
                           w_ih[:, H:2 * H].astype(f32),
                           w_ih[:, 2 * H:].astype(f32))
    whh_r, whh_z, whh_n = (w_hh[:, :H].astype(f32),
                           w_hh[:, H:2 * H].astype(f32),
                           w_hh[:, 2 * H:].astype(f32))
    b_r = (b_ih[:, :H] + b_hh[:, :H]).astype(f32)
    b_z = (b_ih[:, H:2 * H] + b_hh[:, H:2 * H]).astype(f32)
    b_in = b_ih[:, 2 * H:].astype(f32)
    b_hn = b_hh[:, 2 * H:].astype(f32)
    w_fc = w_fc.astype(f32)
    b_fc = b_fc.astype(f32)

    out_shape = (T, B) if O == 1 else (T, B, O)
    vmem = pltpu.MemorySpace.VMEM
    n_inputs = 13

    # Single kernel invocation: whole problem fits comfortably in VMEM at these
    # sizes. For long sequences, chunk T on a grid axis (keeping the hidden
    # state in scratch) and/or split the batch across TensorCores on v7x.
    out_tm = pl.pallas_call(
        _gru_kernel,
        out_shape=jax.ShapeDtypeStruct(out_shape, f32),
        in_specs=[pl.BlockSpec(memory_space=vmem)] * n_inputs,
        out_specs=pl.BlockSpec(memory_space=vmem),
        scratch_shapes=[
            pltpu.VMEM((T, B, H), f32),   # gi_r
            pltpu.VMEM((T, B, H), f32),   # gi_z
            pltpu.VMEM((T, B, H), f32),   # gi_n
            pltpu.VMEM((T, B, H), f32),   # hidden states
        ],
    )(x_tm, wih_r, wih_z, wih_n, whh_r, whh_z, whh_n,
      b_r, b_z, b_in, b_hn, w_fc, b_fc)

    if O == 1:
        return jnp.transpose(out_tm, (1, 0))                # (B, T)
    return jnp.transpose(out_tm, (1, 0, 2))                 # (B, T, O)


def _reference(x, w_ih, w_hh, b_ih, b_hh, w_fc, b_fc):
    """Pure-JAX GRU reference matching torch.nn.GRU gate order [r, z, n]."""
    B, T, I = x.shape
    H = w_hh.shape[0]

    def step(h, x_t):
        gi = x_t @ w_ih + b_ih[0]
        gh = h @ w_hh + b_hh[0]
        i_r, i_z, i_n = gi[:, :H], gi[:, H:2 * H], gi[:, 2 * H:]
        h_r, h_z, h_n = gh[:, :H], gh[:, H:2 * H], gh[:, 2 * H:]
        r = jax.nn.sigmoid(i_r + h_r)
        z = jax.nn.sigmoid(i_z + h_z)
        n = jnp.tanh(i_n + r * h_n)
        h_new = (1.0 - z) * n + z * h
        return h_new, h_new

    h0 = jnp.zeros((B, H), jnp.float32)
    _, hs = jax.lax.scan(step, h0, jnp.transpose(x, (1, 0, 2)))   # (T, B, H)
    y = jax.nn.sigmoid(jnp.einsum('tbh,ho->tbo', hs, w_fc) + b_fc[0])
    y = jnp.transpose(y, (1, 0, 2))
    return y[..., 0] if w_fc.shape[1] == 1 else y


if __name__ == "__main__":
    # input_size=8, hidden_size=32, output_size=1, batch=2, seq=8.
    B, T, I, H, O = 2, 8, 8, 32, 1

    key = jax.random.PRNGKey(0)
    keys = jax.random.split(key, 8)
    scale = 1.0 / jnp.sqrt(H)

    x = jax.random.normal(keys[0], (B, T, I), dtype=jnp.float32)

    # Parameters stored transposed relative to torch (so kernel does x @ W):
    # torch weight_ih_l0 is (3H, I) -> here (I, 3H); gate order [r, z, n].
    w_ih = jax.random.uniform(keys[1], (I, 3 * H), minval=-scale, maxval=scale, dtype=jnp.float32)
    w_hh = jax.random.uniform(keys[2], (H, 3 * H), minval=-scale, maxval=scale, dtype=jnp.float32)
    b_ih = jax.random.uniform(keys[3], (1, 3 * H), minval=-scale, maxval=scale, dtype=jnp.float32)
    b_hh = jax.random.uniform(keys[4], (1, 3 * H), minval=-scale, maxval=scale, dtype=jnp.float32)
    w_fc = jax.random.uniform(keys[5], (H, O), minval=-scale, maxval=scale, dtype=jnp.float32)
    b_fc = jax.random.uniform(keys[6], (1, O), minval=-scale, maxval=scale, dtype=jnp.float32)

    out = knowledge_tracing_gru(x, w_ih, w_hh, b_ih, b_hh, w_fc, b_fc)
    out = jax.block_until_ready(out)

    ref = _reference(x, w_ih, w_hh, b_ih, b_hh, w_fc, b_fc)
    assert out.shape == (B, T), f"bad shape {out.shape}"
    assert jnp.allclose(out, ref, atol=1e-5, rtol=1e-5), "mismatch vs reference"

    print("KERNEL_OK")
</pallas_src>

<mosaic_0001>
module attributes {stable_mosaic.version = 11 : i64} {
  func.func @_gru_kernel(%arg0: memref<8x2x8xf32, #tpu.memory_space<vmem>>, %arg1: memref<8x32xf32, #tpu.memory_space<vmem>>, %arg2: memref<8x32xf32, #tpu.memory_space<vmem>>, %arg3: memref<8x32xf32, #tpu.memory_space<vmem>>, %arg4: memref<32x32xf32, #tpu.memory_space<vmem>>, %arg5: memref<32x32xf32, #tpu.memory_space<vmem>>, %arg6: memref<32x32xf32, #tpu.memory_space<vmem>>, %arg7: memref<1x32xf32, #tpu.memory_space<vmem>>, %arg8: memref<1x32xf32, #tpu.memory_space<vmem>>, %arg9: memref<1x32xf32, #tpu.memory_space<vmem>>, %arg10: memref<1x32xf32, #tpu.memory_space<vmem>>, %arg11: memref<32x1xf32, #tpu.memory_space<vmem>>, %arg12: memref<1x1xf32, #tpu.memory_space<vmem>>, %arg13: memref<8x2xf32, #tpu.memory_space<vmem>>, %arg14: memref<8x2x32xf32, #tpu.memory_space<vmem>>, %arg15: memref<8x2x32xf32, #tpu.memory_space<vmem>>, %arg16: memref<8x2x32xf32, #tpu.memory_space<vmem>>, %arg17: memref<8x2x32xf32, #tpu.memory_space<vmem>>) attributes {dimension_semantics = [], scalar_prefetch = 0 : i64, scratch_operands = 4 : i64, tpu.core_type = #tpu.core_type<tc>} {
    %c0 = arith.constant 0 : index
    %c0_0 = arith.constant 0 : index
    %c0_1 = arith.constant 0 : index
    %0 = vector.load %arg0[%c0, %c0_0, %c0_1] : memref<8x2x8xf32, #tpu.memory_space<vmem>>, vector<8x2x8xf32>
    %1 = vector.shape_cast %0 : vector<8x2x8xf32> to vector<16x8xf32>
    %c0_2 = arith.constant 0 : index
    %c0_3 = arith.constant 0 : index
    %2 = vector.load %arg1[%c0_2, %c0_3] : memref<8x32xf32, #tpu.memory_space<vmem>>, vector<8x32xf32>
    %cst = arith.constant dense<0.000000e+00> : vector<16x32xf32>
    %3 = tpu.matmul %1, %2, %cst {dimension_numbers = #tpu.dot_dimension_numbers<[1], [0], [0], [1], [0, 0, 1, 1], [], []>} : vector<16x8xf32>, vector<8x32xf32>, vector<16x32xf32> -> vector<16x32xf32>
    %c0_4 = arith.constant 0 : index
    %c0_5 = arith.constant 0 : index
    %4 = vector.load %arg7[%c0_4, %c0_5] : memref<1x32xf32, #tpu.memory_space<vmem>>, vector<1x32xf32>
    %5 = vector.broadcast %4 : vector<1x32xf32> to vector<16x32xf32>
    %6 = arith.addf %3, %5 : vector<16x32xf32>
    %7 = vector.shape_cast %6 : vector<16x32xf32> to vector<8x2x32xf32>
    %c0_6 = arith.constant 0 : index
    %c0_7 = arith.constant 0 : index
    %c0_8 = arith.constant 0 : index
    %8 = vector.load %arg14[%c0_6, %c0_7, %c0_8] : memref<8x2x32xf32, #tpu.memory_space<vmem>>, vector<8x2x32xf32>
    tpu.vector_store %arg14[%c0_6, %c0_7, %c0_8], %7 {strides = array<i32>} : memref<8x2x32xf32, #tpu.memory_space<vmem>>, vector<8x2x32xf32>,
    %c0_9 = arith.constant 0 : index
    %c0_10 = arith.constant 0 : index
    %9 = vector.load %arg2[%c0_9, %c0_10] : memref<8x32xf32, #tpu.memory_space<vmem>>, vector<8x32xf32>
    %cst_11 = arith.constant dense<0.000000e+00> : vector<16x32xf32>
    %10 = tpu.matmul %1, %9, %cst_11 {dimension_numbers = #tpu.dot_dimension_numbers<[1], [0], [0], [1], [0, 0, 1, 1], [], []>} : vector<16x8xf32>, vector<8x32xf32>, vector<16x32xf32> -> vector<16x32xf32>
    %c0_12 = arith.constant 0 : index
    %c0_13 = arith.constant 0 : index
    %11 = vector.load %arg8[%c0_12, %c0_13] : memref<1x32xf32, #tpu.memory_space<vmem>>, vector<1x32xf32>
    %12 = vector.broadcast %11 : vector<1x32xf32> to vector<16x32xf32>
    %13 = arith.addf %10, %12 : vector<16x32xf32>
    %14 = vector.shape_cast %13 : vector<16x32xf32> to vector<8x2x32xf32>
    %c0_14 = arith.constant 0 : index
    %c0_15 = arith.constant 0 : index
    %c0_16 = arith.constant 0 : index
    %15 = vector.load %arg15[%c0_14, %c0_15, %c0_16] : memref<8x2x32xf32, #tpu.memory_space<vmem>>, vector<8x2x32xf32>
    tpu.vector_store %arg15[%c0_14, %c0_15, %c0_16], %14 {strides = array<i32>} : memref<8x2x32xf32, #tpu.memory_space<vmem>>, vector<8x2x32xf32>,
    %c0_17 = arith.constant 0 : index
    %c0_18 = arith.constant 0 : index
    %16 = vector.load %arg3[%c0_17, %c0_18] : memref<8x32xf32, #tpu.memory_space<vmem>>, vector<8x32xf32>
    %cst_19 = arith.constant dense<0.000000e+00> : vector<16x32xf32>
    %17 = tpu.matmul %1, %16, %cst_19 {dimension_numbers = #tpu.dot_dimension_numbers<[1], [0], [0], [1], [0, 0, 1, 1], [], []>} : vector<16x8xf32>, vector<8x32xf32>, vector<16x32xf32> -> vector<16x32xf32>
    %c0_20 = arith.constant 0 : index
    %c0_21 = arith.constant 0 : index
    %18 = vector.load %arg9[%c0_20, %c0_21] : memref<1x32xf32, #tpu.memory_space<vmem>>, vector<1x32xf32>
    %19 = vector.broadcast %18 : vector<1x32xf32> to vector<16x32xf32>
    %20 = arith.addf %17, %19 : vector<16x32xf32>
    %21 = vector.shape_cast %20 : vector<16x32xf32> to vector<8x2x32xf32>
    %c0_22 = arith.constant 0 : index
    %c0_23 = arith.constant 0 : index
    %c0_24 = arith.constant 0 : index
    %22 = vector.load %arg16[%c0_22, %c0_23, %c0_24] : memref<8x2x32xf32, #tpu.memory_space<vmem>>, vector<8x2x32xf32>
    tpu.vector_store %arg16[%c0_22, %c0_23, %c0_24], %21 {strides = array<i32>} : memref<8x2x32xf32, #tpu.memory_space<vmem>>, vector<8x2x32xf32>,
    %c0_25 = arith.constant 0 : index
    %c0_26 = arith.constant 0 : index
    %23 = vector.load %arg4[%c0_25, %c0_26] : memref<32x32xf32, #tpu.memory_space<vmem>>, vector<32x32xf32>
    %c0_27 = arith.constant 0 : index
    %c0_28 = arith.constant 0 : index
    %24 = vector.load %arg5[%c0_27, %c0_28] : memref<32x32xf32, #tpu.memory_space<vmem>>, vector<32x32xf32>
    %c0_29 = arith.constant 0 : index
    %c0_30 = arith.constant 0 : index
    %25 = vector.load %arg6[%c0_29, %c0_30] : memref<32x32xf32, #tpu.memory_space<vmem>>, vector<32x32xf32>
    %c0_31 = arith.constant 0 : index
    %c0_32 = arith.constant 0 : index
    %26 = vector.load %arg10[%c0_31, %c0_32] : memref<1x32xf32, #tpu.memory_space<vmem>>, vector<1x32xf32>
    %27 = vector.shape_cast %26 : vector<1x32xf32> to vector<1x32xf32>
    %28 = vector.broadcast %27 : vector<1x32xf32> to vector<2x32xf32>
    %cst_33 = arith.constant 0.000000e+00 : f32
    %29 = vector.broadcast %cst_33 : f32 to vector<2x32xf32>
    %c0_i32 = arith.constant 0 : i32
    %30 = arith.index_cast %c0_i32 : i32 to index
    %c0_34 = arith.constant 0 : index
    %c0_35 = arith.constant 0 : index
    %31 = vector.load %arg14[%30, %c0_34, %c0_35] : memref<8x2x32xf32, #tpu.memory_space<vmem>>, vector<1x2x32xf32>
    %32 = vector.shape_cast %31 : vector<1x2x32xf32> to vector<2x32xf32>
    %cst_36 = arith.constant dense<0.000000e+00> : vector<2x32xf32>
    %33 = tpu.matmul %29, %23, %cst_36 {dimension_numbers = #tpu.dot_dimension_numbers<[1], [0], [0], [1], [0, 0, 1, 1], [], []>} : vector<2x32xf32>, vector<32x32xf32>, vector<2x32xf32> -> vector<2x32xf32>
    %34 = arith.addf %32, %33 : vector<2x32xf32>
    %35 = arith.negf %34 : vector<2x32xf32>
    %36 = math.exp %35 : vector<2x32xf32>
    %cst_37 = arith.constant 1.000000e+00 : f32
    %37 = vector.broadcast %cst_37 : f32 to vector<2x32xf32>
    %38 = arith.addf %37, %36 : vector<2x32xf32>
    %39 = arith.divf %37, %38 : vector<2x32xf32>
    %40 = arith.index_cast %c0_i32 : i32 to index
    %c0_38 = arith.constant 0 : index
    %c0_39 = arith.constant 0 : index
    %41 = vector.load %arg15[%40, %c0_38, %c0_39] : memref<8x2x32xf32, #tpu.memory_space<vmem>>, vector<1x2x32xf32>
    %42 = vector.shape_cast %41 : vector<1x2x32xf32> to vector<2x32xf32>
    %cst_40 = arith.constant dense<0.000000e+00> : vector<2x32xf32>
    %43 = tpu.matmul %29, %24, %cst_40 {dimension_numbers = #tpu.dot_dimension_numbers<[1], [0], [0], [1], [0, 0, 1, 1], [], []>} : vector<2x32xf32>, vector<32x32xf32>, vector<2x32xf32> -> vector<2x32xf32>
    %44 = arith.addf %42, %43 : vector<2x32xf32>
    %45 = arith.negf %44 : vector<2x32xf32>
    %46 = math.exp %45 : vector<2x32xf32>
    %cst_41 = arith.constant 1.000000e+00 : f32
    %47 = vector.broadcast %cst_41 : f32 to vector<2x32xf32>
    %48 = arith.addf %47, %46 : vector<2x32xf32>
    %49 = arith.divf %47, %48 : vector<2x32xf32>
    %cst_42 = arith.constant dense<0.000000e+00> : vector<2x32xf32>
    %50 = tpu.matmul %29, %25, %cst_42 {dimension_numbers = #tpu.dot_dimension_numbers<[1], [0], [0], [1], [0, 0, 1, 1], [], []>} : vector<2x32xf32>, vector<32x32xf32>, vector<2x32xf32> -> vector<2x32xf32>
    %51 = arith.addf %50, %28 : vector<2x32xf32>
    %52 = arith.index_cast %c0_i32 : i32 to index
    %c0_43 = arith.constant 0 : index
    %c0_44 = arith.constant 0 : index
    %53 = vector.load %arg16[%52, %c0_43, %c0_44] : memref<8x2x32xf32, #tpu.memory_space<vmem>>, vector<1x2x32xf32>
    %54 = vector.shape_cast %53 : vector<1x2x32xf32> to vector<2x32xf32>
    %55 = arith.mulf %39, %51 : vector<2x32xf32>
    %56 = arith.addf %54, %55 : vector<2x32xf32>
    %57 = math.tanh %56 : vector<2x32xf32>
    %cst_45 = arith.constant 1.000000e+00 : f32
    %58 = vector.broadcast %cst_45 : f32 to vector<2x32xf32>
    %59 = arith.subf %58, %49 : vector<2x32xf32>
    %60 = arith.mulf %59, %57 : vector<2x32xf32>
    %61 = arith.mulf %49, %29 : vector<2x32xf32>
    %62 = arith.addf %60, %61 : vector<2x32xf32>
    %63 = arith.index_cast %c0_i32 : i32 to index
    %c0_46 = arith.constant 0 : index
    %c0_47 = arith.constant 0 : index
    %64 = vector.load %arg17[%63, %c0_46, %c0_47] : memref<8x2x32xf32, #tpu.memory_space<vmem>>, vector<1x2x32xf32>
    %65 = vector.shape_cast %64 : vector<1x2x32xf32> to vector<2x32xf32>
    %66 = vector.shape_cast %62 : vector<2x32xf32> to vector<1x2x32xf32>
    tpu.vector_store %arg17[%63, %c0_46, %c0_47], %66 {strides = array<i32>} : memref<8x2x32xf32, #tpu.memory_space<vmem>>, vector<1x2x32xf32>,
    %c1_i32 = arith.constant 1 : i32
    %67 = arith.index_cast %c1_i32 : i32 to index
    %c0_48 = arith.constant 0 : index
    %c0_49 = arith.constant 0 : index
    %68 = vector.load %arg14[%67, %c0_48, %c0_49] : memref<8x2x32xf32, #tpu.memory_space<vmem>>, vector<1x2x32xf32>
    %69 = vector.shape_cast %68 : vector<1x2x32xf32> to vector<2x32xf32>
    %cst_50 = arith.constant dense<0.000000e+00> : vector<2x32xf32>
    %70 = tpu.matmul %62, %23, %cst_50 {dimension_numbers = #tpu.dot_dimension_numbers<[1], [0], [0], [1], [0, 0, 1, 1], [], []>} : vector<2x32xf32>, vector<32x32xf32>, vector<2x32xf32> -> vector<2x32xf32>
    %71 = arith.addf %69, %70 : vector<2x32xf32>
    %72 = arith.negf %71 : vector<2x32xf32>
    %73 = math.exp %72 : vector<2x32xf32>
    %cst_51 = arith.constant 1.000000e+00 : f32
    %74 = vector.broadcast %cst_51 : f32 to vector<2x32xf32>
    %75 = arith.addf %74, %73 : vector<2x32xf32>
    %76 = arith.divf %74, %75 : vector<2x32xf32>
    %77 = arith.index_cast %c1_i32 : i32 to index
    %c0_52 = arith.constant 0 : index
    %c0_53 = arith.constant 0 : index
    %78 = vector.load %arg15[%77, %c0_52, %c0_53] : memref<8x2x32xf32, #tpu.memory_space<vmem>>, vector<1x2x32xf32>
    %79 = vector.shape_cast %78 : vector<1x2x32xf32> to vector<2x32xf32>
    %cst_54 = arith.constant dense<0.000000e+00> : vector<2x32xf32>
    %80 = tpu.matmul %62, %24, %cst_54 {dimension_numbers = #tpu.dot_dimension_numbers<[1], [0], [0], [1], [0, 0, 1, 1], [], []>} : vector<2x32xf32>, vector<32x32xf32>, vector<2x32xf32> -> vector<2x32xf32>
    %81 = arith.addf %79, %80 : vector<2x32xf32>
    %82 = arith.negf %81 : vector<2x32xf32>
    %83 = math.exp %82 : vector<2x32xf32>
    %cst_55 = arith.constant 1.000000e+00 : f32
    %84 = vector.broadcast %cst_55 : f32 to vector<2x32xf32>
    %85 = arith.addf %84, %83 : vector<2x32xf32>
    %86 = arith.divf %84, %85 : vector<2x32xf32>
    %cst_56 = arith.constant dense<0.000000e+00> : vector<2x32xf32>
    %87 = tpu.matmul %62, %25, %cst_56 {dimension_numbers = #tpu.dot_dimension_numbers<[1], [0], [0], [1], [0, 0, 1, 1], [], []>} : vector<2x32xf32>, vector<32x32xf32>, vector<2x32xf32> -> vector<2x32xf32>
    %88 = arith.addf %87, %28 : vector<2x32xf32>
    %89 = arith.index_cast %c1_i32 : i32 to index
    %c0_57 = arith.constant 0 : index
    %c0_58 = arith.constant 0 : index
    %90 = vector.load %arg16[%89, %c0_57, %c0_58] : memref<8x2x32xf32, #tpu.memory_space<vmem>>, vector<1x2x32xf32>
    %91 = vector.shape_cast %90 : vector<1x2x32xf32> to vector<2x32xf32>
    %92 = arith.mulf %76, %88 : vector<2x32xf32>
    %93 = arith.addf %91, %92 : vector<2x32xf32>
    %94 = math.tanh %93 : vector<2x32xf32>
    %cst_59 = arith.constant 1.000000e+00 : f32
    %95 = vector.broadcast %cst_59 : f32 to vector<2x32xf32>
    %96 = arith.subf %95, %86 : vector<2x32xf32>
    %97 = arith.mulf %96, %94 : vector<2x32xf32>
    %98 = arith.mulf %86, %62 : vector<2x32xf32>
    %99 = arith.addf %97, %98 : vector<2x32xf32>
    %100 = arith.index_cast %c1_i32 : i32 to index
    %c0_60 = arith.constant 0 : index
    %c0_61 = arith.constant 0 : index
    %101 = vector.load %arg17[%100, %c0_60, %c0_61] : memref<8x2x32xf32, #tpu.memory_space<vmem>>, vector<1x2x32xf32>
    %102 = vector.shape_cast %101 : vector<1x2x32xf32> to vector<2x32xf32>
    %103 = vector.shape_cast %99 : vector<2x32xf32> to vector<1x2x32xf32>
    tpu.vector_store %arg17[%100, %c0_60, %c0_61], %103 {strides = array<i32>} : memref<8x2x32xf32, #tpu.memory_space<vmem>>, vector<1x2x32xf32>,
    %c2_i32 = arith.constant 2 : i32
    %104 = arith.index_cast %c2_i32 : i32 to index
    %c0_62 = arith.constant 0 : index
    %c0_63 = arith.constant 0 : index
    %105 = vector.load %arg14[%104, %c0_62, %c0_63] : memref<8x2x32xf32, #tpu.memory_space<vmem>>, vector<1x2x32xf32>
    %106 = vector.shape_cast %105 : vector<1x2x32xf32> to vector<2x32xf32>
    %cst_64 = arith.constant dense<0.000000e+00> : vector<2x32xf32>
    %107 = tpu.matmul %99, %23, %cst_64 {dimension_numbers = #tpu.dot_dimension_numbers<[1], [0], [0], [1], [0, 0, 1, 1], [], []>} : vector<2x32xf32>, vector<32x32xf32>, vector<2x32xf32> -> vector<2x32xf32>
    %108 = arith.addf %106, %107 : vector<2x32xf32>
    %109 = arith.negf %108 : vector<2x32xf32>
    %110 = math.exp %109 : vector<2x32xf32>
    %cst_65 = arith.constant 1.000000e+00 : f32
    %111 = vector.broadcast %cst_65 : f32 to vector<2x32xf32>
    %112 = arith.addf %111, %110 : vector<2x32xf32>
    %113 = arith.divf %111, %112 : vector<2x32xf32>
    %114 = arith.index_cast %c2_i32 : i32 to index
    %c0_66 = arith.constant 0 : index
    %c0_67 = arith.constant 0 : index
    %115 = vector.load %arg15[%114, %c0_66, %c0_67] : memref<8x2x32xf32, #tpu.memory_space<vmem>>, vector<1x2x32xf32>
    %116 = vector.shape_cast %115 : vector<1x2x32xf32> to vector<2x32xf32>
    %cst_68 = arith.constant dense<0.000000e+00> : vector<2x32xf32>
    %117 = tpu.matmul %99, %24, %cst_68 {dimension_numbers = #tpu.dot_dimension_numbers<[1], [0], [0], [1], [0, 0, 1, 1], [], []>} : vector<2x32xf32>, vector<32x32xf32>, vector<2x32xf32> -> vector<2x32xf32>
    %118 = arith.addf %116, %117 : vector<2x32xf32>
    %119 = arith.negf %118 : vector<2x32xf32>
    %120 = math.exp %119 : vector<2x32xf32>
    %cst_69 = arith.constant 1.000000e+00 : f32
    %121 = vector.broadcast %cst_69 : f32 to vector<2x32xf32>
    %122 = arith.addf %121, %120 : vector<2x32xf32>
    %123 = arith.divf %121, %122 : vector<2x32xf32>
    %cst_70 = arith.constant dense<0.000000e+00> : vector<2x32xf32>
    %124 = tpu.matmul %99, %25, %cst_70 {dimension_numbers = #tpu.dot_dimension_numbers<[1], [0], [0], [1], [0, 0, 1, 1], [], []>} : vector<2x32xf32>, vector<32x32xf32>, vector<2x32xf32> -> vector<2x32xf32>
    %125 = arith.addf %124, %28 : vector<2x32xf32>
    %126 = arith.index_cast %c2_i32 : i32 to index
    %c0_71 = arith.constant 0 : index
    %c0_72 = arith.constant 0 : index
    %127 = vector.load %arg16[%126, %c0_71, %c0_72] : memref<8x2x32xf32, #tpu.memory_space<vmem>>, vector<1x2x32xf32>
    %128 = vector.shape_cast %127 : vector<1x2x32xf32> to vector<2x32xf32>
    %129 = arith.mulf %113, %125 : vector<2x32xf32>
    %130 = arith.addf %128, %129 : vector<2x32xf32>
    %131 = math.tanh %130 : vector<2x32xf32>
    %cst_73 = arith.constant 1.000000e+00 : f32
    %132 = vector.broadcast %cst_73 : f32 to vector<2x32xf32>
    %133 = arith.subf %132, %123 : vector<2x32xf32>
    %134 = arith.mulf %133, %131 : vector<2x32xf32>
    %135 = arith.mulf %123, %99 : vector<2x32xf32>
    %136 = arith.addf %134, %135 : vector<2x32xf32>
    %137 = arith.index_cast %c2_i32 : i32 to index
    %c0_74 = arith.constant 0 : index
    %c0_75 = arith.constant 0 : index
    %138 = vector.load %arg17[%137, %c0_74, %c0_75] : memref<8x2x32xf32, #tpu.memory_space<vmem>>, vector<1x2x32xf32>
    %139 = vector.shape_cast %138 : vector<1x2x32xf32> to vector<2x32xf32>
    %140 = vector.shape_cast %136 : vector<2x32xf32> to vector<1x2x32xf32>
    tpu.vector_store %arg17[%137, %c0_74, %c0_75], %140 {strides = array<i32>} : memref<8x2x32xf32, #tpu.memory_space<vmem>>, vector<1x2x32xf32>,
    %c3_i32 = arith.constant 3 : i32
    %141 = arith.index_cast %c3_i32 : i32 to index
    %c0_76 = arith.constant 0 : index
    %c0_77 = arith.constant 0 : index
    %142 = vector.load %arg14[%141, %c0_76, %c0_77] : memref<8x2x32xf32, #tpu.memory_space<vmem>>, vector<1x2x32xf32>
    %143 = vector.shape_cast %142 : vector<1x2x32xf32> to vector<2x32xf32>
    %cst_78 = arith.constant dense<0.000000e+00> : vector<2x32xf32>
    %144 = tpu.matmul %136, %23, %cst_78 {dimension_numbers = #tpu.dot_dimension_numbers<[1], [0], [0], [1], [0, 0, 1, 1], [], []>} : vector<2x32xf32>, vector<32x32xf32>, vector<2x32xf32> -> vector<2x32xf32>
    %145 = arith.addf %143, %144 : vector<2x32xf32>
    %146 = arith.negf %145 : vector<2x32xf32>
    %147 = math.exp %146 : vector<2x32xf32>
    %cst_79 = arith.constant 1.000000e+00 : f32
    %148 = vector.broadcast %cst_79 : f32 to vector<2x32xf32>
    %149 = arith.addf %148, %147 : vector<2x32xf32>
    %150 = arith.divf %148, %149 : vector<2x32xf32>
    %151 = arith.index_cast %c3_i32 : i32 to index
    %c0_80 = arith.constant 0 : index
    %c0_81 = arith.constant 0 : index
    %152 = vector.load %arg15[%151, %c0_80, %c0_81] : memref<8x2x32xf32, #tpu.memory_space<vmem>>, vector<1x2x32xf32>
    %153 = vector.shape_cast %152 : vector<1x2x32xf32> to vector<2x32xf32>
    %cst_82 = arith.constant dense<0.000000e+00> : vector<2x32xf32>
    %154 = tpu.matmul %136, %24, %cst_82 {dimension_numbers = #tpu.dot_dimension_numbers<[1], [0], [0], [1], [0, 0, 1, 1], [], []>} : vector<2x32xf32>, vector<32x32xf32>, vector<2x32xf32> -> vector<2x32xf32>
    %155 = arith.addf %153, %154 : vector<2x32xf32>
    %156 = arith.negf %155 : vector<2x32xf32>
    %157 = math.exp %156 : vector<2x32xf32>
    %cst_83 = arith.constant 1.000000e+00 : f32
    %158 = vector.broadcast %cst_83 : f32 to vector<2x32xf32>
    %159 = arith.addf %158, %157 : vector<2x32xf32>
    %160 = arith.divf %158, %159 : vector<2x32xf32>
    %cst_84 = arith.constant dense<0.000000e+00> : vector<2x32xf32>
    %161 = tpu.matmul %136, %25, %cst_84 {dimension_numbers = #tpu.dot_dimension_numbers<[1], [0], [0], [1], [0, 0, 1, 1], [], []>} : vector<2x32xf32>, vector<32x32xf32>, vector<2x32xf32> -> vector<2x32xf32>
    %162 = arith.addf %161, %28 : vector<2x32xf32>
    %163 = arith.index_cast %c3_i32 : i32 to index
    %c0_85 = arith.constant 0 : index
    %c0_86 = arith.constant 0 : index
    %164 = vector.load %arg16[%163, %c0_85, %c0_86] : memref<8x2x32xf32, #tpu.memory_space<vmem>>, vector<1x2x32xf32>
    %165 = vector.shape_cast %164 : vector<1x2x32xf32> to vector<2x32xf32>
    %166 = arith.mulf %150, %162 : vector<2x32xf32>
    %167 = arith.addf %165, %166 : vector<2x32xf32>
    %168 = math.tanh %167 : vector<2x32xf32>
    %cst_87 = arith.constant 1.000000e+00 : f32
    %169 = vector.broadcast %cst_87 : f32 to vector<2x32xf32>
    %170 = arith.subf %169, %160 : vector<2x32xf32>
    %171 = arith.mulf %170, %168 : vector<2x32xf32>
    %172 = arith.mulf %160, %136 : vector<2x32xf32>
    %173 = arith.addf %171, %172 : vector<2x32xf32>
    %174 = arith.index_cast %c3_i32 : i32 to index
    %c0_88 = arith.constant 0 : index
    %c0_89 = arith.constant 0 : index
    %175 = vector.load %arg17[%174, %c0_88, %c0_89] : memref<8x2x32xf32, #tpu.memory_space<vmem>>, vector<1x2x32xf32>
    %176 = vector.shape_cast %175 : vector<1x2x32xf32> to vector<2x32xf32>
    %177 = vector.shape_cast %173 : vector<2x32xf32> to vector<1x2x32xf32>
    tpu.vector_store %arg17[%174, %c0_88, %c0_89], %177 {strides = array<i32>} : memref<8x2x32xf32, #tpu.memory_space<vmem>>, vector<1x2x32xf32>,
    %c4_i32 = arith.constant 4 : i32
    %178 = arith.index_cast %c4_i32 : i32 to index
    %c0_90 = arith.constant 0 : index
    %c0_91 = arith.constant 0 : index
    %179 = vector.load %arg14[%178, %c0_90, %c0_91] : memref<8x2x32xf32, #tpu.memory_space<vmem>>, vector<1x2x32xf32>
    %180 = vector.shape_cast %179 : vector<1x2x32xf32> to vector<2x32xf32>
    %cst_92 = arith.constant dense<0.000000e+00> : vector<2x32xf32>
    %181 = tpu.matmul %173, %23, %cst_92 {dimension_numbers = #tpu.dot_dimension_numbers<[1], [0], [0], [1], [0, 0, 1, 1], [], []>} : vector<2x32xf32>, vector<32x32xf32>, vector<2x32xf32> -> vector<2x32xf32>
    %182 = arith.addf %180, %181 : vector<2x32xf32>
    %183 = arith.negf %182 : vector<2x32xf32>
    %184 = math.exp %183 : vector<2x32xf32>
    %cst_93 = arith.constant 1.000000e+00 : f32
    %185 = vector.broadcast %cst_93 : f32 to vector<2x32xf32>
    %186 = arith.addf %185, %184 : vector<2x32xf32>
    %187 = arith.divf %185, %186 : vector<2x32xf32>
    %188 = arith.index_cast %c4_i32 : i32 to index
    %c0_94 = arith.constant 0 : index
    %c0_95 = arith.constant 0 : index
    %189 = vector.load %arg15[%188, %c0_94, %c0_95] : memref<8x2x32xf32, #tpu.memory_space<vmem>>, vector<1x2x32xf32>
    %190 = vector.shape_cast %189 : vector<1x2x32xf32> to vector<2x32xf32>
    %cst_96 = arith.constant dense<0.000000e+00> : vector<2x32xf32>
    %191 = tpu.matmul %173, %24, %cst_96 {dimension_numbers = #tpu.dot_dimension_numbers<[1], [0], [0], [1], [0, 0, 1, 1], [], []>} : vector<2x32xf32>, vector<32x32xf32>, vector<2x32xf32> -> vector<2x32xf32>
    %192 = arith.addf %190, %191 : vector<2x32xf32>
    %193 = arith.negf %192 : vector<2x32xf32>
    %194 = math.exp %193 : vector<2x32xf32>
    %cst_97 = arith.constant 1.000000e+00 : f32
    %195 = vector.broadcast %cst_97 : f32 to vector<2x32xf32>
    %196 = arith.addf %195, %194 : vector<2x32xf32>
    %197 = arith.divf %195, %196 : vector<2x32xf32>
    %cst_98 = arith.constant dense<0.000000e+00> : vector<2x32xf32>
    %198 = tpu.matmul %173, %25, %cst_98 {dimension_numbers = #tpu.dot_dimension_numbers<[1], [0], [0], [1], [0, 0, 1, 1], [], []>} : vector<2x32xf32>, vector<32x32xf32>, vector<2x32xf32> -> vector<2x32xf32>
    %199 = arith.addf %198, %28 : vector<2x32xf32>
    %200 = arith.index_cast %c4_i32 : i32 to index
    %c0_99 = arith.constant 0 : index
    %c0_100 = arith.constant 0 : index
    %201 = vector.load %arg16[%200, %c0_99, %c0_100] : memref<8x2x32xf32, #tpu.memory_space<vmem>>, vector<1x2x32xf32>
    %202 = vector.shape_cast %201 : vector<1x2x32xf32> to vector<2x32xf32>
    %203 = arith.mulf %187, %199 : vector<2x32xf32>
    %204 = arith.addf %202, %203 : vector<2x32xf32>
    %205 = math.tanh %204 : vector<2x32xf32>
    %cst_101 = arith.constant 1.000000e+00 : f32
    %206 = vector.broadcast %cst_101 : f32 to vector<2x32xf32>
    %207 = arith.subf %206, %197 : vector<2x32xf32>
    %208 = arith.mulf %207, %205 : vector<2x32xf32>
    %209 = arith.mulf %197, %173 : vector<2x32xf32>
    %210 = arith.addf %208, %209 : vector<2x32xf32>
    %211 = arith.index_cast %c4_i32 : i32 to index
    %c0_102 = arith.constant 0 : index
    %c0_103 = arith.constant 0 : index
    %212 = vector.load %arg17[%211, %c0_102, %c0_103] : memref<8x2x32xf32, #tpu.memory_space<vmem>>, vector<1x2x32xf32>
    %213 = vector.shape_cast %212 : vector<1x2x32xf32> to vector<2x32xf32>
    %214 = vector.shape_cast %210 : vector<2x32xf32> to vector<1x2x32xf32>
    tpu.vector_store %arg17[%211, %c0_102, %c0_103], %214 {strides = array<i32>} : memref<8x2x32xf32, #tpu.memory_space<vmem>>, vector<1x2x32xf32>,
    %c5_i32 = arith.constant 5 : i32
    %215 = arith.index_cast %c5_i32 : i32 to index
    %c0_104 = arith.constant 0 : index
    %c0_105 = arith.constant 0 : index
    %216 = vector.load %arg14[%215, %c0_104, %c0_105] : memref<8x2x32xf32, #tpu.memory_space<vmem>>, vector<1x2x32xf32>
    %217 = vector.shape_cast %216 : vector<1x2x32xf32> to vector<2x32xf32>
    %cst_106 = arith.constant dense<0.000000e+00> : vector<2x32xf32>
    %218 = tpu.matmul %210, %23, %cst_106 {dimension_numbers = #tpu.dot_dimension_numbers<[1], [0], [0], [1], [0, 0, 1, 1], [], []>} : vector<2x32xf32>, vector<32x32xf32>, vector<2x32xf32> -> vector<2x32xf32>
    %219 = arith.addf %217, %218 : vector<2x32xf32>
    %220 = arith.negf %219 : vector<2x32xf32>
    %221 = math.exp %220 : vector<2x32xf32>
    %cst_107 = arith.constant 1.000000e+00 : f32
    %222 = vector.broadcast %cst_107 : f32 to vector<2x32xf32>
    %223 = arith.addf %222, %221 : vector<2x32xf32>
    %224 = arith.divf %222, %223 : vector<2x32xf32>
    %225 = arith.index_cast %c5_i32 : i32 to index
    %c0_108 = arith.constant 0 : index
    %c0_109 = arith.constant 0 : index
    %226 = vector.load %arg15[%225, %c0_108, %c0_109] : memref<8x2x32xf32, #tpu.memory_space<vmem>>, vector<1x2x32xf32>
    %227 = vector.shape_cast %226 : vector<1x2x32xf32> to vector<2x32xf32>
    %cst_110 = arith.constant dense<0.000000e+00> : vector<2x32xf32>
    %228 = tpu.matmul %210, %24, %cst_110 {dimension_numbers = #tpu.dot_dimension_numbers<[1], [0], [0], [1], [0, 0, 1, 1], [], []>} : vector<2x32xf32>, vector<32x32xf32>, vector<2x32xf32> -> vector<2x32xf32>
    %229 = arith.addf %227, %228 : vector<2x32xf32>
    %230 = arith.negf %229 : vector<2x32xf32>
    %231 = math.exp %230 : vector<2x32xf32>
    %cst_111 = arith.constant 1.000000e+00 : f32
    %232 = vector.broadcast %cst_111 : f32 to vector<2x32xf32>
    %233 = arith.addf %232, %231 : vector<2x32xf32>
    %234 = arith.divf %232, %233 : vector<2x32xf32>
    %cst_112 = arith.constant dense<0.000000e+00> : vector<2x32xf32>
    %235 = tpu.matmul %210, %25, %cst_112 {dimension_numbers = #tpu.dot_dimension_numbers<[1], [0], [0], [1], [0, 0, 1, 1], [], []>} : vector<2x32xf32>, vector<32x32xf32>, vector<2x32xf32> -> vector<2x32xf32>
    %236 = arith.addf %235, %28 : vector<2x32xf32>
    %237 = arith.index_cast %c5_i32 : i32 to index
    %c0_113 = arith.constant 0 : index
    %c0_114 = arith.constant 0 : index
    %238 = vector.load %arg16[%237, %c0_113, %c0_114] : memref<8x2x32xf32, #tpu.memory_space<vmem>>, vector<1x2x32xf32>
    %239 = vector.shape_cast %238 : vector<1x2x32xf32> to vector<2x32xf32>
    %240 = arith.mulf %224, %236 : vector<2x32xf32>
    %241 = arith.addf %239, %240 : vector<2x32xf32>
    %242 = math.tanh %241 : vector<2x32xf32>
    %cst_115 = arith.constant 1.000000e+00 : f32
    %243 = vector.broadcast %cst_115 : f32 to vector<2x32xf32>
    %244 = arith.subf %243, %234 : vector<2x32xf32>
    %245 = arith.mulf %244, %242 : vector<2x32xf32>
    %246 = arith.mulf %234, %210 : vector<2x32xf32>
    %247 = arith.addf %245, %246 : vector<2x32xf32>
    %248 = arith.index_cast %c5_i32 : i32 to index
    %c0_116 = arith.constant 0 : index
    %c0_117 = arith.constant 0 : index
    %249 = vector.load %arg17[%248, %c0_116, %c0_117] : memref<8x2x32xf32, #tpu.memory_space<vmem>>, vector<1x2x32xf32>
    %250 = vector.shape_cast %249 : vector<1x2x32xf32> to vector<2x32xf32>
    %251 = vector.shape_cast %247 : vector<2x32xf32> to vector<1x2x32xf32>
    tpu.vector_store %arg17[%248, %c0_116, %c0_117], %251 {strides = array<i32>} : memref<8x2x32xf32, #tpu.memory_space<vmem>>, vector<1x2x32xf32>,
    %c6_i32 = arith.constant 6 : i32
    %252 = arith.index_cast %c6_i32 : i32 to index
    %c0_118 = arith.constant 0 : index
    %c0_119 = arith.constant 0 : index
    %253 = vector.load %arg14[%252, %c0_118, %c0_119] : memref<8x2x32xf32, #tpu.memory_space<vmem>>, vector<1x2x32xf32>
    %254 = vector.shape_cast %253 : vector<1x2x32xf32> to vector<2x32xf32>
    %cst_120 = arith.constant dense<0.000000e+00> : vector<2x32xf32>
    %255 = tpu.matmul %247, %23, %cst_120 {dimension_numbers = #tpu.dot_dimension_numbers<[1], [0], [0], [1], [0, 0, 1, 1], [], []>} : vector<2x32xf32>, vector<32x32xf32>, vector<2x32xf32> -> vector<2x32xf32>
    %256 = arith.addf %254, %255 : vector<2x32xf32>
    %257 = arith.negf %256 : vector<2x32xf32>
    %258 = math.exp %257 : vector<2x32xf32>
    %cst_121 = arith.constant 1.000000e+00 : f32
    %259 = vector.broadcast %cst_121 : f32 to vector<2x32xf32>
    %260 = arith.addf %259, %258 : vector<2x32xf32>
    %261 = arith.divf %259, %260 : vector<2x32xf32>
    %262 = arith.index_cast %c6_i32 : i32 to index
    %c0_122 = arith.constant 0 : index
    %c0_123 = arith.constant 0 : index
    %263 = vector.load %arg15[%262, %c0_122, %c0_123] : memref<8x2x32xf32, #tpu.memory_space<vmem>>, vector<1x2x32xf32>
    %264 = vector.shape_cast %263 : vector<1x2x32xf32> to vector<2x32xf32>
    %cst_124 = arith.constant dense<0.000000e+00> : vector<2x32xf32>
    %265 = tpu.matmul %247, %24, %cst_124 {dimension_numbers = #tpu.dot_dimension_numbers<[1], [0], [0], [1], [0, 0, 1, 1], [], []>} : vector<2x32xf32>, vector<32x32xf32>, vector<2x32xf32> -> vector<2x32xf32>
    %266 = arith.addf %264, %265 : vector<2x32xf32>
    %267 = arith.negf %266 : vector<2x32xf32>
    %268 = math.exp %267 : vector<2x32xf32>
    %cst_125 = arith.constant 1.000000e+00 : f32
    %269 = vector.broadcast %cst_125 : f32 to vector<2x32xf32>
    %270 = arith.addf %269, %268 : vector<2x32xf32>
    %271 = arith.divf %269, %270 : vector<2x32xf32>
    %cst_126 = arith.constant dense<0.000000e+00> : vector<2x32xf32>
    %272 = tpu.matmul %247, %25, %cst_126 {dimension_numbers = #tpu.dot_dimension_numbers<[1], [0], [0], [1], [0, 0, 1, 1], [], []>} : vector<2x32xf32>, vector<32x32xf32>, vector<2x32xf32> -> vector<2x32xf32>
    %273 = arith.addf %272, %28 : vector<2x32xf32>
    %274 = arith.index_cast %c6_i32 : i32 to index
    %c0_127 = arith.constant 0 : index
    %c0_128 = arith.constant 0 : index
    %275 = vector.load %arg16[%274, %c0_127, %c0_128] : memref<8x2x32xf32, #tpu.memory_space<vmem>>, vector<1x2x32xf32>
    %276 = vector.shape_cast %275 : vector<1x2x32xf32> to vector<2x32xf32>
    %277 = arith.mulf %261, %273 : vector<2x32xf32>
    %278 = arith.addf %276, %277 : vector<2x32xf32>
    %279 = math.tanh %278 : vector<2x32xf32>
    %cst_129 = arith.constant 1.000000e+00 : f32
    %280 = vector.broadcast %cst_129 : f32 to vector<2x32xf32>
    %281 = arith.subf %280, %271 : vector<2x32xf32>
    %282 = arith.mulf %281, %279 : vector<2x32xf32>
    %283 = arith.mulf %271, %247 : vector<2x32xf32>
    %284 = arith.addf %282, %283 : vector<2x32xf32>
    %285 = arith.index_cast %c6_i32 : i32 to index
    %c0_130 = arith.constant 0 : index
    %c0_131 = arith.constant 0 : index
    %286 = vector.load %arg17[%285, %c0_130, %c0_131] : memref<8x2x32xf32, #tpu.memory_space<vmem>>, vector<1x2x32xf32>
    %287 = vector.shape_cast %286 : vector<1x2x32xf32> to vector<2x32xf32>
    %288 = vector.shape_cast %284 : vector<2x32xf32> to vector<1x2x32xf32>
    tpu.vector_store %arg17[%285, %c0_130, %c0_131], %288 {strides = array<i32>} : memref<8x2x32xf32, #tpu.memory_space<vmem>>, vector<1x2x32xf32>,
    %c7_i32 = arith.constant 7 : i32
    %289 = arith.index_cast %c7_i32 : i32 to index
    %c0_132 = arith.constant 0 : index
    %c0_133 = arith.constant 0 : index
    %290 = vector.load %arg14[%289, %c0_132, %c0_133] : memref<8x2x32xf32, #tpu.memory_space<vmem>>, vector<1x2x32xf32>
    %291 = vector.shape_cast %290 : vector<1x2x32xf32> to vector<2x32xf32>
    %cst_134 = arith.constant dense<0.000000e+00> : vector<2x32xf32>
    %292 = tpu.matmul %284, %23, %cst_134 {dimension_numbers = #tpu.dot_dimension_numbers<[1], [0], [0], [1], [0, 0, 1, 1], [], []>} : vector<2x32xf32>, vector<32x32xf32>, vector<2x32xf32> -> vector<2x32xf32>
    %293 = arith.addf %291, %292 : vector<2x32xf32>
    %294 = arith.negf %293 : vector<2x32xf32>
    %295 = math.exp %294 : vector<2x32xf32>
    %cst_135 = arith.constant 1.000000e+00 : f32
    %296 = vector.broadcast %cst_135 : f32 to vector<2x32xf32>
    %297 = arith.addf %296, %295 : vector<2x32xf32>
    %298 = arith.divf %296, %297 : vector<2x32xf32>
    %299 = arith.index_cast %c7_i32 : i32 to index
    %c0_136 = arith.constant 0 : index
    %c0_137 = arith.constant 0 : index
    %300 = vector.load %arg15[%299, %c0_136, %c0_137] : memref<8x2x32xf32, #tpu.memory_space<vmem>>, vector<1x2x32xf32>
    %301 = vector.shape_cast %300 : vector<1x2x32xf32> to vector<2x32xf32>
    %cst_138 = arith.constant dense<0.000000e+00> : vector<2x32xf32>
    %302 = tpu.matmul %284, %24, %cst_138 {dimension_numbers = #tpu.dot_dimension_numbers<[1], [0], [0], [1], [0, 0, 1, 1], [], []>} : vector<2x32xf32>, vector<32x32xf32>, vector<2x32xf32> -> vector<2x32xf32>
    %303 = arith.addf %301, %302 : vector<2x32xf32>
    %304 = arith.negf %303 : vector<2x32xf32>
    %305 = math.exp %304 : vector<2x32xf32>
    %cst_139 = arith.constant 1.000000e+00 : f32
    %306 = vector.broadcast %cst_139 : f32 to vector<2x32xf32>
    %307 = arith.addf %306, %305 : vector<2x32xf32>
    %308 = arith.divf %306, %307 : vector<2x32xf32>
    %cst_140 = arith.constant dense<0.000000e+00> : vector<2x32xf32>
    %309 = tpu.matmul %284, %25, %cst_140 {dimension_numbers = #tpu.dot_dimension_numbers<[1], [0], [0], [1], [0, 0, 1, 1], [], []>} : vector<2x32xf32>, vector<32x32xf32>, vector<2x32xf32> -> vector<2x32xf32>
    %310 = arith.addf %309, %28 : vector<2x32xf32>
    %311 = arith.index_cast %c7_i32 : i32 to index
    %c0_141 = arith.constant 0 : index
    %c0_142 = arith.constant 0 : index
    %312 = vector.load %arg16[%311, %c0_141, %c0_142] : memref<8x2x32xf32, #tpu.memory_space<vmem>>, vector<1x2x32xf32>
    %313 = vector.shape_cast %312 : vector<1x2x32xf32> to vector<2x32xf32>
    %314 = arith.mulf %298, %310 : vector<2x32xf32>
    %315 = arith.addf %313, %314 : vector<2x32xf32>
    %316 = math.tanh %315 : vector<2x32xf32>
    %cst_143 = arith.constant 1.000000e+00 : f32
    %317 = vector.broadcast %cst_143 : f32 to vector<2x32xf32>
    %318 = arith.subf %317, %308 : vector<2x32xf32>
    %319 = arith.mulf %318, %316 : vector<2x32xf32>
    %320 = arith.mulf %308, %284 : vector<2x32xf32>
    %321 = arith.addf %319, %320 : vector<2x32xf32>
    %322 = arith.index_cast %c7_i32 : i32 to index
    %c0_144 = arith.constant 0 : index
    %c0_145 = arith.constant 0 : index
    %323 = vector.load %arg17[%322, %c0_144, %c0_145] : memref<8x2x32xf32, #tpu.memory_space<vmem>>, vector<1x2x32xf32>
    %324 = vector.shape_cast %323 : vector<1x2x32xf32> to vector<2x32xf32>
    %325 = vector.shape_cast %321 : vector<2x32xf32> to vector<1x2x32xf32>
    tpu.vector_store %arg17[%322, %c0_144, %c0_145], %325 {strides = array<i32>} : memref<8x2x32xf32, #tpu.memory_space<vmem>>, vector<1x2x32xf32>,
    %c8_i32 = arith.constant 8 : i32
    %c0_146 = arith.constant 0 : index
    %c0_147 = arith.constant 0 : index
    %c0_148 = arith.constant 0 : index
    %326 = vector.load %arg17[%c0_146, %c0_147, %c0_148] : memref<8x2x32xf32, #tpu.memory_space<vmem>>, vector<8x2x32xf32>
    %327 = vector.shape_cast %326 : vector<8x2x32xf32> to vector<16x32xf32>
    %c0_149 = arith.constant 0 : index
    %c0_150 = arith.constant 0 : index
    %328 = vector.load %arg11[%c0_149, %c0_150] : memref<32x1xf32, #tpu.memory_space<vmem>>, vector<32x1xf32>
    %cst_151 = arith.constant dense<0.000000e+00> : vector<16x1xf32>
    %329 = tpu.matmul %327, %328, %cst_151 {dimension_numbers = #tpu.dot_dimension_numbers<[1], [0], [0], [1], [0, 0, 1, 1], [], []>} : vector<16x32xf32>, vector<32x1xf32>, vector<16x1xf32> -> vector<16x1xf32>
    %c0_152 = arith.constant 0 : index
    %c0_153 = arith.constant 0 : index
    %330 = vector.load %arg12[%c0_152, %c0_153] : memref<1x1xf32, #tpu.memory_space<vmem>>, vector<1x1xf32>
    %331 = vector.broadcast %330 : vector<1x1xf32> to vector<16x1xf32>
    %332 = arith.addf %329, %331 : vector<16x1xf32>
    %333 = arith.negf %332 : vector<16x1xf32>
    %334 = math.exp %333 : vector<16x1xf32>
    %cst_154 = arith.constant 1.000000e+00 : f32
    %335 = vector.broadcast %cst_154 : f32 to vector<16x1xf32>
    %336 = arith.addf %335, %334 : vector<16x1xf32>
    %337 = arith.divf %335, %336 : vector<16x1xf32>
    %338 = vector.shape_cast %337 : vector<16x1xf32> to vector<8x2x1xf32>
    %339 = vector.shape_cast %338 : vector<8x2x1xf32> to vector<8x2xf32>
    %c0_155 = arith.constant 0 : index
    %c0_156 = arith.constant 0 : index
    %340 = vector.load %arg13[%c0_155, %c0_156] : memref<8x2xf32, #tpu.memory_space<vmem>>, vector<8x2xf32>
    tpu.vector_store %arg13[%c0_155, %c0_156], %339 {strides = array<i32>} : memref<8x2xf32, #tpu.memory_space<vmem>>, vector<8x2xf32>,
    return
  }
}

</mosaic_0001>

<llo_original>
// kernel: tpu_custom_call.1
$region0: #{tpu_custom_call.1}
  #allocation0 [shape = 'u32[]', space=smem, size = 0x4, offset = 0x4, fixed_abs, tag = 'smem constant byte address 0x4 - core index']
  #allocation1 [shape = 'u32[144,128]{1,0:T(1,128)}', space=vmem, size = 0x12000, scoped, tag = 'internal scratch']
  #allocation2 [shape = 'f32[8,2,32]{2,1,0:T(2,128)}', space=vmem, size = 0x2000, scoped, tag = 'scratch operand']
  #allocation3 [shape = 'f32[8,2,32]{2,1,0:T(2,128)}', space=vmem, size = 0x2000, scoped, tag = 'scratch operand']
  #allocation4 [shape = 'f32[8,2,32]{2,1,0:T(2,128)}', space=vmem, size = 0x2000, scoped, tag = 'scratch operand']
  #allocation5 [shape = 'f32[8,2,32]{2,1,0:T(2,128)}', space=vmem, size = 0x2000, scoped, tag = 'scratch operand']
  #allocation6 [shape = 'f32[1,1]{1,0:T(1,128)S(1)}', space=vmem, size = 0x200, scoped, tag = 'scoped memory for tpu_custom_call.1']
  %s0 = inlined_call_operand.vmem [shape: f32[8,2,8], index: 0, kind: input, shape index: {}]
  %s1 = inlined_call_operand.hbm [shape: f32[8,32], index: 1, kind: input, shape index: {}]
  %s2 = inlined_call_operand.hbm [shape: f32[8,32], index: 2, kind: input, shape index: {}]
  %s3 = inlined_call_operand.hbm [shape: f32[8,32], index: 3, kind: input, shape index: {}]
  %s4 = inlined_call_operand.vmem [shape: f32[32,32], index: 4, kind: input, shape index: {}]
  %s5 = inlined_call_operand.hbm [shape: f32[32,32], index: 5, kind: input, shape index: {}]
  %s6 = inlined_call_operand.hbm [shape: f32[32,32], index: 6, kind: input, shape index: {}]
  %s7 = inlined_call_operand.vmem [shape: f32[1,32], index: 7, kind: input, shape index: {}]
  %s8 = inlined_call_operand.vmem [shape: f32[1,32], index: 8, kind: input, shape index: {}]
  %s9 = inlined_call_operand.vmem [shape: f32[1,32], index: 9, kind: input, shape index: {}]
  %s10 = inlined_call_operand.vmem [shape: f32[1,32], index: 10, kind: input, shape index: {}]
  %s11 = inlined_call_operand.vmem [shape: f32[32,1], index: 11, kind: input, shape index: {}]
  %s12 = inlined_call_operand.<no memory space> [shape: f32[1,1], index: 12, kind: input, shape index: {}]
  %s13 = inlined_call_operand.vmem [shape: f32[8,2], index: 13, kind: output, shape index: {}]
  %s14 = sld [smem:[#allocation0]]
  $region82: #{tpu_custom_call.1} parent=0
    _
  %s16 = ssub.s32 1, %s14
  %s17 = scalar_select 0, %s16, %s14
  %v18 = vstv %s12
  %19 = vst [vmem:[#allocation6] sm:$0x1] %v18
  $region1: #{tpu_custom_call.1} parent=0
    #allocation7 [shape = 'u8[4096]{0}', space=vmem, size = 0x1000, scoped, tag = 'input window, operand 1, single buffered']
    #allocation8 [shape = 's32[1]{0}', space=sflag, size = 0x4, scoped, tag = 'scoped memory for tpu_custom_call.1']
    #allocation9 [shape = 'u8[4096]{0}', space=vmem, size = 0x1000, scoped, tag = 'input window, operand 2, single buffered']
    #allocation10 [shape = 's32[1]{0}', space=sflag, size = 0x4, scoped, tag = 'scoped memory for tpu_custom_call.1']
    #allocation11 [shape = 'u8[4096]{0}', space=vmem, size = 0x1000, scoped, tag = 'input window, operand 3, single buffered']
    #allocation12 [shape = 'u8[16384]{0}', space=vmem, size = 0x4000, scoped, tag = 'input window, operand 5, single buffered']
    #allocation13 [shape = 's32[1]{0}', space=sflag, size = 0x4, scoped, tag = 'scoped memory for tpu_custom_call.1']
    #allocation14 [shape = 'u8[16384]{0}', space=vmem, size = 0x4000, scoped, tag = 'input window, operand 6, single buffered']
    %20 = vsyncpa [#allocation8], 0
    %21 = vsyncpa [#allocation10], 0
    %22 = vsyncpa [#allocation13], 0
    // Predicated region
    $region2: #{tpu_custom_call.1} parent=1 // pred_check
      _
    $region3: #{tpu_custom_call.1} parent=1 // pred_check_branch
      %24 = sbr.rel (0) target = $region5
    $region4: #{tpu_custom_call.1} parent=1 // pred_region
      _
    $region5: #{tpu_custom_call.1} parent=1 // pred_fallthru
      _
    // Predicated region
    $region6: #{tpu_custom_call.1} parent=1 // pred_check
      _
    $region7: #{tpu_custom_call.1} parent=1 // pred_check_branch
      %26 = sbr.rel (0) target = $region9
    $region8: #{tpu_custom_call.1} parent=1 // pred_region
      %s28 = ssub.s32 128, 128
      %29 = vsyncadd [#allocation8], %s28
      %s31 = sshll.u32 [#allocation7], 4
      %s32 = int_to_ptr.vmem [resolvable:$true] %s31
      %34 = dma.hbm_to_vmem [thread:$0]  %s1, 128, %s32, [#allocation8]
    $region9: #{tpu_custom_call.1} parent=1 // pred_fallthru
      _
    // Predicated region
    $region10: #{tpu_custom_call.1} parent=1 // pred_check
      _
    $region11: #{tpu_custom_call.1} parent=1 // pred_check_branch
      %36 = sbr.rel (0) target = $region13
    $region12: #{tpu_custom_call.1} parent=1 // pred_region
      %s38 = ssub.s32 128, 128
      %39 = vsyncadd [#allocation10], %s38
      %s41 = sshll.u32 [#allocation9], 4
      %s42 = int_to_ptr.vmem [resolvable:$true] %s41
      %44 = dma.hbm_to_vmem [thread:$0]  %s2, 128, %s42, [#allocation10]
    $region13: #{tpu_custom_call.1} parent=1 // pred_fallthru
      _
    // Predicated region
    $region14: #{tpu_custom_call.1} parent=1 // pred_check
      _
    $region15: #{tpu_custom_call.1} parent=1 // pred_check_branch
      %46 = sbr.rel (0) target = $region17
    $region16: #{tpu_custom_call.1} parent=1 // pred_region
      %s48 = ssub.s32 128, 128
      %49 = vsyncadd [#allocation10], %s48
      %s51 = sshll.u32 [#allocation11], 4
      %s52 = int_to_ptr.vmem [resolvable:$true] %s51
      %54 = dma.hbm_to_vmem [thread:$0]  %s3, 128, %s52, [#allocation10]
    $region17: #{tpu_custom_call.1} parent=1 // pred_fallthru
      _
    // Predicated region
    $region18: #{tpu_custom_call.1} parent=1 // pred_check
      _
    $region19: #{tpu_custom_call.1} parent=1 // pred_check_branch
      %56 = sbr.rel (0) target = $region21
    $region20: #{tpu_custom_call.1} parent=1 // pred_region
      _
    $region21: #{tpu_custom_call.1} parent=1 // pred_fallthru
      _
    // Predicated region
    $region22: #{tpu_custom_call.1} parent=1 // pred_check
      _
    $region23: #{tpu_custom_call.1} parent=1 // pred_check_branch
      %58 = sbr.rel (0) target = $region25
    $region24: #{tpu_custom_call.1} parent=1 // pred_region
      %s60 = ssub.s32 512, 512
      %61 = vsyncadd [#allocation13], %s60
      %s62 = sshll.u32 [#allocation12], 4
      %s63 = int_to_ptr.vmem [resolvable:$true] %s62
      %68 = dma.hbm_to_vmem [thread:$0]  %s5, 512, %s63, [#allocation13], 128, 128, 8
    $region25: #{tpu_custom_call.1} parent=1 // pred_fallthru
      _
    // Predicated region
    $region26: #{tpu_custom_call.1} parent=1 // pred_check
      _
    $region27: #{tpu_custom_call.1} parent=1 // pred_check_branch
      %70 = sbr.rel (0) target = $region29
    $region28: #{tpu_custom_call.1} parent=1 // pred_region
      %s72 = ssub.s32 512, 512
      %73 = vsyncadd [#allocation13], %s72
      %s74 = sshll.u32 [#allocation14], 4
      %s75 = int_to_ptr.vmem [resolvable:$true] %s74
      %80 = dma.hbm_to_vmem [thread:$0]  %s6, 512, %s75, [#allocation13], 128, 128, 8
    $region29: #{tpu_custom_call.1} parent=1 // pred_fallthru
      _
    // Predicated region
    $region30: #{tpu_custom_call.1} parent=1 // pred_check
      _
    $region31: #{tpu_custom_call.1} parent=1 // pred_check_branch
      %82 = sbr.rel (0) target = $region33
    $region32: #{tpu_custom_call.1} parent=1 // pred_region
      _
    $region33: #{tpu_custom_call.1} parent=1 // pred_fallthru
      _
    // Predicated region
    $region34: #{tpu_custom_call.1} parent=1 // pred_check
      _
    $region35: #{tpu_custom_call.1} parent=1 // pred_check_branch
      %84 = sbr.rel (0) target = $region37
    $region36: #{tpu_custom_call.1} parent=1 // pred_region
      _
    $region37: #{tpu_custom_call.1} parent=1 // pred_fallthru
      _
    // Predicated region
    $region38: #{tpu_custom_call.1} parent=1 // pred_check
      _
    $region39: #{tpu_custom_call.1} parent=1 // pred_check_branch
      %86 = sbr.rel (0) target = $region41
    $region40: #{tpu_custom_call.1} parent=1 // pred_region
      _
    $region41: #{tpu_custom_call.1} parent=1 // pred_fallthru
      _
    // Predicated region
    $region42: #{tpu_custom_call.1} parent=1 // pred_check
      _
    $region43: #{tpu_custom_call.1} parent=1 // pred_check_branch
      %88 = sbr.rel (0) target = $region45
    $region44: #{tpu_custom_call.1} parent=1 // pred_region
      _
    $region45: #{tpu_custom_call.1} parent=1 // pred_fallthru
      _
    // Predicated region
    $region46: #{tpu_custom_call.1} parent=1 // pred_check
      _
    $region47: #{tpu_custom_call.1} parent=1 // pred_check_branch
      %90 = sbr.rel (0) target = $region49
    $region48: #{tpu_custom_call.1} parent=1 // pred_region
      _
    $region49: #{tpu_custom_call.1} parent=1 // pred_fallthru
      _
    // Predicated region
    $region50: #{tpu_custom_call.1} parent=1 // pred_check
      _
    $region51: #{tpu_custom_call.1} parent=1 // pred_check_branch
      %92 = sbr.rel (0) target = $region53
    $region52: #{tpu_custom_call.1} parent=1 // pred_region
      _
    $region53: #{tpu_custom_call.1} parent=1 // pred_fallthru
      _
    // Predicated region
    $region54: #{tpu_custom_call.1} parent=1 // pred_check
      _
    $region55: #{tpu_custom_call.1} parent=1 // pred_check_branch
      %94 = sbr.rel (0) target = $region57
    $region56: #{tpu_custom_call.1} parent=1 // pred_region
      %95 = dma.done [#allocation8], 128
    $region57: #{tpu_custom_call.1} parent=1 // pred_fallthru
      _
    // Predicated region
    $region58: #{tpu_custom_call.1} parent=1 // pred_check
      _
    $region59: #{tpu_custom_call.1} parent=1 // pred_check_branch
      %97 = sbr.rel (0) target = $region61
    $region60: #{tpu_custom_call.1} parent=1 // pred_region
      %98 = dma.done [#allocation10], 128
    $region61: #{tpu_custom_call.1} parent=1 // pred_fallthru
      _
    // Predicated region
    $region62: #{tpu_custom_call.1} parent=1 // pred_check
      _
    $region63: #{tpu_custom_call.1} parent=1 // pred_check_branch
      %100 = sbr.rel (0) target = $region65
    $region64: #{tpu_custom_call.1} parent=1 // pred_region
      %101 = dma.done [#allocation10], 128
    $region65: #{tpu_custom_call.1} parent=1 // pred_fallthru
      _
    // Predicated region
    $region66: #{tpu_custom_call.1} parent=1 // pred_check
      _
    $region67: #{tpu_custom_call.1} parent=1 // pred_check_branch
      %103 = sbr.rel (0) target = $region69
    $region68: #{tpu_custom_call.1} parent=1 // pred_region
      %104 = dma.done [#allocation13], 512
    $region69: #{tpu_custom_call.1} parent=1 // pred_fallthru
      _
    // Predicated region
    $region70: #{tpu_custom_call.1} parent=1 // pred_check
      _
    $region71: #{tpu_custom_call.1} parent=1 // pred_check_branch
      %106 = sbr.rel (0) target = $region73
    $region72: #{tpu_custom_call.1} parent=1 // pred_region
      %107 = dma.done [#allocation13], 512
    $region73: #{tpu_custom_call.1} parent=1 // pred_fallthru
      _
    %v108 = vld [vmem:[%s0] sm:$0x3]
    %v109 = vld [vmem:[%s0 + $0x2] sm:$0x3]
    %v110 = vld [vmem:[%s0 + $0x4] sm:$0x3]
    %v111 = vld [vmem:[%s0 + $0x6] sm:$0x3]
    %v112 = vld [vmem:[%s0 + $0x8] sm:$0x3]
    %v113 = vld [vmem:[%s0 + $0xa] sm:$0x3]
    %v114 = vld [vmem:[%s0 + $0xc] sm:$0x3]
    %v115 = vld [vmem:[%s0 + $0xe] sm:$0x3]
    %v116 = vld [vmem:[#allocation7] sm:$0xff]
    %v117 = vld [vmem:[%s7] sm:$0x1]
    %v119 = vlaneseq
    %v120 = vshrl.u32 %v119, 7
    %v121 = vsub.s32 0, %v120
    %v122 = vrot.slane %v117, %v121
    %v132 = vcombine.low %v108, %v109
    %v133 = vcombine.low %v110, %v111
    %v135 = vunpack.c.l.s4 1983009808
    %v136 = vunpack.c.0.s8 %v135
    %v137 = vlaneseq
    %v138 = vshrl.u32 %v137, 7
    %v139 = vsub.s32 %v136, %v138
    %v140 = vrot.slane %v132, %v139
    %v142 = vunpack.c.l.s4 1983009808
    %v143 = vunpack.c.0.s8 %v142
    %v144 = vlaneseq
    %v145 = vshrl.u32 %v144, 7
    %v146 = vsub.s32 %v143, %v145
    %v147 = vrot.slane %v133, %v146
    %v148 = vcombine.low %v140, %v147
    %v149 = vcombine.low %v112, %v113
    %v150 = vcombine.low %v114, %v115
    %v152 = vunpack.c.l.s4 1983009808
    %v153 = vunpack.c.0.s8 %v152
    %v154 = vlaneseq
    %v155 = vshrl.u32 %v154, 7
    %v156 = vsub.s32 %v153, %v155
    %v157 = vrot.slane %v149, %v156
    %v159 = vunpack.c.l.s4 1983009808
    %v160 = vunpack.c.0.s8 %v159
    %v161 = vlaneseq
    %v162 = vshrl.u32 %v161, 7
    %v163 = vsub.s32 %v160, %v162
    %v164 = vrot.slane %v150, %v163
    %v165 = vcombine.low %v157, %v164
    %vm166 = vcmask 64512
    %v167 = vsel %vm166, %v148, 0
    %v169 = vsel %vm166, %v165, 0
    %171 = vmatprep.subr.mxu0 0.0
    %172 = vmatpush1.msra.mxu0 %v116
    %173 = vmatprep.subr.mxu0 0.0
    %174 = vmatpush1.msra.mxu0 0.0
    %175 = vmatprep.subr.mxu0 0.0
    %176 = vmatpush1.msra.mxu0 0.0
    %177 = vmatprep.subr.mxu0 0.0
    %178 = vmatpush1.msra.mxu0 0.0
    %179 = vmatprep.subr.mxu0 0.0
    %180 = vmatpush1.msra.mxu0 0.0
    %181 = vmatprep.subr.mxu0 0.0
    %182 = vmatpush1.msra.mxu0 0.0
    %183 = vmatprep.subr.mxu0 0.0
    %184 = vmatpush1.msra.mxu0 0.0
    %185 = vmatprep.subr.mxu0 0.0
    %186 = vmatpush1.msra.mxu0 0.0
    %187 = vmatprep.subr.mxu0 0.0
    %188 = vmatpush1.msra.mxu0 0.0
    %189 = vmatprep.subr.mxu0 0.0
    %190 = vmatpush1.msra.mxu0 0.0
    %191 = vmatprep.subr.mxu0 0.0
    %192 = vmatpush1.msra.mxu0 0.0
    %193 = vmatprep.subr.mxu0 0.0
    %194 = vmatpush1.msra.mxu0 0.0
    %195 = vmatprep.subr.mxu0 0.0
    %196 = vmatpush1.msra.mxu0 0.0
    %197 = vmatprep.subr.mxu0 0.0
    %198 = vmatpush1.msra.mxu0 0.0
    %199 = vmatprep.subr.mxu0 0.0
    %200 = vmatpush1.msra.mxu0 0.0
    %201 = vmatprep.subr.mxu0 0.0
    %202 = vmatpush1.msra.mxu0 0.0
    %203 = vmatprep.subr.mxu0 0.0
    %204 = vmatpush1.msra.mxu0 0.0
    %205 = vmatprep.subr.mxu0 0.0
    %206 = vmatpush1.msra.mxu0 0.0
    %207 = vmatprep.subr.mxu0 0.0
    %208 = vmatpush1.msra.mxu0 0.0
    %209 = vmatprep.subr.mxu0 0.0
    %210 = vmatpush1.msra.mxu0 0.0
    %211 = vmatprep.subr.mxu0 0.0
    %212 = vmatpush1.msra.mxu0 0.0
    %213 = vmatprep.subr.mxu0 0.0
    %214 = vmatpush1.msra.mxu0 0.0
    %215 = vmatprep.subr.mxu0 0.0
    %216 = vmatpush1.msra.mxu0 0.0
    %217 = vmatprep.subr.mxu0 0.0
    %218 = vmatpush1.msra.mxu0 0.0
    %219 = vmatprep.subr.mxu0 0.0
    %220 = vmatpush1.msra.mxu0 0.0
    %221 = vmatprep.subr.mxu0 0.0
    %222 = vmatpush1.msra.mxu0 0.0
    %223 = vmatprep.subr.mxu0 0.0
    %224 = vmatpush1.msra.mxu0 0.0
    %225 = vmatprep.subr.mxu0 0.0
    %226 = vmatpush1.msra.mxu0 0.0
    %227 = vmatprep.subr.mxu0 0.0
    %228 = vmatpush1.msra.mxu0 0.0
    %229 = vmatprep.subr.mxu0 0.0
    %230 = vmatpush1.msra.mxu0 0.0
    %231 = vmatprep.subr.mxu0 0.0
    %232 = vmatpush1.msra.mxu0 0.0
    %233 = vmatprep.subr.mxu0 0.0
    %234 = vmatpush1.msra.mxu0 0.0
    %235 = vmatprep.mubr.f32.mxu0 0.0
    %236 = vmatmul.mubr.f32.gmra.mrb[0].mxu0 %v167
    %v237 = vpop.f32.mrb[0].mxu0
    %v238 = vadd.f32 %v122, %v237
    %v239 = vpop.f32.mrb[0].mxu0
    %240 = vmatprep.mubr.f32.mxu0 0.0
    %241 = vmatmul.mubr.f32.gmra.mrb[0].mxu0 %v169
    %v242 = vpop.f32.mrb[0].mxu0
    %v243 = vadd.f32 %v122, %v242
    %v244 = vpop.f32.mrb[0].mxu0
    %245 = vdwg.mxu0
    %v248 = vcombine.high %v238, %v238
    %v250 = vunpack.c.l.s4 1983009808
    %v251 = vunpack.c.0.s8 %v250
    %v252 = vlaneseq
    %v253 = vshrl.u32 %v252, 7
    %v254 = vsub.s32 %v251, %v253
    %v255 = vrot.slane %v238, %v254
    %v257 = vunpack.c.l.s4 1983009808
    %v258 = vunpack.c.0.s8 %v257
    %v259 = vlaneseq
    %v260 = vshrl.u32 %v259, 7
    %v261 = vsub.s32 %v258, %v260
    %v262 = vrot.slane %v248, %v261
    %v263 = vcombine.high %v255, %v255
    %v264 = vcombine.high %v262, %v262
    %v265 = vcombine.high %v243, %v243
    %v267 = vunpack.c.l.s4 1983009808
    %v268 = vunpack.c.0.s8 %v267
    %v269 = vlaneseq
    %v270 = vshrl.u32 %v269, 7
    %v271 = vsub.s32 %v268, %v270
    %v272 = vrot.slane %v243, %v271
    %v274 = vunpack.c.l.s4 1983009808
    %v275 = vunpack.c.0.s8 %v274
    %v276 = vlaneseq
    %v277 = vshrl.u32 %v276, 7
    %v278 = vsub.s32 %v275, %v277
    %v279 = vrot.slane %v265, %v278
    %v280 = vcombine.high %v272, %v272
    %v281 = vcombine.high %v279, %v279
    %vm290 = vcmask 254976
    %291 = vst.msk [vmem:[#allocation2] sm:$0x3] %vm290, %v255
    %292 = vst.msk [vmem:[#allocation2 + $0x2] sm:$0x3] %vm290, %v263
    %293 = vst.msk [vmem:[#allocation2 + $0x4] sm:$0x3] %vm290, %v262
    %294 = vst.msk [vmem:[#allocation2 + $0x6] sm:$0x3] %vm290, %v264
    %295 = vst.msk [vmem:[#allocation2 + $0x8] sm:$0x3] %vm290, %v272
    %296 = vst.msk [vmem:[#allocation2 + $0xa] sm:$0x3] %vm290, %v280
    %297 = vst.msk [vmem:[#allocation2 + $0xc] sm:$0x3] %vm290, %v279
    %298 = vst.msk [vmem:[#allocation2 + $0xe] sm:$0x3] %vm290, %v281
    %v299 = vld [vmem:[#allocation9] sm:$0xff]
    %v300 = vld [vmem:[%s8] sm:$0x1]
    %v302 = vlaneseq
    %v303 = vshrl.u32 %v302, 7
    %v304 = vsub.s32 0, %v303
    %v305 = vrot.slane %v300, %v304
    %307 = vmatprep.subr.mxu0 0.0
    %308 = vmatpush1.msra.mxu0 %v299
    %309 = vmatprep.subr.mxu0 0.0
    %310 = vmatpush1.msra.mxu0 0.0
    %311 = vmatprep.subr.mxu0 0.0
    %312 = vmatpush1.msra.mxu0 0.0
    %313 = vmatprep.subr.mxu0 0.0
    %314 = vmatpush1.msra.mxu0 0.0
    %315 = vmatprep.subr.mxu0 0.0
    %316 = vmatpush1.msra.mxu0 0.0
    %317 = vmatprep.subr.mxu0 0.0
    %318 = vmatpush1.msra.mxu0 0.0
    %319 = vmatprep.subr.mxu0 0.0
    %320 = vmatpush1.msra.mxu0 0.0
    %321 = vmatprep.subr.mxu0 0.0
    %322 = vmatpush1.msra.mxu0 0.0
    %323 = vmatprep.subr.mxu0 0.0
    %324 = vmatpush1.msra.mxu0 0.0
    %325 = vmatprep.subr.mxu0 0.0
    %326 = vmatpush1.msra.mxu0 0.0
    %327 = vmatprep.subr.mxu0 0.0
    %328 = vmatpush1.msra.mxu0 0.0
    %329 = vmatprep.subr.mxu0 0.0
    %330 = vmatpush1.msra.mxu0 0.0
    %331 = vmatprep.subr.mxu0 0.0
    %332 = vmatpush1.msra.mxu0 0.0
    %333 = vmatprep.subr.mxu0 0.0
    %334 = vmatpush1.msra.mxu0 0.0
    %335 = vmatprep.subr.mxu0 0.0
    %336 = vmatpush1.msra.mxu0 0.0
    %337 = vmatprep.subr.mxu0 0.0
    %338 = vmatpush1.msra.mxu0 0.0
    %339 = vmatprep.subr.mxu0 0.0
    %340 = vmatpush1.msra.mxu0 0.0
    %341 = vmatprep.subr.mxu0 0.0
    %342 = vmatpush1.msra.mxu0 0.0
    %343 = vmatprep.subr.mxu0 0.0
    %344 = vmatpush1.msra.mxu0 0.0
    %345 = vmatprep.subr.mxu0 0.0
    %346 = vmatpush1.msra.mxu0 0.0
    %347 = vmatprep.subr.mxu0 0.0
    %348 = vmatpush1.msra.mxu0 0.0
    %349 = vmatprep.subr.mxu0 0.0
    %350 = vmatpush1.msra.mxu0 0.0
    %351 = vmatprep.subr.mxu0 0.0
    %352 = vmatpush1.msra.mxu0 0.0
    %353 = vmatprep.subr.mxu0 0.0
    %354 = vmatpush1.msra.mxu0 0.0
    %355 = vmatprep.subr.mxu0 0.0
    %356 = vmatpush1.msra.mxu0 0.0
    %357 = vmatprep.subr.mxu0 0.0
    %358 = vmatpush1.msra.mxu0 0.0
    %359 = vmatprep.subr.mxu0 0.0
    %360 = vmatpush1.msra.mxu0 0.0
    %361 = vmatprep.subr.mxu0 0.0
    %362 = vmatpush1.msra.mxu0 0.0
    %363 = vmatprep.subr.mxu0 0.0
    %364 = vmatpush1.msra.mxu0 0.0
    %365 = vmatprep.subr.mxu0 0.0
    %366 = vmatpush1.msra.mxu0 0.0
    %367 = vmatprep.subr.mxu0 0.0
    %368 = vmatpush1.msra.mxu0 0.0
    %369 = vmatprep.subr.mxu0 0.0
    %370 = vmatpush1.msra.mxu0 0.0
    %371 = vmatprep.mubr.f32.mxu0 0.0
    %372 = vmatmul.mubr.f32.gmra.mrb[0].mxu0 %v167
    %v373 = vpop.f32.mrb[0].mxu0
    %v374 = vadd.f32 %v305, %v373
    %v375 = vpop.f32.mrb[0].mxu0
    %376 = vmatprep.mubr.f32.mxu0 0.0
    %377 = vmatmul.mubr.f32.gmra.mrb[0].mxu0 %v169
    %v378 = vpop.f32.mrb[0].mxu0
    %v379 = vadd.f32 %v305, %v378
    %v380 = vpop.f32.mrb[0].mxu0
    %381 = vdwg.mxu0
    %v384 = vcombine.high %v374, %v374
    %v386 = vunpack.c.l.s4 1983009808
    %v387 = vunpack.c.0.s8 %v386
    %v388 = vlaneseq
    %v389 = vshrl.u32 %v388, 7
    %v390 = vsub.s32 %v387, %v389
    %v391 = vrot.slane %v374, %v390
    %v393 = vunpack.c.l.s4 1983009808
    %v394 = vunpack.c.0.s8 %v393
    %v395 = vlaneseq
    %v396 = vshrl.u32 %v395, 7
    %v397 = vsub.s32 %v394, %v396
    %v398 = vrot.slane %v384, %v397
    %v399 = vcombine.high %v391, %v391
    %v400 = vcombine.high %v398, %v398
    %v401 = vcombine.high %v379, %v379
    %v403 = vunpack.c.l.s4 1983009808
    %v404 = vunpack.c.0.s8 %v403
    %v405 = vlaneseq
    %v406 = vshrl.u32 %v405, 7
    %v407 = vsub.s32 %v404, %v406
    %v408 = vrot.slane %v379, %v407
    %v410 = vunpack.c.l.s4 1983009808
    %v411 = vunpack.c.0.s8 %v410
    %v412 = vlaneseq
    %v413 = vshrl.u32 %v412, 7
    %v414 = vsub.s32 %v411, %v413
    %v415 = vrot.slane %v401, %v414
    %v416 = vcombine.high %v408, %v408
    %v417 = vcombine.high %v415, %v415
    %426 = vst.msk [vmem:[#allocation3] sm:$0x3] %vm290, %v391
    %427 = vst.msk [vmem:[#allocation3 + $0x2] sm:$0x3] %vm290, %v399
    %428 = vst.msk [vmem:[#allocation3 + $0x4] sm:$0x3] %vm290, %v398
    %429 = vst.msk [vmem:[#allocation3 + $0x6] sm:$0x3] %vm290, %v400
    %430 = vst.msk [vmem:[#allocation3 + $0x8] sm:$0x3] %vm290, %v408
    %431 = vst.msk [vmem:[#allocation3 + $0xa] sm:$0x3] %vm290, %v416
    %432 = vst.msk [vmem:[#allocation3 + $0xc] sm:$0x3] %vm290, %v415
    %433 = vst.msk [vmem:[#allocation3 + $0xe] sm:$0x3] %vm290, %v417
    %v434 = vld [vmem:[#allocation11] sm:$0xff]
    %v435 = vld [vmem:[%s9] sm:$0x1]
    %v437 = vlaneseq
    %v438 = vshrl.u32 %v437, 7
    %v439 = vsub.s32 0, %v438
    %v440 = vrot.slane %v435, %v439
    %442 = vmatprep.subr.mxu0 0.0
    %443 = vmatpush1.msra.mxu0 %v434
    %444 = vmatprep.subr.mxu0 0.0
    %445 = vmatpush1.msra.mxu0 0.0
    %446 = vmatprep.subr.mxu0 0.0
    %447 = vmatpush1.msra.mxu0 0.0
    %448 = vmatprep.subr.mxu0 0.0
    %449 = vmatpush1.msra.mxu0 0.0
    %450 = vmatprep.subr.mxu0 0.0
    %451 = vmatpush1.msra.mxu0 0.0
    %452 = vmatprep.subr.mxu0 0.0
    %453 = vmatpush1.msra.mxu0 0.0
    %454 = vmatprep.subr.mxu0 0.0
    %455 = vmatpush1.msra.mxu0 0.0
    %456 = vmatprep.subr.mxu0 0.0
    %457 = vmatpush1.msra.mxu0 0.0
    %458 = vmatprep.subr.mxu0 0.0
    %459 = vmatpush1.msra.mxu0 0.0
    %460 = vmatprep.subr.mxu0 0.0
    %461 = vmatpush1.msra.mxu0 0.0
    %462 = vmatprep.subr.mxu0 0.0
    %463 = vmatpush1.msra.mxu0 0.0
    %464 = vmatprep.subr.mxu0 0.0
    %465 = vmatpush1.msra.mxu0 0.0
    %466 = vmatprep.subr.mxu0 0.0
    %467 = vmatpush1.msra.mxu0 0.0
    %468 = vmatprep.subr.mxu0 0.0
    %469 = vmatpush1.msra.mxu0 0.0
    %470 = vmatprep.subr.mxu0 0.0
    %471 = vmatpush1.msra.mxu0 0.0
    %472 = vmatprep.subr.mxu0 0.0
    %473 = vmatpush1.msra.mxu0 0.0
    %474 = vmatprep.subr.mxu0 0.0
    %475 = vmatpush1.msra.mxu0 0.0
    %476 = vmatprep.subr.mxu0 0.0
    %477 = vmatpush1.msra.mxu0 0.0
    %478 = vmatprep.subr.mxu0 0.0
    %479 = vmatpush1.msra.mxu0 0.0
    %480 = vmatprep.subr.mxu0 0.0
    %481 = vmatpush1.msra.mxu0 0.0
    %482 = vmatprep.subr.mxu0 0.0
    %483 = vmatpush1.msra.mxu0 0.0
    %484 = vmatprep.subr.mxu0 0.0
    %485 = vmatpush1.msra.mxu0 0.0
    %486 = vmatprep.subr.mxu0 0.0
    %487 = vmatpush1.msra.mxu0 0.0
    %488 = vmatprep.subr.mxu0 0.0
    %489 = vmatpush1.msra.mxu0 0.0
    %490 = vmatprep.subr.mxu0 0.0
    %491 = vmatpush1.msra.mxu0 0.0
    %492 = vmatprep.subr.mxu0 0.0
    %493 = vmatpush1.msra.mxu0 0.0
    %494 = vmatprep.subr.mxu0 0.0
    %495 = vmatpush1.msra.mxu0 0.0
    %496 = vmatprep.subr.mxu0 0.0
    %497 = vmatpush1.msra.mxu0 0.0
    %498 = vmatprep.subr.mxu0 0.0
    %499 = vmatpush1.msra.mxu0 0.0
    %500 = vmatprep.subr.mxu0 0.0
    %501 = vmatpush1.msra.mxu0 0.0
    %502 = vmatprep.subr.mxu0 0.0
    %503 = vmatpush1.msra.mxu0 0.0
    %504 = vmatprep.subr.mxu0 0.0
    %505 = vmatpush1.msra.mxu0 0.0
    %506 = vmatprep.mubr.f32.mxu0 0.0
    %507 = vmatmul.mubr.f32.gmra.mrb[0].mxu0 %v167
    %v508 = vpop.f32.mrb[0].mxu0
    %v509 = vadd.f32 %v440, %v508
    %v510 = vpop.f32.mrb[0].mxu0
    %511 = vmatprep.mubr.f32.mxu0 0.0
    %512 = vmatmul.mubr.f32.gmra.mrb[0].mxu0 %v169
    %v513 = vpop.f32.mrb[0].mxu0
    %v514 = vadd.f32 %v440, %v513
    %v515 = vpop.f32.mrb[0].mxu0
    %516 = vdwg.mxu0
    %v519 = vcombine.high %v509, %v509
    %v521 = vunpack.c.l.s4 1983009808
    %v522 = vunpack.c.0.s8 %v521
    %v523 = vlaneseq
    %v524 = vshrl.u32 %v523, 7
    %v525 = vsub.s32 %v522, %v524
    %v526 = vrot.slane %v509, %v525
    %v528 = vunpack.c.l.s4 1983009808
    %v529 = vunpack.c.0.s8 %v528
    %v530 = vlaneseq
    %v531 = vshrl.u32 %v530, 7
    %v532 = vsub.s32 %v529, %v531
    %v533 = vrot.slane %v519, %v532
    %v534 = vcombine.high %v526, %v526
    %v535 = vcombine.high %v533, %v533
    %v536 = vcombine.high %v514, %v514
    %v538 = vunpack.c.l.s4 1983009808
    %v539 = vunpack.c.0.s8 %v538
    %v540 = vlaneseq
    %v541 = vshrl.u32 %v540, 7
    %v542 = vsub.s32 %v539, %v541
    %v543 = vrot.slane %v514, %v542
    %v545 = vunpack.c.l.s4 1983009808
    %v546 = vunpack.c.0.s8 %v545
    %v547 = vlaneseq
    %v548 = vshrl.u32 %v547, 7
    %v549 = vsub.s32 %v546, %v548
    %v550 = vrot.slane %v536, %v549
    %v551 = vcombine.high %v543, %v543
    %v552 = vcombine.high %v550, %v550
    %561 = vst.msk [vmem:[#allocation4] sm:$0x3] %vm290, %v526
    %562 = vst.msk [vmem:[#allocation4 + $0x2] sm:$0x3] %vm290, %v534
    %563 = vst.msk [vmem:[#allocation4 + $0x4] sm:$0x3] %vm290, %v533
    %564 = vst.msk [vmem:[#allocation4 + $0x6] sm:$0x3] %vm290, %v535
    %565 = vst.msk [vmem:[#allocation4 + $0x8] sm:$0x3] %vm290, %v543
    %566 = vst.msk [vmem:[#allocation4 + $0xa] sm:$0x3] %vm290, %v551
    %567 = vst.msk [vmem:[#allocation4 + $0xc] sm:$0x3] %vm290, %v550
    %568 = vst.msk [vmem:[#allocation4 + $0xe] sm:$0x3] %vm290, %v552
    %v569 = vld [vmem:[%s4] sm:$0xff]
    %v570 = vld [vmem:[%s4 + $0x8] sm:$0xff]
    %v571 = vld [vmem:[%s4 + $0x10] sm:$0xff]
    %v572 = vld [vmem:[%s4 + $0x18] sm:$0xff]
    %v573 = vld [vmem:[#allocation12] sm:$0xff]
    %v574 = vld [vmem:[#allocation12 + $0x8] sm:$0xff]
    %v575 = vld [vmem:[#allocation12 + $0x10] sm:$0xff]
    %v576 = vld [vmem:[#allocation12 + $0x18] sm:$0xff]
    %v577 = vld [vmem:[#allocation14] sm:$0xff]
    %v578 = vld [vmem:[#allocation14 + $0x8] sm:$0xff]
    %v579 = vld [vmem:[#allocation14 + $0x10] sm:$0xff]
    %v580 = vld [vmem:[#allocation14 + $0x18] sm:$0xff]
    %v581 = vld [vmem:[%s10] sm:$0x1]
    %v583 = vlaneseq
    %v584 = vshrl.u32 %v583, 7
    %v585 = vsub.s32 0, %v584
    %v586 = vrot.slane %v581, %v585
    %v588 = vld [vmem:[#allocation2] sm:$0x3]
    %vm589 = vcmask 261120
    %v591 = vsel %vm589, 0.0, 0
    %593 = vmatprep.subr.mxu0 0.0
    %594 = vmatpush1.msra.mxu0 %v569
    %595 = vmatprep.subr.mxu0 0.0
    %596 = vmatpush1.msra.mxu0 %v570
    %597 = vmatprep.subr.mxu0 0.0
    %598 = vmatpush1.msra.mxu0 %v571
    %599 = vmatprep.subr.mxu0 0.0
    %600 = vmatpush1.msra.mxu0 %v572
    %601 = vmatprep.subr.mxu0 0.0
    %602 = vmatpush1.msra.mxu0 0.0
    %603 = vmatprep.subr.mxu0 0.0
    %604 = vmatpush1.msra.mxu0 0.0
    %605 = vmatprep.subr.mxu0 0.0
    %606 = vmatpush1.msra.mxu0 0.0
    %607 = vmatprep.subr.mxu0 0.0
    %608 = vmatpush1.msra.mxu0 0.0
    %609 = vmatprep.subr.mxu0 0.0
    %610 = vmatpush1.msra.mxu0 0.0
    %611 = vmatprep.subr.mxu0 0.0
    %612 = vmatpush1.msra.mxu0 0.0
    %613 = vmatprep.subr.mxu0 0.0
    %614 = vmatpush1.msra.mxu0 0.0
    %615 = vmatprep.subr.mxu0 0.0
    %616 = vmatpush1.msra.mxu0 0.0
    %617 = vmatprep.subr.mxu0 0.0
    %618 = vmatpush1.msra.mxu0 0.0
    %619 = vmatprep.subr.mxu0 0.0
    %620 = vmatpush1.msra.mxu0 0.0
    %621 = vmatprep.subr.mxu0 0.0
    %622 = vmatpush1.msra.mxu0 0.0
    %623 = vmatprep.subr.mxu0 0.0
    %624 = vmatpush1.msra.mxu0 0.0
    %625 = vmatprep.subr.mxu0 0.0
    %626 = vmatpush1.msra.mxu0 0.0
    %627 = vmatprep.subr.mxu0 0.0
    %628 = vmatpush1.msra.mxu0 0.0
    %629 = vmatprep.subr.mxu0 0.0
    %630 = vmatpush1.msra.mxu0 0.0
    %631 = vmatprep.subr.mxu0 0.0
    %632 = vmatpush1.msra.mxu0 0.0
    %633 = vmatprep.subr.mxu0 0.0
    %634 = vmatpush1.msra.mxu0 0.0
    %635 = vmatprep.subr.mxu0 0.0
    %636 = vmatpush1.msra.mxu0 0.0
    %637 = vmatprep.subr.mxu0 0.0
    %638 = vmatpush1.msra.mxu0 0.0
    %639 = vmatprep.subr.mxu0 0.0
    %640 = vmatpush1.msra.mxu0 0.0
    %641 = vmatprep.subr.mxu0 0.0
    %642 = vmatpush1.msra.mxu0 0.0
    %643 = vmatprep.subr.mxu0 0.0
    %644 = vmatpush1.msra.mxu0 0.0
    %645 = vmatprep.subr.mxu0 0.0
    %646 = vmatpush1.msra.mxu0 0.0
    %647 = vmatprep.subr.mxu0 0.0
    %648 = vmatpush1.msra.mxu0 0.0
    %649 = vmatprep.subr.mxu0 0.0
    %650 = vmatpush1.msra.mxu0 0.0
    %651 = vmatprep.subr.mxu0 0.0
    %652 = vmatpush1.msra.mxu0 0.0
    %653 = vmatprep.subr.mxu0 0.0
    %654 = vmatpush1.msra.mxu0 0.0
    %655 = vmatprep.subr.mxu0 0.0
    %656 = vmatpush1.msra.mxu0 0.0
    %657 = vmatprep.mubr.f32.mxu0 0.0
    %658 = vmatmul.mubr.f32.gmra.mrb[0].mxu0 %v591
    %v659 = vpop.f32.mrb[0].mxu0
    %v660 = vadd.f32 0.0, %v659
    %v661 = vpop.f32.mrb[0].mxu0
    %662 = vdwg.mxu0
    %v663 = vadd.f32 %v588, %v660
    %v664 = vxor.u32 %v663, 2147483648
    %v665 = vmul.f32 %v664, 1.442695
    %v666 = vpow.pop %v665
    %v667 = vadd.f32 %v666, 1.0
    %v668 = vrcp.pop %v667
    %v669 = vmul.f32 1.0, %v668
    %v670 = vld [vmem:[#allocation3] sm:$0x3]
    %671 = vmatprep.subr.mxu0 0.0
    %672 = vmatpush1.msra.mxu0 %v573
    %673 = vmatprep.subr.mxu0 0.0
    %674 = vmatpush1.msra.mxu0 %v574
    %675 = vmatprep.subr.mxu0 0.0
    %676 = vmatpush1.msra.mxu0 %v575
    %677 = vmatprep.subr.mxu0 0.0
    %678 = vmatpush1.msra.mxu0 %v576
    %679 = vmatprep.subr.mxu0 0.0
    %680 = vmatpush1.msra.mxu0 0.0
    %681 = vmatprep.subr.mxu0 0.0
    %682 = vmatpush1.msra.mxu0 0.0
    %683 = vmatprep.subr.mxu0 0.0
    %684 = vmatpush1.msra.mxu0 0.0
    %685 = vmatprep.subr.mxu0 0.0
    %686 = vmatpush1.msra.mxu0 0.0
    %687 = vmatprep.subr.mxu0 0.0
    %688 = vmatpush1.msra.mxu0 0.0
    %689 = vmatprep.subr.mxu0 0.0
    %690 = vmatpush1.msra.mxu0 0.0
    %691 = vmatprep.subr.mxu0 0.0
    %692 = vmatpush1.msra.mxu0 0.0
    %693 = vmatprep.subr.mxu0 0.0
    %694 = vmatpush1.msra.mxu0 0.0
    %695 = vmatprep.subr.mxu0 0.0
    %696 = vmatpush1.msra.mxu0 0.0
    %697 = vmatprep.subr.mxu0 0.0
    %698 = vmatpush1.msra.mxu0 0.0
    %699 = vmatprep.subr.mxu0 0.0
    %700 = vmatpush1.msra.mxu0 0.0
    %701 = vmatprep.subr.mxu0 0.0
    %702 = vmatpush1.msra.mxu0 0.0
    %703 = vmatprep.subr.mxu0 0.0
    %704 = vmatpush1.msra.mxu0 0.0
    %705 = vmatprep.subr.mxu0 0.0
    %706 = vmatpush1.msra.mxu0 0.0
    %707 = vmatprep.subr.mxu0 0.0
    %708 = vmatpush1.msra.mxu0 0.0
    %709 = vmatprep.subr.mxu0 0.0
    %710 = vmatpush1.msra.mxu0 0.0
    %711 = vmatprep.subr.mxu0 0.0
    %712 = vmatpush1.msra.mxu0 0.0
    %713 = vmatprep.subr.mxu0 0.0
    %714 = vmatpush1.msra.mxu0 0.0
    %715 = vmatprep.subr.mxu0 0.0
    %716 = vmatpush1.msra.mxu0 0.0
    %717 = vmatprep.subr.mxu0 0.0
    %718 = vmatpush1.msra.mxu0 0.0
    %719 = vmatprep.subr.mxu0 0.0
    %720 = vmatpush1.msra.mxu0 0.0
    %721 = vmatprep.subr.mxu0 0.0
    %722 = vmatpush1.msra.mxu0 0.0
    %723 = vmatprep.subr.mxu0 0.0
    %724 = vmatpush1.msra.mxu0 0.0
    %725 = vmatprep.subr.mxu0 0.0
    %726 = vmatpush1.msra.mxu0 0.0
    %727 = vmatprep.subr.mxu0 0.0
    %728 = vmatpush1.msra.mxu0 0.0
    %729 = vmatprep.subr.mxu0 0.0
    %730 = vmatpush1.msra.mxu0 0.0
    %731 = vmatprep.subr.mxu0 0.0
    %732 = vmatpush1.msra.mxu0 0.0
    %733 = vmatprep.subr.mxu0 0.0
    %734 = vmatpush1.msra.mxu0 0.0
    %735 = vmatprep.mubr.f32.mxu0 0.0
    %736 = vmatmul.mubr.f32.gmra.mrb[0].mxu0 %v591
    %v737 = vpop.f32.mrb[0].mxu0
    %v738 = vadd.f32 0.0, %v737
    %v739 = vpop.f32.mrb[0].mxu0
    %740 = vdwg.mxu0
    %v741 = vadd.f32 %v670, %v738
    %v742 = vxor.u32 %v741, 2147483648
    %v743 = vmul.f32 %v742, 1.442695
    %v744 = vpow.pop %v743
    %v745 = vadd.f32 %v744, 1.0
    %v746 = vrcp.pop %v745
    %v747 = vmul.f32 1.0, %v746
    %748 = vmatprep.subr.mxu0 0.0
    %749 = vmatpush1.msra.mxu0 %v577
    %750 = vmatprep.subr.mxu0 0.0
    %751 = vmatpush1.msra.mxu0 %v578
    %752 = vmatprep.subr.mxu0 0.0
    %753 = vmatpush1.msra.mxu0 %v579
    %754 = vmatprep.subr.mxu0 0.0
    %755 = vmatpush1.msra.mxu0 %v580
    %756 = vmatprep.subr.mxu0 0.0
    %757 = vmatpush1.msra.mxu0 0.0
    %758 = vmatprep.subr.mxu0 0.0
    %759 = vmatpush1.msra.mxu0 0.0
    %760 = vmatprep.subr.mxu0 0.0
    %761 = vmatpush1.msra.mxu0 0.0
    %762 = vmatprep.subr.mxu0 0.0
    %763 = vmatpush1.msra.mxu0 0.0
    %764 = vmatprep.subr.mxu0 0.0
    %765 = vmatpush1.msra.mxu0 0.0
    %766 = vmatprep.subr.mxu0 0.0
    %767 = vmatpush1.msra.mxu0 0.0
    %768 = vmatprep.subr.mxu0 0.0
    %769 = vmatpush1.msra.mxu0 0.0
    %770 = vmatprep.subr.mxu0 0.0
    %771 = vmatpush1.msra.mxu0 0.0
    %772 = vmatprep.subr.mxu0 0.0
    %773 = vmatpush1.msra.mxu0 0.0
    %774 = vmatprep.subr.mxu0 0.0
    %775 = vmatpush1.msra.mxu0 0.0
    %776 = vmatprep.subr.mxu0 0.0
    %777 = vmatpush1.msra.mxu0 0.0
    %778 = vmatprep.subr.mxu0 0.0
    %779 = vmatpush1.msra.mxu0 0.0
    %780 = vmatprep.subr.mxu0 0.0
    %781 = vmatpush1.msra.mxu0 0.0
    %782 = vmatprep.subr.mxu0 0.0
    %783 = vmatpush1.msra.mxu0 0.0
    %784 = vmatprep.subr.mxu0 0.0
    %785 = vmatpush1.msra.mxu0 0.0
    %786 = vmatprep.subr.mxu0 0.0
    %787 = vmatpush1.msra.mxu0 0.0
    %788 = vmatprep.subr.mxu0 0.0
    %789 = vmatpush1.msra.mxu0 0.0
    %790 = vmatprep.subr.mxu0 0.0
    %791 = vmatpush1.msra.mxu0 0.0
    %792 = vmatprep.subr.mxu0 0.0
    %793 = vmatpush1.msra.mxu0 0.0
    %794 = vmatprep.subr.mxu0 0.0
    %795 = vmatpush1.msra.mxu0 0.0
    %796 = vmatprep.subr.mxu0 0.0
    %797 = vmatpush1.msra.mxu0 0.0
    %798 = vmatprep.subr.mxu0 0.0
    %799 = vmatpush1.msra.mxu0 0.0
    %800 = vmatprep.subr.mxu0 0.0
    %801 = vmatpush1.msra.mxu0 0.0
    %802 = vmatprep.subr.mxu0 0.0
    %803 = vmatpush1.msra.mxu0 0.0
    %804 = vmatprep.subr.mxu0 0.0
    %805 = vmatpush1.msra.mxu0 0.0
    %806 = vmatprep.subr.mxu0 0.0
    %807 = vmatpush1.msra.mxu0 0.0
    %808 = vmatprep.subr.mxu0 0.0
    %809 = vmatpush1.msra.mxu0 0.0
    %810 = vmatprep.subr.mxu0 0.0
    %811 = vmatpush1.msra.mxu0 0.0
    %812 = vmatprep.mubr.f32.mxu0 0.0
    %813 = vmatmul.mubr.f32.gmra.mrb[0].mxu0 %v591
    %v814 = vpop.f32.mrb[0].mxu0
    %v815 = vadd.f32 %v586, %v814
    %v816 = vpop.f32.mrb[0].mxu0
    %817 = vdwg.mxu0
    %v818 = vld [vmem:[#allocation4] sm:$0x3]
    %v819 = vmul.f32 %v669, %v815
    %v820 = vadd.f32 %v818, %v819
    %v821 = vtanh.pop %v820
    %v822 = vsub.f32 1.0, %v747
    %v823 = vmul.f32 %v822, %v821
    %v824 = vmul.f32 %v747, 0.0
    %v825 = vadd.f32 %v823, %v824
    %826 = vst.msk [vmem:[#allocation5] sm:$0x3] %vm290, %v825
    %s827 = scalar_lea.vmem [#allocation2], 2
    %v828 = vld [vmem:[%s827] sm:$0x3]
    %v830 = vsel %vm589, %v825, 0
    %832 = vmatprep.subr.mxu0 0.0
    %833 = vmatpush1.msra.mxu0 %v569
    %834 = vmatprep.subr.mxu0 0.0
    %835 = vmatpush1.msra.mxu0 %v570
    %836 = vmatprep.subr.mxu0 0.0
    %837 = vmatpush1.msra.mxu0 %v571
    %838 = vmatprep.subr.mxu0 0.0
    %839 = vmatpush1.msra.mxu0 %v572
    %840 = vmatprep.subr.mxu0 0.0
    %841 = vmatpush1.msra.mxu0 0.0
    %842 = vmatprep.subr.mxu0 0.0
    %843 = vmatpush1.msra.mxu0 0.0
    %844 = vmatprep.subr.mxu0 0.0
    %845 = vmatpush1.msra.mxu0 0.0
    %846 = vmatprep.subr.mxu0 0.0
    %847 = vmatpush1.msra.mxu0 0.0
    %848 = vmatprep.subr.mxu0 0.0
    %849 = vmatpush1.msra.mxu0 0.0
    %850 = vmatprep.subr.mxu0 0.0
    %851 = vmatpush1.msra.mxu0 0.0
    %852 = vmatprep.subr.mxu0 0.0
    %853 = vmatpush1.msra.mxu0 0.0
    %854 = vmatprep.subr.mxu0 0.0
    %855 = vmatpush1.msra.mxu0 0.0
    %856 = vmatprep.subr.mxu0 0.0
    %857 = vmatpush1.msra.mxu0 0.0
    %858 = vmatprep.subr.mxu0 0.0
    %859 = vmatpush1.msra.mxu0 0.0
    %860 = vmatprep.subr.mxu0 0.0
    %861 = vmatpush1.msra.mxu0 0.0
    %862 = vmatprep.subr.mxu0 0.0
    %863 = vmatpush1.msra.mxu0 0.0
    %864 = vmatprep.subr.mxu0 0.0
    %865 = vmatpush1.msra.mxu0 0.0
    %866 = vmatprep.subr.mxu0 0.0
    %867 = vmatpush1.msra.mxu0 0.0
    %868 = vmatprep.subr.mxu0 0.0
    %869 = vmatpush1.msra.mxu0 0.0
    %870 = vmatprep.subr.mxu0 0.0
    %871 = vmatpush1.msra.mxu0 0.0
    %872 = vmatprep.subr.mxu0 0.0
    %873 = vmatpush1.msra.mxu0 0.0
    %874 = vmatprep.subr.mxu0 0.0
    %875 = vmatpush1.msra.mxu0 0.0
    %876 = vmatprep.subr.mxu0 0.0
    %877 = vmatpush1.msra.mxu0 0.0
    %878 = vmatprep.subr.mxu0 0.0
    %879 = vmatpush1.msra.mxu0 0.0
    %880 = vmatprep.subr.mxu0 0.0
    %881 = vmatpush1.msra.mxu0 0.0
    %882 = vmatprep.subr.mxu0 0.0
    %883 = vmatpush1.msra.mxu0 0.0
    %884 = vmatprep.subr.mxu0 0.0
    %885 = vmatpush1.msra.mxu0 0.0
    %886 = vmatprep.subr.mxu0 0.0
    %887 = vmatpush1.msra.mxu0 0.0
    %888 = vmatprep.subr.mxu0 0.0
    %889 = vmatpush1.msra.mxu0 0.0
    %890 = vmatprep.subr.mxu0 0.0
    %891 = vmatpush1.msra.mxu0 0.0
    %892 = vmatprep.subr.mxu0 0.0
    %893 = vmatpush1.msra.mxu0 0.0
    %894 = vmatprep.subr.mxu0 0.0
    %895 = vmatpush1.msra.mxu0 0.0
    %896 = vmatprep.mubr.f32.mxu0 0.0
    %897 = vmatmul.mubr.f32.gmra.mrb[0].mxu0 %v830
    %v898 = vpop.f32.mrb[0].mxu0
    %v899 = vadd.f32 0.0, %v898
    %v900 = vpop.f32.mrb[0].mxu0
    %901 = vdwg.mxu0
    %v902 = vadd.f32 %v828, %v899
    %v903 = vxor.u32 %v902, 2147483648
    %v904 = vmul.f32 %v903, 1.442695
    %v905 = vpow.pop %v904
    %v906 = vadd.f32 %v905, 1.0
    %v907 = vrcp.pop %v906
    %v908 = vmul.f32 1.0, %v907
    %s909 = scalar_lea.vmem [#allocation3], 2
    %v910 = vld [vmem:[%s909] sm:$0x3]
    %911 = vmatprep.subr.mxu0 0.0
    %912 = vmatpush1.msra.mxu0 %v573
    %913 = vmatprep.subr.mxu0 0.0
    %914 = vmatpush1.msra.mxu0 %v574
    %915 = vmatprep.subr.mxu0 0.0
    %916 = vmatpush1.msra.mxu0 %v575
    %917 = vmatprep.subr.mxu0 0.0
    %918 = vmatpush1.msra.mxu0 %v576
    %919 = vmatprep.subr.mxu0 0.0
    %920 = vmatpush1.msra.mxu0 0.0
    %921 = vmatprep.subr.mxu0 0.0
    %922 = vmatpush1.msra.mxu0 0.0
    %923 = vmatprep.subr.mxu0 0.0
    %924 = vmatpush1.msra.mxu0 0.0
    %925 = vmatprep.subr.mxu0 0.0
    %926 = vmatpush1.msra.mxu0 0.0
    %927 = vmatprep.subr.mxu0 0.0
    %928 = vmatpush1.msra.mxu0 0.0
    %929 = vmatprep.subr.mxu0 0.0
    %930 = vmatpush1.msra.mxu0 0.0
    %931 = vmatprep.subr.mxu0 0.0
    %932 = vmatpush1.msra.mxu0 0.0
    %933 = vmatprep.subr.mxu0 0.0
    %934 = vmatpush1.msra.mxu0 0.0
    %935 = vmatprep.subr.mxu0 0.0
    %936 = vmatpush1.msra.mxu0 0.0
    %937 = vmatprep.subr.mxu0 0.0
    %938 = vmatpush1.msra.mxu0 0.0
    %939 = vmatprep.subr.mxu0 0.0
    %940 = vmatpush1.msra.mxu0 0.0
    %941 = vmatprep.subr.mxu0 0.0
    %942 = vmatpush1.msra.mxu0 0.0
    %943 = vmatprep.subr.mxu0 0.0
    %944 = vmatpush1.msra.mxu0 0.0
    %945 = vmatprep.subr.mxu0 0.0
    %946 = vmatpush1.msra.mxu0 0.0
    %947 = vmatprep.subr.mxu0 0.0
    %948 = vmatpush1.msra.mxu0 0.0
    %949 = vmatprep.subr.mxu0 0.0
    %950 = vmatpush1.msra.mxu0 0.0
    %951 = vmatprep.subr.mxu0 0.0
    %952 = vmatpush1.msra.mxu0 0.0
    %953 = vmatprep.subr.mxu0 0.0
    %954 = vmatpush1.msra.mxu0 0.0
    %955 = vmatprep.subr.mxu0 0.0
    %956 = vmatpush1.msra.mxu0 0.0
    %957 = vmatprep.subr.mxu0 0.0
    %958 = vmatpush1.msra.mxu0 0.0
    %959 = vmatprep.subr.mxu0 0.0
    %960 = vmatpush1.msra.mxu0 0.0
    %961 = vmatprep.subr.mxu0 0.0
    %962 = vmatpush1.msra.mxu0 0.0
    %963 = vmatprep.subr.mxu0 0.0
    %964 = vmatpush1.msra.mxu0 0.0
    %965 = vmatprep.subr.mxu0 0.0
    %966 = vmatpush1.msra.mxu0 0.0
    %967 = vmatprep.subr.mxu0 0.0
    %968 = vmatpush1.msra.mxu0 0.0
    %969 = vmatprep.subr.mxu0 0.0
    %970 = vmatpush1.msra.mxu0 0.0
    %971 = vmatprep.subr.mxu0 0.0
    %972 = vmatpush1.msra.mxu0 0.0
    %973 = vmatprep.subr.mxu0 0.0
    %974 = vmatpush1.msra.mxu0 0.0
    %975 = vmatprep.mubr.f32.mxu0 0.0
    %976 = vmatmul.mubr.f32.gmra.mrb[0].mxu0 %v830
    %v977 = vpop.f32.mrb[0].mxu0
    %v978 = vadd.f32 0.0, %v977
    %v979 = vpop.f32.mrb[0].mxu0
    %980 = vdwg.mxu0
    %v981 = vadd.f32 %v910, %v978
    %v982 = vxor.u32 %v981, 2147483648
    %v983 = vmul.f32 %v982, 1.442695
    %v984 = vpow.pop %v983
    %v985 = vadd.f32 %v984, 1.0
    %v986 = vrcp.pop %v985
    %v987 = vmul.f32 1.0, %v986
    %988 = vmatprep.subr.mxu0 0.0
    %989 = vmatpush1.msra.mxu0 %v577
    %990 = vmatprep.subr.mxu0 0.0
    %991 = vmatpush1.msra.mxu0 %v578
    %992 = vmatprep.subr.mxu0 0.0
    %993 = vmatpush1.msra.mxu0 %v579
    %994 = vmatprep.subr.mxu0 0.0
    %995 = vmatpush1.msra.mxu0 %v580
    %996 = vmatprep.subr.mxu0 0.0
    %997 = vmatpush1.msra.mxu0 0.0
    %998 = vmatprep.subr.mxu0 0.0
    %999 = vmatpush1.msra.mxu0 0.0
    %1000 = vmatprep.subr.mxu0 0.0
    %1001 = vmatpush1.msra.mxu0 0.0
    %1002 = vmatprep.subr.mxu0 0.0
    %1003 = vmatpush1.msra.mxu0 0.0
    %1004 = vmatprep.subr.mxu0 0.0
    %1005 = vmatpush1.msra.mxu0 0.0
    %1006 = vmatprep.subr.mxu0 0.0
    %1007 = vmatpush1.msra.mxu0 0.0
    %1008 = vmatprep.subr.mxu0 0.0
    %1009 = vmatpush1.msra.mxu0 0.0
    %1010 = vmatprep.subr.mxu0 0.0
    %1011 = vmatpush1.msra.mxu0 0.0
    %1012 = vmatprep.subr.mxu0 0.0
    %1013 = vmatpush1.msra.mxu0 0.0
    %1014 = vmatprep.subr.mxu0 0.0
    %1015 = vmatpush1.msra.mxu0 0.0
    %1016 = vmatprep.subr.mxu0 0.0
    %1017 = vmatpush1.msra.mxu0 0.0
    %1018 = vmatprep.subr.mxu0 0.0
    %1019 = vmatpush1.msra.mxu0 0.0
    %1020 = vmatprep.subr.mxu0 0.0
    %1021 = vmatpush1.msra.mxu0 0.0
    %1022 = vmatprep.subr.mxu0 0.0
    %1023 = vmatpush1.msra.mxu0 0.0
    %1024 = vmatprep.subr.mxu0 0.0
    %1025 = vmatpush1.msra.mxu0 0.0
    %1026 = vmatprep.subr.mxu0 0.0
    %1027 = vmatpush1.msra.mxu0 0.0
    %1028 = vmatprep.subr.mxu0 0.0
    %1029 = vmatpush1.msra.mxu0 0.0
    %1030 = vmatprep.subr.mxu0 0.0
    %1031 = vmatpush1.msra.mxu0 0.0
    %1032 = vmatprep.subr.mxu0 0.0
    %1033 = vmatpush1.msra.mxu0 0.0
    %1034 = vmatprep.subr.mxu0 0.0
    %1035 = vmatpush1.msra.mxu0 0.0
    %1036 = vmatprep.subr.mxu0 0.0
    %1037 = vmatpush1.msra.mxu0 0.0
    %1038 = vmatprep.subr.mxu0 0.0
    %1039 = vmatpush1.msra.mxu0 0.0
    %1040 = vmatprep.subr.mxu0 0.0
    %1041 = vmatpush1.msra.mxu0 0.0
    %1042 = vmatprep.subr.mxu0 0.0
    %1043 = vmatpush1.msra.mxu0 0.0
    %1044 = vmatprep.subr.mxu0 0.0
    %1045 = vmatpush1.msra.mxu0 0.0
    %1046 = vmatprep.subr.mxu0 0.0
    %1047 = vmatpush1.msra.mxu0 0.0
    %1048 = vmatprep.subr.mxu0 0.0
    %1049 = vmatpush1.msra.mxu0 0.0
    %1050 = vmatprep.subr.mxu0 0.0
    %1051 = vmatpush1.msra.mxu0 0.0
    %1052 = vmatprep.mubr.f32.mxu0 0.0
    %1053 = vmatmul.mubr.f32.gmra.mrb[0].mxu0 %v830
    %v1054 = vpop.f32.mrb[0].mxu0
    %v1055 = vadd.f32 %v586, %v1054
    %v1056 = vpop.f32.mrb[0].mxu0
    %1057 = vdwg.mxu0
    %s1058 = scalar_lea.vmem [#allocation4], 2
    %v1059 = vld [vmem:[%s1058] sm:$0x3]
    %v1060 = vmul.f32 %v908, %v1055
    %v1061 = vadd.f32 %v1059, %v1060
    %v1062 = vtanh.pop %v1061
    %v1063 = vsub.f32 1.0, %v987
    %v1064 = vmul.f32 %v1063, %v1062
    %v1065 = vmul.f32 %v987, %v825
    %v1066 = vadd.f32 %v1064, %v1065
    %s1067 = scalar_lea.vmem [#allocation5], 2
    %1068 = vst.msk [vmem:[%s1067] sm:$0x3] %vm290, %v1066
    %s1069 = scalar_lea.vmem [#allocation2], 4
    %v1070 = vld [vmem:[%s1069] sm:$0x3]
    %v1072 = vsel %vm589, %v1066, 0
    %1074 = vmatprep.subr.mxu0 0.0
    %1075 = vmatpush1.msra.mxu0 %v569
    %1076 = vmatprep.subr.mxu0 0.0
    %1077 = vmatpush1.msra.mxu0 %v570
    %1078 = vmatprep.subr.mxu0 0.0
    %1079 = vmatpush1.msra.mxu0 %v571
    %1080 = vmatprep.subr.mxu0 0.0
    %1081 = vmatpush1.msra.mxu0 %v572
    %1082 = vmatprep.subr.mxu0 0.0
    %1083 = vmatpush1.msra.mxu0 0.0
    %1084 = vmatprep.subr.mxu0 0.0
    %1085 = vmatpush1.msra.mxu0 0.0
    %1086 = vmatprep.subr.mxu0 0.0
    %1087 = vmatpush1.msra.mxu0 0.0
    %1088 = vmatprep.subr.mxu0 0.0
    %1089 = vmatpush1.msra.mxu0 0.0
    %1090 = vmatprep.subr.mxu0 0.0
    %1091 = vmatpush1.msra.mxu0 0.0
    %1092 = vmatprep.subr.mxu0 0.0
    %1093 = vmatpush1.msra.mxu0 0.0
    %1094 = vmatprep.subr.mxu0 0.0
    %1095 = vmatpush1.msra.mxu0 0.0
    %1096 = vmatprep.subr.mxu0 0.0
    %1097 = vmatpush1.msra.mxu0 0.0
    %1098 = vmatprep.subr.mxu0 0.0
    %1099 = vmatpush1.msra.mxu0 0.0
    %1100 = vmatprep.subr.mxu0 0.0
    %1101 = vmatpush1.msra.mxu0 0.0
    %1102 = vmatprep.subr.mxu0 0.0
    %1103 = vmatpush1.msra.mxu0 0.0
    %1104 = vmatprep.subr.mxu0 0.0
    %1105 = vmatpush1.msra.mxu0 0.0
    %1106 = vmatprep.subr.mxu0 0.0
    %1107 = vmatpush1.msra.mxu0 0.0
    %1108 = vmatprep.subr.mxu0 0.0
    %1109 = vmatpush1.msra.mxu0 0.0
    %1110 = vmatprep.subr.mxu0 0.0
    %1111 = vmatpush1.msra.mxu0 0.0
    %1112 = vmatprep.subr.mxu0 0.0
    %1113 = vmatpush1.msra.mxu0 0.0
    %1114 = vmatprep.subr.mxu0 0.0
    %1115 = vmatpush1.msra.mxu0 0.0
    %1116 = vmatprep.subr.mxu0 0.0
    %1117 = vmatpush1.msra.mxu0 0.0
    %1118 = vmatprep.subr.mxu0 0.0
    %1119 = vmatpush1.msra.mxu0 0.0
    %1120 = vmatprep.subr.mxu0 0.0
    %1121 = vmatpush1.msra.mxu0 0.0
    %1122 = vmatprep.subr.mxu0 0.0
    %1123 = vmatpush1.msra.mxu0 0.0
    %1124 = vmatprep.subr.mxu0 0.0
    %1125 = vmatpush1.msra.mxu0 0.0
    %1126 = vmatprep.subr.mxu0 0.0
    %1127 = vmatpush1.msra.mxu0 0.0
    %1128 = vmatprep.subr.mxu0 0.0
    %1129 = vmatpush1.msra.mxu0 0.0
    %1130 = vmatprep.subr.mxu0 0.0
    %1131 = vmatpush1.msra.mxu0 0.0
    %1132 = vmatprep.subr.mxu0 0.0
    %1133 = vmatpush1.msra.mxu0 0.0
    %1134 = vmatprep.subr.mxu0 0.0
    %1135 = vmatpush1.msra.mxu0 0.0
    %1136 = vmatprep.subr.mxu0 0.0
    %1137 = vmatpush1.msra.mxu0 0.0
    %1138 = vmatprep.mubr.f32.mxu0 0.0
    %1139 = vmatmul.mubr.f32.gmra.mrb[0].mxu0 %v1072
    %v1140 = vpop.f32.mrb[0].mxu0
    %v1141 = vadd.f32 0.0, %v1140
    %v1142 = vpop.f32.mrb[0].mxu0
    %1143 = vdwg.mxu0
    %v1144 = vadd.f32 %v1070, %v1141
    %v1145 = vxor.u32 %v1144, 2147483648
    %v1146 = vmul.f32 %v1145, 1.442695
    %v1147 = vpow.pop %v1146
    %v1148 = vadd.f32 %v1147, 1.0
    %v1149 = vrcp.pop %v1148
    %v1150 = vmul.f32 1.0, %v1149
    %s1151 = scalar_lea.vmem [#allocation3], 4
    %v1152 = vld [vmem:[%s1151] sm:$0x3]
    %1153 = vmatprep.subr.mxu0 0.0
    %1154 = vmatpush1.msra.mxu0 %v573
    %1155 = vmatprep.subr.mxu0 0.0
    %1156 = vmatpush1.msra.mxu0 %v574
    %1157 = vmatprep.subr.mxu0 0.0
    %1158 = vmatpush1.msra.mxu0 %v575
    %1159 = vmatprep.subr.mxu0 0.0
    %1160 = vmatpush1.msra.mxu0 %v576
    %1161 = vmatprep.subr.mxu0 0.0
    %1162 = vmatpush1.msra.mxu0 0.0
    %1163 = vmatprep.subr.mxu0 0.0
    %1164 = vmatpush1.msra.mxu0 0.0
    %1165 = vmatprep.subr.mxu0 0.0
    %1166 = vmatpush1.msra.mxu0 0.0
    %1167 = vmatprep.subr.mxu0 0.0
    %1168 = vmatpush1.msra.mxu0 0.0
    %1169 = vmatprep.subr.mxu0 0.0
    %1170 = vmatpush1.msra.mxu0 0.0
    %1171 = vmatprep.subr.mxu0 0.0
    %1172 = vmatpush1.msra.mxu0 0.0
    %1173 = vmatprep.subr.mxu0 0.0
    %1174 = vmatpush1.msra.mxu0 0.0
    %1175 = vmatprep.subr.mxu0 0.0
    %1176 = vmatpush1.msra.mxu0 0.0
    %1177 = vmatprep.subr.mxu0 0.0
    %1178 = vmatpush1.msra.mxu0 0.0
    %1179 = vmatprep.subr.mxu0 0.0
    %1180 = vmatpush1.msra.mxu0 0.0
    %1181 = vmatprep.subr.mxu0 0.0
    %1182 = vmatpush1.msra.mxu0 0.0
    %1183 = vmatprep.subr.mxu0 0.0
    %1184 = vmatpush1.msra.mxu0 0.0
    %1185 = vmatprep.subr.mxu0 0.0
    %1186 = vmatpush1.msra.mxu0 0.0
    %1187 = vmatprep.subr.mxu0 0.0
    %1188 = vmatpush1.msra.mxu0 0.0
    %1189 = vmatprep.subr.mxu0 0.0
    %1190 = vmatpush1.msra.mxu0 0.0
    %1191 = vmatprep.subr.mxu0 0.0
    %1192 = vmatpush1.msra.mxu0 0.0
    %1193 = vmatprep.subr.mxu0 0.0
    %1194 = vmatpush1.msra.mxu0 0.0
    %1195 = vmatprep.subr.mxu0 0.0
    %1196 = vmatpush1.msra.mxu0 0.0
    %1197 = vmatprep.subr.mxu0 0.0
    %1198 = vmatpush1.msra.mxu0 0.0
    %1199 = vmatprep.subr.mxu0 0.0
    %1200 = vmatpush1.msra.mxu0 0.0
    %1201 = vmatprep.subr.mxu0 0.0
    %1202 = vmatpush1.msra.mxu0 0.0
    %1203 = vmatprep.subr.mxu0 0.0
    %1204 = vmatpush1.msra.mxu0 0.0
    %1205 = vmatprep.subr.mxu0 0.0
    %1206 = vmatpush1.msra.mxu0 0.0
    %1207 = vmatprep.subr.mxu0 0.0
    %1208 = vmatpush1.msra.mxu0 0.0
    %1209 = vmatprep.subr.mxu0 0.0
    %1210 = vmatpush1.msra.mxu0 0.0
    %1211 = vmatprep.subr.mxu0 0.0
    %1212 = vmatpush1.msra.mxu0 0.0
    %1213 = vmatprep.subr.mxu0 0.0
    %1214 = vmatpush1.msra.mxu0 0.0
    %1215 = vmatprep.subr.mxu0 0.0
    %1216 = vmatpush1.msra.mxu0 0.0
    %1217 = vmatprep.mubr.f32.mxu0 0.0
    %1218 = vmatmul.mubr.f32.gmra.mrb[0].mxu0 %v1072
    %v1219 = vpop.f32.mrb[0].mxu0
    %v1220 = vadd.f32 0.0, %v1219
    %v1221 = vpop.f32.mrb[0].mxu0
    %1222 = vdwg.mxu0
    %v1223 = vadd.f32 %v1152, %v1220
    %v1224 = vxor.u32 %v1223, 2147483648
    %v1225 = vmul.f32 %v1224, 1.442695
    %v1226 = vpow.pop %v1225
    %v1227 = vadd.f32 %v1226, 1.0
    %v1228 = vrcp.pop %v1227
    %v1229 = vmul.f32 1.0, %v1228
    %1230 = vmatprep.subr.mxu0 0.0
    %1231 = vmatpush1.msra.mxu0 %v577
    %1232 = vmatprep.subr.mxu0 0.0
    %1233 = vmatpush1.msra.mxu0 %v578
    %1234 = vmatprep.subr.mxu0 0.0
    %1235 = vmatpush1.msra.mxu0 %v579
    %1236 = vmatprep.subr.mxu0 0.0
    %1237 = vmatpush1.msra.mxu0 %v580
    %1238 = vmatprep.subr.mxu0 0.0
    %1239 = vmatpush1.msra.mxu0 0.0
    %1240 = vmatprep.subr.mxu0 0.0
    %1241 = vmatpush1.msra.mxu0 0.0
    %1242 = vmatprep.subr.mxu0 0.0
    %1243 = vmatpush1.msra.mxu0 0.0
    %1244 = vmatprep.subr.mxu0 0.0
    %1245 = vmatpush1.msra.mxu0 0.0
    %1246 = vmatprep.subr.mxu0 0.0
    %1247 = vmatpush1.msra.mxu0 0.0
    %1248 = vmatprep.subr.mxu0 0.0
    %1249 = vmatpush1.msra.mxu0 0.0
    %1250 = vmatprep.subr.mxu0 0.0
    %1251 = vmatpush1.msra.mxu0 0.0
    %1252 = vmatprep.subr.mxu0 0.0
    %1253 = vmatpush1.msra.mxu0 0.0
    %1254 = vmatprep.subr.mxu0 0.0
    %1255 = vmatpush1.msra.mxu0 0.0
    %1256 = vmatprep.subr.mxu0 0.0
    %1257 = vmatpush1.msra.mxu0 0.0
    %1258 = vmatprep.subr.mxu0 0.0
    %1259 = vmatpush1.msra.mxu0 0.0
    %1260 = vmatprep.subr.mxu0 0.0
    %1261 = vmatpush1.msra.mxu0 0.0
    %1262 = vmatprep.subr.mxu0 0.0
    %1263 = vmatpush1.msra.mxu0 0.0
    %1264 = vmatprep.subr.mxu0 0.0
    %1265 = vmatpush1.msra.mxu0 0.0
    %1266 = vmatprep.subr.mxu0 0.0
    %1267 = vmatpush1.msra.mxu0 0.0
    %1268 = vmatprep.subr.mxu0 0.0
    %1269 = vmatpush1.msra.mxu0 0.0
    %1270 = vmatprep.subr.mxu0 0.0
    %1271 = vmatpush1.msra.mxu0 0.0
    %1272 = vmatprep.subr.mxu0 0.0
    %1273 = vmatpush1.msra.mxu0 0.0
    %1274 = vmatprep.subr.mxu0 0.0
    %1275 = vmatpush1.msra.mxu0 0.0
    %1276 = vmatprep.subr.mxu0 0.0
    %1277 = vmatpush1.msra.mxu0 0.0
    %1278 = vmatprep.subr.mxu0 0.0
    %1279 = vmatpush1.msra.mxu0 0.0
    %1280 = vmatprep.subr.mxu0 0.0
    %1281 = vmatpush1.msra.mxu0 0.0
    %1282 = vmatprep.subr.mxu0 0.0
    %1283 = vmatpush1.msra.mxu0 0.0
    %1284 = vmatprep.subr.mxu0 0.0
    %1285 = vmatpush1.msra.mxu0 0.0
    %1286 = vmatprep.subr.mxu0 0.0
    %1287 = vmatpush1.msra.mxu0 0.0
    %1288 = vmatprep.subr.mxu0 0.0
    %1289 = vmatpush1.msra.mxu0 0.0
    %1290 = vmatprep.subr.mxu0 0.0
    %1291 = vmatpush1.msra.mxu0 0.0
    %1292 = vmatprep.subr.mxu0 0.0
    %1293 = vmatpush1.msra.mxu0 0.0
    %1294 = vmatprep.mubr.f32.mxu0 0.0
    %1295 = vmatmul.mubr.f32.gmra.mrb[0].mxu0 %v1072
    %v1296 = vpop.f32.mrb[0].mxu0
    %v1297 = vadd.f32 %v586, %v1296
    %v1298 = vpop.f32.mrb[0].mxu0
    %1299 = vdwg.mxu0
    %s1300 = scalar_lea.vmem [#allocation4], 4
    %v1301 = vld [vmem:[%s1300] sm:$0x3]
    %v1302 = vmul.f32 %v1150, %v1297
    %v1303 = vadd.f32 %v1301, %v1302
    %v1304 = vtanh.pop %v1303
    %v1305 = vsub.f32 1.0, %v1229
    %v1306 = vmul.f32 %v1305, %v1304
    %v1307 = vmul.f32 %v1229, %v1066
    %v1308 = vadd.f32 %v1306, %v1307
    %s1309 = scalar_lea.vmem [#allocation5], 4
    %1310 = vst.msk [vmem:[%s1309] sm:$0x3] %vm290, %v1308
    %s1311 = scalar_lea.vmem [#allocation2], 6
    %v1312 = vld [vmem:[%s1311] sm:$0x3]
    %v1314 = vsel %vm589, %v1308, 0
    %1316 = vmatprep.subr.mxu0 0.0
    %1317 = vmatpush1.msra.mxu0 %v569
    %1318 = vmatprep.subr.mxu0 0.0
    %1319 = vmatpush1.msra.mxu0 %v570
    %1320 = vmatprep.subr.mxu0 0.0
    %1321 = vmatpush1.msra.mxu0 %v571
    %1322 = vmatprep.subr.mxu0 0.0
    %1323 = vmatpush1.msra.mxu0 %v572
    %1324 = vmatprep.subr.mxu0 0.0
    %1325 = vmatpush1.msra.mxu0 0.0
    %1326 = vmatprep.subr.mxu0 0.0
    %1327 = vmatpush1.msra.mxu0 0.0
    %1328 = vmatprep.subr.mxu0 0.0
    %1329 = vmatpush1.msra.mxu0 0.0
    %1330 = vmatprep.subr.mxu0 0.0
    %1331 = vmatpush1.msra.mxu0 0.0
    %1332 = vmatprep.subr.mxu0 0.0
    %1333 = vmatpush1.msra.mxu0 0.0
    %1334 = vmatprep.subr.mxu0 0.0
    %1335 = vmatpush1.msra.mxu0 0.0
    %1336 = vmatprep.subr.mxu0 0.0
    %1337 = vmatpush1.msra.mxu0 0.0
    %1338 = vmatprep.subr.mxu0 0.0
    %1339 = vmatpush1.msra.mxu0 0.0
    %1340 = vmatprep.subr.mxu0 0.0
    %1341 = vmatpush1.msra.mxu0 0.0
    %1342 = vmatprep.subr.mxu0 0.0
    %1343 = vmatpush1.msra.mxu0 0.0
    %1344 = vmatprep.subr.mxu0 0.0
    %1345 = vmatpush1.msra.mxu0 0.0
    %1346 = vmatprep.subr.mxu0 0.0
    %1347 = vmatpush1.msra.mxu0 0.0
    %1348 = vmatprep.subr.mxu0 0.0
    %1349 = vmatpush1.msra.mxu0 0.0
    %1350 = vmatprep.subr.mxu0 0.0
    %1351 = vmatpush1.msra.mxu0 0.0
    %1352 = vmatprep.subr.mxu0 0.0
    %1353 = vmatpush1.msra.mxu0 0.0
    %1354 = vmatprep.subr.mxu0 0.0
    %1355 = vmatpush1.msra.mxu0 0.0
    %1356 = vmatprep.subr.mxu0 0.0
    %1357 = vmatpush1.msra.mxu0 0.0
    %1358 = vmatprep.subr.mxu0 0.0
    %1359 = vmatpush1.msra.mxu0 0.0
    %1360 = vmatprep.subr.mxu0 0.0
    %1361 = vmatpush1.msra.mxu0 0.0
    %1362 = vmatprep.subr.mxu0 0.0
    %1363 = vmatpush1.msra.mxu0 0.0
    %1364 = vmatprep.subr.mxu0 0.0
    %1365 = vmatpush1.msra.mxu0 0.0
    %1366 = vmatprep.subr.mxu0 0.0
    %1367 = vmatpush1.msra.mxu0 0.0
    %1368 = vmatprep.subr.mxu0 0.0
    %1369 = vmatpush1.msra.mxu0 0.0
    %1370 = vmatprep.subr.mxu0 0.0
    %1371 = vmatpush1.msra.mxu0 0.0
    %1372 = vmatprep.subr.mxu0 0.0
    %1373 = vmatpush1.msra.mxu0 0.0
    %1374 = vmatprep.subr.mxu0 0.0
    %1375 = vmatpush1.msra.mxu0 0.0
    %1376 = vmatprep.subr.mxu0 0.0
    %1377 = vmatpush1.msra.mxu0 0.0
    %1378 = vmatprep.subr.mxu0 0.0
    %1379 = vmatpush1.msra.mxu0 0.0
    %1380 = vmatprep.mubr.f32.mxu0 0.0
    %1381 = vmatmul.mubr.f32.gmra.mrb[0].mxu0 %v1314
    %v1382 = vpop.f32.mrb[0].mxu0
    %v1383 = vadd.f32 0.0, %v1382
    %v1384 = vpop.f32.mrb[0].mxu0
    %1385 = vdwg.mxu0
    %v1386 = vadd.f32 %v1312, %v1383
    %v1387 = vxor.u32 %v1386, 2147483648
    %v1388 = vmul.f32 %v1387, 1.442695
    %v1389 = vpow.pop %v1388
    %v1390 = vadd.f32 %v1389, 1.0
    %v1391 = vrcp.pop %v1390
    %v1392 = vmul.f32 1.0, %v1391
    %s1393 = scalar_lea.vmem [#allocation3], 6
    %v1394 = vld [vmem:[%s1393] sm:$0x3]
    %1395 = vmatprep.subr.mxu0 0.0
    %1396 = vmatpush1.msra.mxu0 %v573
    %1397 = vmatprep.subr.mxu0 0.0
    %1398 = vmatpush1.msra.mxu0 %v574
    %1399 = vmatprep.subr.mxu0 0.0
    %1400 = vmatpush1.msra.mxu0 %v575
    %1401 = vmatprep.subr.mxu0 0.0
    %1402 = vmatpush1.msra.mxu0 %v576
    %1403 = vmatprep.subr.mxu0 0.0
    %1404 = vmatpush1.msra.mxu0 0.0
    %1405 = vmatprep.subr.mxu0 0.0
    %1406 = vmatpush1.msra.mxu0 0.0
    %1407 = vmatprep.subr.mxu0 0.0
    %1408 = vmatpush1.msra.mxu0 0.0
    %1409 = vmatprep.subr.mxu0 0.0
    %1410 = vmatpush1.msra.mxu0 0.0
    %1411 = vmatprep.subr.mxu0 0.0
    %1412 = vmatpush1.msra.mxu0 0.0
    %1413 = vmatprep.subr.mxu0 0.0
    %1414 = vmatpush1.msra.mxu0 0.0
    %1415 = vmatprep.subr.mxu0 0.0
    %1416 = vmatpush1.msra.mxu0 0.0
    %1417 = vmatprep.subr.mxu0 0.0
    %1418 = vmatpush1.msra.mxu0 0.0
    %1419 = vmatprep.subr.mxu0 0.0
    %1420 = vmatpush1.msra.mxu0 0.0
    %1421 = vmatprep.subr.mxu0 0.0
    %1422 = vmatpush1.msra.mxu0 0.0
    %1423 = vmatprep.subr.mxu0 0.0
    %1424 = vmatpush1.msra.mxu0 0.0
    %1425 = vmatprep.subr.mxu0 0.0
    %1426 = vmatpush1.msra.mxu0 0.0
    %1427 = vmatprep.subr.mxu0 0.0
    %1428 = vmatpush1.msra.mxu0 0.0
    %1429 = vmatprep.subr.mxu0 0.0
    %1430 = vmatpush1.msra.mxu0 0.0
    %1431 = vmatprep.subr.mxu0 0.0
    %1432 = vmatpush1.msra.mxu0 0.0
    %1433 = vmatprep.subr.mxu0 0.0
    %1434 = vmatpush1.msra.mxu0 0.0
    %1435 = vmatprep.subr.mxu0 0.0
    %1436 = vmatpush1.msra.mxu0 0.0
    %1437 = vmatprep.subr.mxu0 0.0
    %1438 = vmatpush1.msra.mxu0 0.0
    %1439 = vmatprep.subr.mxu0 0.0
    %1440 = vmatpush1.msra.mxu0 0.0
    %1441 = vmatprep.subr.mxu0 0.0
    %1442 = vmatpush1.msra.mxu0 0.0
    %1443 = vmatprep.subr.mxu0 0.0
    %1444 = vmatpush1.msra.mxu0 0.0
    %1445 = vmatprep.subr.mxu0 0.0
    %1446 = vmatpush1.msra.mxu0 0.0
    %1447 = vmatprep.subr.mxu0 0.0
    %1448 = vmatpush1.msra.mxu0 0.0
    %1449 = vmatprep.subr.mxu0 0.0
    %1450 = vmatpush1.msra.mxu0 0.0
    %1451 = vmatprep.subr.mxu0 0.0
    %1452 = vmatpush1.msra.mxu0 0.0
    %1453 = vmatprep.subr.mxu0 0.0
    %1454 = vmatpush1.msra.mxu0 0.0
    %1455 = vmatprep.subr.mxu0 0.0
    %1456 = vmatpush1.msra.mxu0 0.0
    %1457 = vmatprep.subr.mxu0 0.0
    %1458 = vmatpush1.msra.mxu0 0.0
    %1459 = vmatprep.mubr.f32.mxu0 0.0
    %1460 = vmatmul.mubr.f32.gmra.mrb[0].mxu0 %v1314
    %v1461 = vpop.f32.mrb[0].mxu0
    %v1462 = vadd.f32 0.0, %v1461
    %v1463 = vpop.f32.mrb[0].mxu0
    %1464 = vdwg.mxu0
    %v1465 = vadd.f32 %v1394, %v1462
    %v1466 = vxor.u32 %v1465, 2147483648
    %v1467 = vmul.f32 %v1466, 1.442695
    %v1468 = vpow.pop %v1467
    %v1469 = vadd.f32 %v1468, 1.0
    %v1470 = vrcp.pop %v1469
    %v1471 = vmul.f32 1.0, %v1470
    %1472 = vmatprep.subr.mxu0 0.0
    %1473 = vmatpush1.msra.mxu0 %v577
    %1474 = vmatprep.subr.mxu0 0.0
    %1475 = vmatpush1.msra.mxu0 %v578
    %1476 = vmatprep.subr.mxu0 0.0
    %1477 = vmatpush1.msra.mxu0 %v579
    %1478 = vmatprep.subr.mxu0 0.0
    %1479 = vmatpush1.msra.mxu0 %v580
    %1480 = vmatprep.subr.mxu0 0.0
    %1481 = vmatpush1.msra.mxu0 0.0
    %1482 = vmatprep.subr.mxu0 0.0
    %1483 = vmatpush1.msra.mxu0 0.0
    %1484 = vmatprep.subr.mxu0 0.0
    %1485 = vmatpush1.msra.mxu0 0.0
    %1486 = vmatprep.subr.mxu0 0.0
    %1487 = vmatpush1.msra.mxu0 0.0
    %1488 = vmatprep.subr.mxu0 0.0
    %1489 = vmatpush1.msra.mxu0 0.0
    %1490 = vmatprep.subr.mxu0 0.0
    %1491 = vmatpush1.msra.mxu0 0.0
    %1492 = vmatprep.subr.mxu0 0.0
    %1493 = vmatpush1.msra.mxu0 0.0
    %1494 = vmatprep.subr.mxu0 0.0
    %1495 = vmatpush1.msra.mxu0 0.0
    %1496 = vmatprep.subr.mxu0 0.0
    %1497 = vmatpush1.msra.mxu0 0.0
    %1498 = vmatprep.subr.mxu0 0.0
    %1499 = vmatpush1.msra.mxu0 0.0
    %1500 = vmatprep.subr.mxu0 0.0
    %1501 = vmatpush1.msra.mxu0 0.0
    %1502 = vmatprep.subr.mxu0 0.0
    %1503 = vmatpush1.msra.mxu0 0.0
    %1504 = vmatprep.subr.mxu0 0.0
    %1505 = vmatpush1.msra.mxu0 0.0
    %1506 = vmatprep.subr.mxu0 0.0
    %1507 = vmatpush1.msra.mxu0 0.0
    %1508 = vmatprep.subr.mxu0 0.0
    %1509 = vmatpush1.msra.mxu0 0.0
    %1510 = vmatprep.subr.mxu0 0.0
    %1511 = vmatpush1.msra.mxu0 0.0
    %1512 = vmatprep.subr.mxu0 0.0
    %1513 = vmatpush1.msra.mxu0 0.0
    %1514 = vmatprep.subr.mxu0 0.0
    %1515 = vmatpush1.msra.mxu0 0.0
    %1516 = vmatprep.subr.mxu0 0.0
    %1517 = vmatpush1.msra.mxu0 0.0
    %1518 = vmatprep.subr.mxu0 0.0
    %1519 = vmatpush1.msra.mxu0 0.0
    %1520 = vmatprep.subr.mxu0 0.0
    %1521 = vmatpush1.msra.mxu0 0.0
    %1522 = vmatprep.subr.mxu0 0.0
    %1523 = vmatpush1.msra.mxu0 0.0
    %1524 = vmatprep.subr.mxu0 0.0
    %1525 = vmatpush1.msra.mxu0 0.0
    %1526 = vmatprep.subr.mxu0 0.0
    %1527 = vmatpush1.msra.mxu0 0.0
    %1528 = vmatprep.subr.mxu0 0.0
    %1529 = vmatpush1.msra.mxu0 0.0
    %1530 = vmatprep.subr.mxu0 0.0
    %1531 = vmatpush1.msra.mxu0 0.0
    %1532 = vmatprep.subr.mxu0 0.0
    %1533 = vmatpush1.msra.mxu0 0.0
    %1534 = vmatprep.subr.mxu0 0.0
    %1535 = vmatpush1.msra.mxu0 0.0
    %1536 = vmatprep.mubr.f32.mxu0 0.0
    %1537 = vmatmul.mubr.f32.gmra.mrb[0].mxu0 %v1314
    %v1538 = vpop.f32.mrb[0].mxu0
    %v1539 = vadd.f32 %v586, %v1538
    %v1540 = vpop.f32.mrb[0].mxu0
    %1541 = vdwg.mxu0
    %s1542 = scalar_lea.vmem [#allocation4], 6
    %v1543 = vld [vmem:[%s1542] sm:$0x3]
    %v1544 = vmul.f32 %v1392, %v1539
    %v1545 = vadd.f32 %v1543, %v1544
    %v1546 = vtanh.pop %v1545
    %v1547 = vsub.f32 1.0, %v1471
    %v1548 = vmul.f32 %v1547, %v1546
    %v1549 = vmul.f32 %v1471, %v1308
    %v1550 = vadd.f32 %v1548, %v1549
    %s1551 = scalar_lea.vmem [#allocation5], 6
    %1552 = vst.msk [vmem:[%s1551] sm:$0x3] %vm290, %v1550
    %s1553 = scalar_lea.vmem [#allocation2], 8
    %v1554 = vld [vmem:[%s1553] sm:$0x3]
    %v1556 = vsel %vm589, %v1550, 0
    %1558 = vmatprep.subr.mxu0 0.0
    %1559 = vmatpush1.msra.mxu0 %v569
    %1560 = vmatprep.subr.mxu0 0.0
    %1561 = vmatpush1.msra.mxu0 %v570
    %1562 = vmatprep.subr.mxu0 0.0
    %1563 = vmatpush1.msra.mxu0 %v571
    %1564 = vmatprep.subr.mxu0 0.0
    %1565 = vmatpush1.msra.mxu0 %v572
    %1566 = vmatprep.subr.mxu0 0.0
    %1567 = vmatpush1.msra.mxu0 0.0
    %1568 = vmatprep.subr.mxu0 0.0
    %1569 = vmatpush1.msra.mxu0 0.0
    %1570 = vmatprep.subr.mxu0 0.0
    %1571 = vmatpush1.msra.mxu0 0.0
    %1572 = vmatprep.subr.mxu0 0.0
    %1573 = vmatpush1.msra.mxu0 0.0
    %1574 = vmatprep.subr.mxu0 0.0
    %1575 = vmatpush1.msra.mxu0 0.0
    %1576 = vmatprep.subr.mxu0 0.0
    %1577 = vmatpush1.msra.mxu0 0.0
    %1578 = vmatprep.subr.mxu0 0.0
    %1579 = vmatpush1.msra.mxu0 0.0
    %1580 = vmatprep.subr.mxu0 0.0
    %1581 = vmatpush1.msra.mxu0 0.0
    %1582 = vmatprep.subr.mxu0 0.0
    %1583 = vmatpush1.msra.mxu0 0.0
    %1584 = vmatprep.subr.mxu0 0.0
    %1585 = vmatpush1.msra.mxu0 0.0
    %1586 = vmatprep.subr.mxu0 0.0
    %1587 = vmatpush1.msra.mxu0 0.0
    %1588 = vmatprep.subr.mxu0 0.0
    %1589 = vmatpush1.msra.mxu0 0.0
    %1590 = vmatprep.subr.mxu0 0.0
    %1591 = vmatpush1.msra.mxu0 0.0
    %1592 = vmatprep.subr.mxu0 0.0
    %1593 = vmatpush1.msra.mxu0 0.0
    %1594 = vmatprep.subr.mxu0 0.0
    %1595 = vmatpush1.msra.mxu0 0.0
    %1596 = vmatprep.subr.mxu0 0.0
    %1597 = vmatpush1.msra.mxu0 0.0
    %1598 = vmatprep.subr.mxu0 0.0
    %1599 = vmatpush1.msra.mxu0 0.0
    %1600 = vmatprep.subr.mxu0 0.0
    %1601 = vmatpush1.msra.mxu0 0.0
    %1602 = vmatprep.subr.mxu0 0.0
    %1603 = vmatpush1.msra.mxu0 0.0
    %1604 = vmatprep.subr.mxu0 0.0
    %1605 = vmatpush1.msra.mxu0 0.0
    %1606 = vmatprep.subr.mxu0 0.0
    %1607 = vmatpush1.msra.mxu0 0.0
    %1608 = vmatprep.subr.mxu0 0.0
    %1609 = vmatpush1.msra.mxu0 0.0
    %1610 = vmatprep.subr.mxu0 0.0
    %1611 = vmatpush1.msra.mxu0 0.0
    %1612 = vmatprep.subr.mxu0 0.0
    %1613 = vmatpush1.msra.mxu0 0.0
    %1614 = vmatprep.subr.mxu0 0.0
    %1615 = vmatpush1.msra.mxu0 0.0
    %1616 = vmatprep.subr.mxu0 0.0
    %1617 = vmatpush1.msra.mxu0 0.0
    %1618 = vmatprep.subr.mxu0 0.0
    %1619 = vmatpush1.msra.mxu0 0.0
    %1620 = vmatprep.subr.mxu0 0.0
    %1621 = vmatpush1.msra.mxu0 0.0
    %1622 = vmatprep.mubr.f32.mxu0 0.0
    %1623 = vmatmul.mubr.f32.gmra.mrb[0].mxu0 %v1556
    %v1624 = vpop.f32.mrb[0].mxu0
    %v1625 = vadd.f32 0.0, %v1624
    %v1626 = vpop.f32.mrb[0].mxu0
    %1627 = vdwg.mxu0
    %v1628 = vadd.f32 %v1554, %v1625
    %v1629 = vxor.u32 %v1628, 2147483648
    %v1630 = vmul.f32 %v1629, 1.442695
    %v1631 = vpow.pop %v1630
    %v1632 = vadd.f32 %v1631, 1.0
    %v1633 = vrcp.pop %v1632
    %v1634 = vmul.f32 1.0, %v1633
    %s1635 = scalar_lea.vmem [#allocation3], 8
    %v1636 = vld [vmem:[%s1635] sm:$0x3]
    %1637 = vmatprep.subr.mxu0 0.0
    %1638 = vmatpush1.msra.mxu0 %v573
    %1639 = vmatprep.subr.mxu0 0.0
    %1640 = vmatpush1.msra.mxu0 %v574
    %1641 = vmatprep.subr.mxu0 0.0
    %1642 = vmatpush1.msra.mxu0 %v575
    %1643 = vmatprep.subr.mxu0 0.0
    %1644 = vmatpush1.msra.mxu0 %v576
    %1645 = vmatprep.subr.mxu0 0.0
    %1646 = vmatpush1.msra.mxu0 0.0
    %1647 = vmatprep.subr.mxu0 0.0
    %1648 = vmatpush1.msra.mxu0 0.0
    %1649 = vmatprep.subr.mxu0 0.0
    %1650 = vmatpush1.msra.mxu0 0.0
    %1651 = vmatprep.subr.mxu0 0.0
    %1652 = vmatpush1.msra.mxu0 0.0
    %1653 = vmatprep.subr.mxu0 0.0
    %1654 = vmatpush1.msra.mxu0 0.0
    %1655 = vmatprep.subr.mxu0 0.0
    %1656 = vmatpush1.msra.mxu0 0.0
    %1657 = vmatprep.subr.mxu0 0.0
    %1658 = vmatpush1.msra.mxu0 0.0
    %1659 = vmatprep.subr.mxu0 0.0
    %1660 = vmatpush1.msra.mxu0 0.0
    %1661 = vmatprep.subr.mxu0 0.0
    %1662 = vmatpush1.msra.mxu0 0.0
    %1663 = vmatprep.subr.mxu0 0.0
    %1664 = vmatpush1.msra.mxu0 0.0
    %1665 = vmatprep.subr.mxu0 0.0
    %1666 = vmatpush1.msra.mxu0 0.0
    %1667 = vmatprep.subr.mxu0 0.0
    %1668 = vmatpush1.msra.mxu0 0.0
    %1669 = vmatprep.subr.mxu0 0.0
    %1670 = vmatpush1.msra.mxu0 0.0
    %1671 = vmatprep.subr.mxu0 0.0
    %1672 = vmatpush1.msra.mxu0 0.0
    %1673 = vmatprep.subr.mxu0 0.0
    %1674 = vmatpush1.msra.mxu0 0.0
    %1675 = vmatprep.subr.mxu0 0.0
    %1676 = vmatpush1.msra.mxu0 0.0
    %1677 = vmatprep.subr.mxu0 0.0
    %1678 = vmatpush1.msra.mxu0 0.0
    %1679 = vmatprep.subr.mxu0 0.0
    %1680 = vmatpush1.msra.mxu0 0.0
    %1681 = vmatprep.subr.mxu0 0.0
    %1682 = vmatpush1.msra.mxu0 0.0
    %1683 = vmatprep.subr.mxu0 0.0
    %1684 = vmatpush1.msra.mxu0 0.0
    %1685 = vmatprep.subr.mxu0 0.0
    %1686 = vmatpush1.msra.mxu0 0.0
    %1687 = vmatprep.subr.mxu0 0.0
    %1688 = vmatpush1.msra.mxu0 0.0
    %1689 = vmatprep.subr.mxu0 0.0
    %1690 = vmatpush1.msra.mxu0 0.0
    %1691 = vmatprep.subr.mxu0 0.0
    %1692 = vmatpush1.msra.mxu0 0.0
    %1693 = vmatprep.subr.mxu0 0.0
    %1694 = vmatpush1.msra.mxu0 0.0
    %1695 = vmatprep.subr.mxu0 0.0
    %1696 = vmatpush1.msra.mxu0 0.0
    %1697 = vmatprep.subr.mxu0 0.0
    %1698 = vmatpush1.msra.mxu0 0.0
    %1699 = vmatprep.subr.mxu0 0.0
    %1700 = vmatpush1.msra.mxu0 0.0
    %1701 = vmatprep.mubr.f32.mxu0 0.0
    %1702 = vmatmul.mubr.f32.gmra.mrb[0].mxu0 %v1556
    %v1703 = vpop.f32.mrb[0].mxu0
    %v1704 = vadd.f32 0.0, %v1703
    %v1705 = vpop.f32.mrb[0].mxu0
    %1706 = vdwg.mxu0
    %v1707 = vadd.f32 %v1636, %v1704
    %v1708 = vxor.u32 %v1707, 2147483648
    %v1709 = vmul.f32 %v1708, 1.442695
    %v1710 = vpow.pop %v1709
    %v1711 = vadd.f32 %v1710, 1.0
    %v1712 = vrcp.pop %v1711
    %v1713 = vmul.f32 1.0, %v1712
    %1714 = vmatprep.subr.mxu0 0.0
    %1715 = vmatpush1.msra.mxu0 %v577
    %1716 = vmatprep.subr.mxu0 0.0
    %1717 = vmatpush1.msra.mxu0 %v578
    %1718 = vmatprep.subr.mxu0 0.0
    %1719 = vmatpush1.msra.mxu0 %v579
    %1720 = vmatprep.subr.mxu0 0.0
    %1721 = vmatpush1.msra.mxu0 %v580
    %1722 = vmatprep.subr.mxu0 0.0
    %1723 = vmatpush1.msra.mxu0 0.0
    %1724 = vmatprep.subr.mxu0 0.0
    %1725 = vmatpush1.msra.mxu0 0.0
    %1726 = vmatprep.subr.mxu0 0.0
    %1727 = vmatpush1.msra.mxu0 0.0
    %1728 = vmatprep.subr.mxu0 0.0
    %1729 = vmatpush1.msra.mxu0 0.0
    %1730 = vmatprep.subr.mxu0 0.0
    %1731 = vmatpush1.msra.mxu0 0.0
    %1732 = vmatprep.subr.mxu0 0.0
    %1733 = vmatpush1.msra.mxu0 0.0
    %1734 = vmatprep.subr.mxu0 0.0
    %1735 = vmatpush1.msra.mxu0 0.0
    %1736 = vmatprep.subr.mxu0 0.0
    %1737 = vmatpush1.msra.mxu0 0.0
    %1738 = vmatprep.subr.mxu0 0.0
    %1739 = vmatpush1.msra.mxu0 0.0
    %1740 = vmatprep.subr.mxu0 0.0
    %1741 = vmatpush1.msra.mxu0 0.0
    %1742 = vmatprep.subr.mxu0 0.0
    %1743 = vmatpush1.msra.mxu0 0.0
    %1744 = vmatprep.subr.mxu0 0.0
    %1745 = vmatpush1.msra.mxu0 0.0
    %1746 = vmatprep.subr.mxu0 0.0
    %1747 = vmatpush1.msra.mxu0 0.0
    %1748 = vmatprep.subr.mxu0 0.0
    %1749 = vmatpush1.msra.mxu0 0.0
    %1750 = vmatprep.subr.mxu0 0.0
    %1751 = vmatpush1.msra.mxu0 0.0
    %1752 = vmatprep.subr.mxu0 0.0
    %1753 = vmatpush1.msra.mxu0 0.0
    %1754 = vmatprep.subr.mxu0 0.0
    %1755 = vmatpush1.msra.mxu0 0.0
    %1756 = vmatprep.subr.mxu0 0.0
    %1757 = vmatpush1.msra.mxu0 0.0
    %1758 = vmatprep.subr.mxu0 0.0
    %1759 = vmatpush1.msra.mxu0 0.0
    %1760 = vmatprep.subr.mxu0 0.0
    %1761 = vmatpush1.msra.mxu0 0.0
    %1762 = vmatprep.subr.mxu0 0.0
    %1763 = vmatpush1.msra.mxu0 0.0
    %1764 = vmatprep.subr.mxu0 0.0
    %1765 = vmatpush1.msra.mxu0 0.0
    %1766 = vmatprep.subr.mxu0 0.0
    %1767 = vmatpush1.msra.mxu0 0.0
    %1768 = vmatprep.subr.mxu0 0.0
    %1769 = vmatpush1.msra.mxu0 0.0
    %1770 = vmatprep.subr.mxu0 0.0
    %1771 = vmatpush1.msra.mxu0 0.0
    %1772 = vmatprep.subr.mxu0 0.0
    %1773 = vmatpush1.msra.mxu0 0.0
    %1774 = vmatprep.subr.mxu0 0.0
    %1775 = vmatpush1.msra.mxu0 0.0
    %1776 = vmatprep.subr.mxu0 0.0
    %1777 = vmatpush1.msra.mxu0 0.0
    %1778 = vmatprep.mubr.f32.mxu0 0.0
    %1779 = vmatmul.mubr.f32.gmra.mrb[0].mxu0 %v1556
    %v1780 = vpop.f32.mrb[0].mxu0
    %v1781 = vadd.f32 %v586, %v1780
    %v1782 = vpop.f32.mrb[0].mxu0
    %1783 = vdwg.mxu0
    %s1784 = scalar_lea.vmem [#allocation4], 8
    %v1785 = vld [vmem:[%s1784] sm:$0x3]
    %v1786 = vmul.f32 %v1634, %v1781
    %v1787 = vadd.f32 %v1785, %v1786
    %v1788 = vtanh.pop %v1787
    %v1789 = vsub.f32 1.0, %v1713
    %v1790 = vmul.f32 %v1789, %v1788
    %v1791 = vmul.f32 %v1713, %v1550
    %v1792 = vadd.f32 %v1790, %v1791
    %s1793 = scalar_lea.vmem [#allocation5], 8
    %1794 = vst.msk [vmem:[%s1793] sm:$0x3] %vm290, %v1792
    %s1795 = scalar_lea.vmem [#allocation2], 10
    %v1796 = vld [vmem:[%s1795] sm:$0x3]
    %v1798 = vsel %vm589, %v1792, 0
    %1800 = vmatprep.subr.mxu0 0.0
    %1801 = vmatpush1.msra.mxu0 %v569
    %1802 = vmatprep.subr.mxu0 0.0
    %1803 = vmatpush1.msra.mxu0 %v570
    %1804 = vmatprep.subr.mxu0 0.0
    %1805 = vmatpush1.msra.mxu0 %v571
    %1806 = vmatprep.subr.mxu0 0.0
    %1807 = vmatpush1.msra.mxu0 %v572
    %1808 = vmatprep.subr.mxu0 0.0
    %1809 = vmatpush1.msra.mxu0 0.0
    %1810 = vmatprep.subr.mxu0 0.0
    %1811 = vmatpush1.msra.mxu0 0.0
    %1812 = vmatprep.subr.mxu0 0.0
    %1813 = vmatpush1.msra.mxu0 0.0
    %1814 = vmatprep.subr.mxu0 0.0
    %1815 = vmatpush1.msra.mxu0 0.0
    %1816 = vmatprep.subr.mxu0 0.0
    %1817 = vmatpush1.msra.mxu0 0.0
    %1818 = vmatprep.subr.mxu0 0.0
    %1819 = vmatpush1.msra.mxu0 0.0
    %1820 = vmatprep.subr.mxu0 0.0
    %1821 = vmatpush1.msra.mxu0 0.0
    %1822 = vmatprep.subr.mxu0 0.0
    %1823 = vmatpush1.msra.mxu0 0.0
    %1824 = vmatprep.subr.mxu0 0.0
    %1825 = vmatpush1.msra.mxu0 0.0
    %1826 = vmatprep.subr.mxu0 0.0
    %1827 = vmatpush1.msra.mxu0 0.0
    %1828 = vmatprep.subr.mxu0 0.0
    %1829 = vmatpush1.msra.mxu0 0.0
    %1830 = vmatprep.subr.mxu0 0.0
    %1831 = vmatpush1.msra.mxu0 0.0
    %1832 = vmatprep.subr.mxu0 0.0
    %1833 = vmatpush1.msra.mxu0 0.0
    %1834 = vmatprep.subr.mxu0 0.0
    %1835 = vmatpush1.msra.mxu0 0.0
    %1836 = vmatprep.subr.mxu0 0.0
    %1837 = vmatpush1.msra.mxu0 0.0
    %1838 = vmatprep.subr.mxu0 0.0
    %1839 = vmatpush1.msra.mxu0 0.0
    %1840 = vmatprep.subr.mxu0 0.0
    %1841 = vmatpush1.msra.mxu0 0.0
    %1842 = vmatprep.subr.mxu0 0.0
    %1843 = vmatpush1.msra.mxu0 0.0
    %1844 = vmatprep.subr.mxu0 0.0
    %1845 = vmatpush1.msra.mxu0 0.0
    %1846 = vmatprep.subr.mxu0 0.0
    %1847 = vmatpush1.msra.mxu0 0.0
    %1848 = vmatprep.subr.mxu0 0.0
    %1849 = vmatpush1.msra.mxu0 0.0
    %1850 = vmatprep.subr.mxu0 0.0
    %1851 = vmatpush1.msra.mxu0 0.0
    %1852 = vmatprep.subr.mxu0 0.0
    %1853 = vmatpush1.msra.mxu0 0.0
    %1854 = vmatprep.subr.mxu0 0.0
    %1855 = vmatpush1.msra.mxu0 0.0
    %1856 = vmatprep.subr.mxu0 0.0
    %1857 = vmatpush1.msra.mxu0 0.0
    %1858 = vmatprep.subr.mxu0 0.0
    %1859 = vmatpush1.msra.mxu0 0.0
    %1860 = vmatprep.subr.mxu0 0.0
    %1861 = vmatpush1.msra.mxu0 0.0
    %1862 = vmatprep.subr.mxu0 0.0
    %1863 = vmatpush1.msra.mxu0 0.0
    %1864 = vmatprep.mubr.f32.mxu0 0.0
    %1865 = vmatmul.mubr.f32.gmra.mrb[0].mxu0 %v1798
    %v1866 = vpop.f32.mrb[0].mxu0
    %v1867 = vadd.f32 0.0, %v1866
    %v1868 = vpop.f32.mrb[0].mxu0
    %1869 = vdwg.mxu0
    %v1870 = vadd.f32 %v1796, %v1867
    %v1871 = vxor.u32 %v1870, 2147483648
    %v1872 = vmul.f32 %v1871, 1.442695
    %v1873 = vpow.pop %v1872
    %v1874 = vadd.f32 %v1873, 1.0
    %v1875 = vrcp.pop %v1874
    %v1876 = vmul.f32 1.0, %v1875
    %s1877 = scalar_lea.vmem [#allocation3], 10
    %v1878 = vld [vmem:[%s1877] sm:$0x3]
    %1879 = vmatprep.subr.mxu0 0.0
    %1880 = vmatpush1.msra.mxu0 %v573
    %1881 = vmatprep.subr.mxu0 0.0
    %1882 = vmatpush1.msra.mxu0 %v574
    %1883 = vmatprep.subr.mxu0 0.0
    %1884 = vmatpush1.msra.mxu0 %v575
    %1885 = vmatprep.subr.mxu0 0.0
    %1886 = vmatpush1.msra.mxu0 %v576
    %1887 = vmatprep.subr.mxu0 0.0
    %1888 = vmatpush1.msra.mxu0 0.0
    %1889 = vmatprep.subr.mxu0 0.0
    %1890 = vmatpush1.msra.mxu0 0.0
    %1891 = vmatprep.subr.mxu0 0.0
    %1892 = vmatpush1.msra.mxu0 0.0
    %1893 = vmatprep.subr.mxu0 0.0
    %1894 = vmatpush1.msra.mxu0 0.0
    %1895 = vmatprep.subr.mxu0 0.0
    %1896 = vmatpush1.msra.mxu0 0.0
    %1897 = vmatprep.subr.mxu0 0.0
    %1898 = vmatpush1.msra.mxu0 0.0
    %1899 = vmatprep.subr.mxu0 0.0
    %1900 = vmatpush1.msra.mxu0 0.0
    %1901 = vmatprep.subr.mxu0 0.0
    %1902 = vmatpush1.msra.mxu0 0.0
    %1903 = vmatprep.subr.mxu0 0.0
    %1904 = vmatpush1.msra.mxu0 0.0
    %1905 = vmatprep.subr.mxu0 0.0
    %1906 = vmatpush1.msra.mxu0 0.0
    %1907 = vmatprep.subr.mxu0 0.0
    %1908 = vmatpush1.msra.mxu0 0.0
    %1909 = vmatprep.subr.mxu0 0.0
    %1910 = vmatpush1.msra.mxu0 0.0
    %1911 = vmatprep.subr.mxu0 0.0
    %1912 = vmatpush1.msra.mxu0 0.0
    %1913 = vmatprep.subr.mxu0 0.0
    %1914 = vmatpush1.msra.mxu0 0.0
    %1915 = vmatprep.subr.mxu0 0.0
    %1916 = vmatpush1.msra.mxu0 0.0
    %1917 = vmatprep.subr.mxu0 0.0
    %1918 = vmatpush1.msra.mxu0 0.0
    %1919 = vmatprep.subr.mxu0 0.0
    %1920 = vmatpush1.msra.mxu0 0.0
    %1921 = vmatprep.subr.mxu0 0.0
    %1922 = vmatpush1.msra.mxu0 0.0
    %1923 = vmatprep.subr.mxu0 0.0
    %1924 = vmatpush1.msra.mxu0 0.0
    %1925 = vmatprep.subr.mxu0 0.0
    %1926 = vmatpush1.msra.mxu0 0.0
    %1927 = vmatprep.subr.mxu0 0.0
    %1928 = vmatpush1.msra.mxu0 0.0
    %1929 = vmatprep.subr.mxu0 0.0
    %1930 = vmatpush1.msra.mxu0 0.0
    %1931 = vmatprep.subr.mxu0 0.0
    %1932 = vmatpush1.msra.mxu0 0.0
    %1933 = vmatprep.subr.mxu0 0.0
    %1934 = vmatpush1.msra.mxu0 0.0
    %1935 = vmatprep.subr.mxu0 0.0
    %1936 = vmatpush1.msra.mxu0 0.0
    %1937 = vmatprep.subr.mxu0 0.0
    %1938 = vmatpush1.msra.mxu0 0.0
    %1939 = vmatprep.subr.mxu0 0.0
    %1940 = vmatpush1.msra.mxu0 0.0
    %1941 = vmatprep.subr.mxu0 0.0
    %1942 = vmatpush1.msra.mxu0 0.0
    %1943 = vmatprep.mubr.f32.mxu0 0.0
    %1944 = vmatmul.mubr.f32.gmra.mrb[0].mxu0 %v1798
    %v1945 = vpop.f32.mrb[0].mxu0
    %v1946 = vadd.f32 0.0, %v1945
    %v1947 = vpop.f32.mrb[0].mxu0
    %1948 = vdwg.mxu0
    %v1949 = vadd.f32 %v1878, %v1946
    %v1950 = vxor.u32 %v1949, 2147483648
    %v1951 = vmul.f32 %v1950, 1.442695
    %v1952 = vpow.pop %v1951
    %v1953 = vadd.f32 %v1952, 1.0
    %v1954 = vrcp.pop %v1953
    %v1955 = vmul.f32 1.0, %v1954
    %1956 = vmatprep.subr.mxu0 0.0
    %1957 = vmatpush1.msra.mxu0 %v577
    %1958 = vmatprep.subr.mxu0 0.0
    %1959 = vmatpush1.msra.mxu0 %v578
    %1960 = vmatprep.subr.mxu0 0.0
    %1961 = vmatpush1.msra.mxu0 %v579
    %1962 = vmatprep.subr.mxu0 0.0
    %1963 = vmatpush1.msra.mxu0 %v580
    %1964 = vmatprep.subr.mxu0 0.0
    %1965 = vmatpush1.msra.mxu0 0.0
    %1966 = vmatprep.subr.mxu0 0.0
    %1967 = vmatpush1.msra.mxu0 0.0
    %1968 = vmatprep.subr.mxu0 0.0
    %1969 = vmatpush1.msra.mxu0 0.0
    %1970 = vmatprep.subr.mxu0 0.0
    %1971 = vmatpush1.msra.mxu0 0.0
    %1972 = vmatprep.subr.mxu0 0.0
    %1973 = vmatpush1.msra.mxu0 0.0
    %1974 = vmatprep.subr.mxu0 0.0
    %1975 = vmatpush1.msra.mxu0 0.0
    %1976 = vmatprep.subr.mxu0 0.0
    %1977 = vmatpush1.msra.mxu0 0.0
    %1978 = vmatprep.subr.mxu0 0.0
    %1979 = vmatpush1.msra.mxu0 0.0
    %1980 = vmatprep.subr.mxu0 0.0
    %1981 = vmatpush1.msra.mxu0 0.0
    %1982 = vmatprep.subr.mxu0 0.0
    %1983 = vmatpush1.msra.mxu0 0.0
    %1984 = vmatprep.subr.mxu0 0.0
    %1985 = vmatpush1.msra.mxu0 0.0
    %1986 = vmatprep.subr.mxu0 0.0
    %1987 = vmatpush1.msra.mxu0 0.0
    %1988 = vmatprep.subr.mxu0 0.0
    %1989 = vmatpush1.msra.mxu0 0.0
    %1990 = vmatprep.subr.mxu0 0.0
    %1991 = vmatpush1.msra.mxu0 0.0
    %1992 = vmatprep.subr.mxu0 0.0
    %1993 = vmatpush1.msra.mxu0 0.0
    %1994 = vmatprep.subr.mxu0 0.0
    %1995 = vmatpush1.msra.mxu0 0.0
    %1996 = vmatprep.subr.mxu0 0.0
    %1997 = vmatpush1.msra.mxu0 0.0
    %1998 = vmatprep.subr.mxu0 0.0
    %1999 = vmatpush1.msra.mxu0 0.0
    %2000 = vmatprep.subr.mxu0 0.0
    %2001 = vmatpush1.msra.mxu0 0.0
    %2002 = vmatprep.subr.mxu0 0.0
    %2003 = vmatpush1.msra.mxu0 0.0
    %2004 = vmatprep.subr.mxu0 0.0
    %2005 = vmatpush1.msra.mxu0 0.0
    %2006 = vmatprep.subr.mxu0 0.0
    %2007 = vmatpush1.msra.mxu0 0.0
    %2008 = vmatprep.subr.mxu0 0.0
    %2009 = vmatpush1.msra.mxu0 0.0
    %2010 = vmatprep.subr.mxu0 0.0
    %2011 = vmatpush1.msra.mxu0 0.0
    %2012 = vmatprep.subr.mxu0 0.0
    %2013 = vmatpush1.msra.mxu0 0.0
    %2014 = vmatprep.subr.mxu0 0.0
    %2015 = vmatpush1.msra.mxu0 0.0
    %2016 = vmatprep.subr.mxu0 0.0
    %2017 = vmatpush1.msra.mxu0 0.0
    %2018 = vmatprep.subr.mxu0 0.0
    %2019 = vmatpush1.msra.mxu0 0.0
    %2020 = vmatprep.mubr.f32.mxu0 0.0
    %2021 = vmatmul.mubr.f32.gmra.mrb[0].mxu0 %v1798
    %v2022 = vpop.f32.mrb[0].mxu0
    %v2023 = vadd.f32 %v586, %v2022
    %v2024 = vpop.f32.mrb[0].mxu0
    %2025 = vdwg.mxu0
    %s2026 = scalar_lea.vmem [#allocation4], 10
    %v2027 = vld [vmem:[%s2026] sm:$0x3]
    %v2028 = vmul.f32 %v1876, %v2023
    %v2029 = vadd.f32 %v2027, %v2028
    %v2030 = vtanh.pop %v2029
    %v2031 = vsub.f32 1.0, %v1955
    %v2032 = vmul.f32 %v2031, %v2030
    %v2033 = vmul.f32 %v1955, %v1792
    %v2034 = vadd.f32 %v2032, %v2033
    %s2035 = scalar_lea.vmem [#allocation5], 10
    %2036 = vst.msk [vmem:[%s2035] sm:$0x3] %vm290, %v2034
    %s2037 = scalar_lea.vmem [#allocation2], 12
    %v2038 = vld [vmem:[%s2037] sm:$0x3]
    %v2040 = vsel %vm589, %v2034, 0
    %2042 = vmatprep.subr.mxu0 0.0
    %2043 = vmatpush1.msra.mxu0 %v569
    %2044 = vmatprep.subr.mxu0 0.0
    %2045 = vmatpush1.msra.mxu0 %v570
    %2046 = vmatprep.subr.mxu0 0.0
    %2047 = vmatpush1.msra.mxu0 %v571
    %2048 = vmatprep.subr.mxu0 0.0
    %2049 = vmatpush1.msra.mxu0 %v572
    %2050 = vmatprep.subr.mxu0 0.0
    %2051 = vmatpush1.msra.mxu0 0.0
    %2052 = vmatprep.subr.mxu0 0.0
    %2053 = vmatpush1.msra.mxu0 0.0
    %2054 = vmatprep.subr.mxu0 0.0
    %2055 = vmatpush1.msra.mxu0 0.0
    %2056 = vmatprep.subr.mxu0 0.0
    %2057 = vmatpush1.msra.mxu0 0.0
    %2058 = vmatprep.subr.mxu0 0.0
    %2059 = vmatpush1.msra.mxu0 0.0
    %2060 = vmatprep.subr.mxu0 0.0
    %2061 = vmatpush1.msra.mxu0 0.0
    %2062 = vmatprep.subr.mxu0 0.0
    %2063 = vmatpush1.msra.mxu0 0.0
    %2064 = vmatprep.subr.mxu0 0.0
    %2065 = vmatpush1.msra.mxu0 0.0
    %2066 = vmatprep.subr.mxu0 0.0
    %2067 = vmatpush1.msra.mxu0 0.0
    %2068 = vmatprep.subr.mxu0 0.0
    %2069 = vmatpush1.msra.mxu0 0.0
    %2070 = vmatprep.subr.mxu0 0.0
    %2071 = vmatpush1.msra.mxu0 0.0
    %2072 = vmatprep.subr.mxu0 0.0
    %2073 = vmatpush1.msra.mxu0 0.0
    %2074 = vmatprep.subr.mxu0 0.0
    %2075 = vmatpush1.msra.mxu0 0.0
    %2076 = vmatprep.subr.mxu0 0.0
    %2077 = vmatpush1.msra.mxu0 0.0
    %2078 = vmatprep.subr.mxu0 0.0
    %2079 = vmatpush1.msra.mxu0 0.0
    %2080 = vmatprep.subr.mxu0 0.0
    %2081 = vmatpush1.msra.mxu0 0.0
    %2082 = vmatprep.subr.mxu0 0.0
    %2083 = vmatpush1.msra.mxu0 0.0
    %2084 = vmatprep.subr.mxu0 0.0
    %2085 = vmatpush1.msra.mxu0 0.0
    %2086 = vmatprep.subr.mxu0 0.0
    %2087 = vmatpush1.msra.mxu0 0.0
    %2088 = vmatprep.subr.mxu0 0.0
    %2089 = vmatpush1.msra.mxu0 0.0
    %2090 = vmatprep.subr.mxu0 0.0
    %2091 = vmatpush1.msra.mxu0 0.0
    %2092 = vmatprep.subr.mxu0 0.0
    %2093 = vmatpush1.msra.mxu0 0.0
    %2094 = vmatprep.subr.mxu0 0.0
    %2095 = vmatpush1.msra.mxu0 0.0
    %2096 = vmatprep.subr.mxu0 0.0
    %2097 = vmatpush1.msra.mxu0 0.0
    %2098 = vmatprep.subr.mxu0 0.0
    %2099 = vmatpush1.msra.mxu0 0.0
    %2100 = vmatprep.subr.mxu0 0.0
    %2101 = vmatpush1.msra.mxu0 0.0
    %2102 = vmatprep.subr.mxu0 0.0
    %2103 = vmatpush1.msra.mxu0 0.0
    %2104 = vmatprep.subr.mxu0 0.0
    %2105 = vmatpush1.msra.mxu0 0.0
    %2106 = vmatprep.mubr.f32.mxu0 0.0
    %2107 = vmatmul.mubr.f32.gmra.mrb[0].mxu0 %v2040
    %v2108 = vpop.f32.mrb[0].mxu0
    %v2109 = vadd.f32 0.0, %v2108
    %v2110 = vpop.f32.mrb[0].mxu0
    %2111 = vdwg.mxu0
    %v2112 = vadd.f32 %v2038, %v2109
    %v2113 = vxor.u32 %v2112, 2147483648
    %v2114 = vmul.f32 %v2113, 1.442695
    %v2115 = vpow.pop %v2114
    %v2116 = vadd.f32 %v2115, 1.0
    %v2117 = vrcp.pop %v2116
    %v2118 = vmul.f32 1.0, %v2117
    %s2119 = scalar_lea.vmem [#allocation3], 12
    %v2120 = vld [vmem:[%s2119] sm:$0x3]
    %2121 = vmatprep.subr.mxu0 0.0
    %2122 = vmatpush1.msra.mxu0 %v573
    %2123 = vmatprep.subr.mxu0 0.0
    %2124 = vmatpush1.msra.mxu0 %v574
    %2125 = vmatprep.subr.mxu0 0.0
    %2126 = vmatpush1.msra.mxu0 %v575
    %2127 = vmatprep.subr.mxu0 0.0
    %2128 = vmatpush1.msra.mxu0 %v576
    %2129 = vmatprep.subr.mxu0 0.0
    %2130 = vmatpush1.msra.mxu0 0.0
    %2131 = vmatprep.subr.mxu0 0.0
    %2132 = vmatpush1.msra.mxu0 0.0
    %2133 = vmatprep.subr.mxu0 0.0
    %2134 = vmatpush1.msra.mxu0 0.0
    %2135 = vmatprep.subr.mxu0 0.0
    %2136 = vmatpush1.msra.mxu0 0.0
    %2137 = vmatprep.subr.mxu0 0.0
    %2138 = vmatpush1.msra.mxu0 0.0
    %2139 = vmatprep.subr.mxu0 0.0
    %2140 = vmatpush1.msra.mxu0 0.0
    %2141 = vmatprep.subr.mxu0 0.0
    %2142 = vmatpush1.msra.mxu0 0.0
    %2143 = vmatprep.subr.mxu0 0.0
    %2144 = vmatpush1.msra.mxu0 0.0
    %2145 = vmatprep.subr.mxu0 0.0
    %2146 = vmatpush1.msra.mxu0 0.0
    %2147 = vmatprep.subr.mxu0 0.0
    %2148 = vmatpush1.msra.mxu0 0.0
    %2149 = vmatprep.subr.mxu0 0.0
    %2150 = vmatpush1.msra.mxu0 0.0
    %2151 = vmatprep.subr.mxu0 0.0
    %2152 = vmatpush1.msra.mxu0 0.0
    %2153 = vmatprep.subr.mxu0 0.0
    %2154 = vmatpush1.msra.mxu0 0.0
    %2155 = vmatprep.subr.mxu0 0.0
    %2156 = vmatpush1.msra.mxu0 0.0
    %2157 = vmatprep.subr.mxu0 0.0
    %2158 = vmatpush1.msra.mxu0 0.0
    %2159 = vmatprep.subr.mxu0 0.0
    %2160 = vmatpush1.msra.mxu0 0.0
    %2161 = vmatprep.subr.mxu0 0.0
    %2162 = vmatpush1.msra.mxu0 0.0
    %2163 = vmatprep.subr.mxu0 0.0
    %2164 = vmatpush1.msra.mxu0 0.0
    %2165 = vmatprep.subr.mxu0 0.0
    %2166 = vmatpush1.msra.mxu0 0.0
    %2167 = vmatprep.subr.mxu0 0.0
    %2168 = vmatpush1.msra.mxu0 0.0
    %2169 = vmatprep.subr.mxu0 0.0
    %2170 = vmatpush1.msra.mxu0 0.0
    %2171 = vmatprep.subr.mxu0 0.0
    %2172 = vmatpush1.msra.mxu0 0.0
    %2173 = vmatprep.subr.mxu0 0.0
    %2174 = vmatpush1.msra.mxu0 0.0
    %2175 = vmatprep.subr.mxu0 0.0
    %2176 = vmatpush1.msra.mxu0 0.0
    %2177 = vmatprep.subr.mxu0 0.0
    %2178 = vmatpush1.msra.mxu0 0.0
    %2179 = vmatprep.subr.mxu0 0.0
    %2180 = vmatpush1.msra.mxu0 0.0
    %2181 = vmatprep.subr.mxu0 0.0
    %2182 = vmatpush1.msra.mxu0 0.0
    %2183 = vmatprep.subr.mxu0 0.0
    %2184 = vmatpush1.msra.mxu0 0.0
    %2185 = vmatprep.mubr.f32.mxu0 0.0
    %2186 = vmatmul.mubr.f32.gmra.mrb[0].mxu0 %v2040
    %v2187 = vpop.f32.mrb[0].mxu0
    %v2188 = vadd.f32 0.0, %v2187
    %v2189 = vpop.f32.mrb[0].mxu0
    %2190 = vdwg.mxu0
    %v2191 = vadd.f32 %v2120, %v2188
    %v2192 = vxor.u32 %v2191, 2147483648
    %v2193 = vmul.f32 %v2192, 1.442695
    %v2194 = vpow.pop %v2193
    %v2195 = vadd.f32 %v2194, 1.0
    %v2196 = vrcp.pop %v2195
    %v2197 = vmul.f32 1.0, %v2196
    %2198 = vmatprep.subr.mxu0 0.0
    %2199 = vmatpush1.msra.mxu0 %v577
    %2200 = vmatprep.subr.mxu0 0.0
    %2201 = vmatpush1.msra.mxu0 %v578
    %2202 = vmatprep.subr.mxu0 0.0
    %2203 = vmatpush1.msra.mxu0 %v579
    %2204 = vmatprep.subr.mxu0 0.0
    %2205 = vmatpush1.msra.mxu0 %v580
    %2206 = vmatprep.subr.mxu0 0.0
    %2207 = vmatpush1.msra.mxu0 0.0
    %2208 = vmatprep.subr.mxu0 0.0
    %2209 = vmatpush1.msra.mxu0 0.0
    %2210 = vmatprep.subr.mxu0 0.0
    %2211 = vmatpush1.msra.mxu0 0.0
    %2212 = vmatprep.subr.mxu0 0.0
    %2213 = vmatpush1.msra.mxu0 0.0
    %2214 = vmatprep.subr.mxu0 0.0
    %2215 = vmatpush1.msra.mxu0 0.0
    %2216 = vmatprep.subr.mxu0 0.0
    %2217 = vmatpush1.msra.mxu0 0.0
    %2218 = vmatprep.subr.mxu0 0.0
    %2219 = vmatpush1.msra.mxu0 0.0
    %2220 = vmatprep.subr.mxu0 0.0
    %2221 = vmatpush1.msra.mxu0 0.0
    %2222 = vmatprep.subr.mxu0 0.0
    %2223 = vmatpush1.msra.mxu0 0.0
    %2224 = vmatprep.subr.mxu0 0.0
    %2225 = vmatpush1.msra.mxu0 0.0
    %2226 = vmatprep.subr.mxu0 0.0
    %2227 = vmatpush1.msra.mxu0 0.0
    %2228 = vmatprep.subr.mxu0 0.0
    %2229 = vmatpush1.msra.mxu0 0.0
    %2230 = vmatprep.subr.mxu0 0.0
    %2231 = vmatpush1.msra.mxu0 0.0
    %2232 = vmatprep.subr.mxu0 0.0
    %2233 = vmatpush1.msra.mxu0 0.0
    %2234 = vmatprep.subr.mxu0 0.0
    %2235 = vmatpush1.msra.mxu0 0.0
    %2236 = vmatprep.subr.mxu0 0.0
    %2237 = vmatpush1.msra.mxu0 0.0
    %2238 = vmatprep.subr.mxu0 0.0
    %2239 = vmatpush1.msra.mxu0 0.0
    %2240 = vmatprep.subr.mxu0 0.0
    %2241 = vmatpush1.msra.mxu0 0.0
    %2242 = vmatprep.subr.mxu0 0.0
    %2243 = vmatpush1.msra.mxu0 0.0
    %2244 = vmatprep.subr.mxu0 0.0
    %2245 = vmatpush1.msra.mxu0 0.0
    %2246 = vmatprep.subr.mxu0 0.0
    %2247 = vmatpush1.msra.mxu0 0.0
    %2248 = vmatprep.subr.mxu0 0.0
    %2249 = vmatpush1.msra.mxu0 0.0
    %2250 = vmatprep.subr.mxu0 0.0
    %2251 = vmatpush1.msra.mxu0 0.0
    %2252 = vmatprep.subr.mxu0 0.0
    %2253 = vmatpush1.msra.mxu0 0.0
    %2254 = vmatprep.subr.mxu0 0.0
    %2255 = vmatpush1.msra.mxu0 0.0
    %2256 = vmatprep.subr.mxu0 0.0
    %2257 = vmatpush1.msra.mxu0 0.0
    %2258 = vmatprep.subr.mxu0 0.0
    %2259 = vmatpush1.msra.mxu0 0.0
    %2260 = vmatprep.subr.mxu0 0.0
    %2261 = vmatpush1.msra.mxu0 0.0
    %2262 = vmatprep.mubr.f32.mxu0 0.0
    %2263 = vmatmul.mubr.f32.gmra.mrb[0].mxu0 %v2040
    %v2264 = vpop.f32.mrb[0].mxu0
    %v2265 = vadd.f32 %v586, %v2264
    %v2266 = vpop.f32.mrb[0].mxu0
    %2267 = vdwg.mxu0
    %s2268 = scalar_lea.vmem [#allocation4], 12
    %v2269 = vld [vmem:[%s2268] sm:$0x3]
    %v2270 = vmul.f32 %v2118, %v2265
    %v2271 = vadd.f32 %v2269, %v2270
    %v2272 = vtanh.pop %v2271
    %v2273 = vsub.f32 1.0, %v2197
    %v2274 = vmul.f32 %v2273, %v2272
    %v2275 = vmul.f32 %v2197, %v2034
    %v2276 = vadd.f32 %v2274, %v2275
    %s2277 = scalar_lea.vmem [#allocation5], 12
    %2278 = vst.msk [vmem:[%s2277] sm:$0x3] %vm290, %v2276
    %s2279 = scalar_lea.vmem [#allocation2], 14
    %v2280 = vld [vmem:[%s2279] sm:$0x3]
    %v2282 = vsel %vm589, %v2276, 0
    %2284 = vmatprep.subr.mxu0 0.0
    %2285 = vmatpush1.msra.mxu0 %v569
    %2286 = vmatprep.subr.mxu0 0.0
    %2287 = vmatpush1.msra.mxu0 %v570
    %2288 = vmatprep.subr.mxu0 0.0
    %2289 = vmatpush1.msra.mxu0 %v571
    %2290 = vmatprep.subr.mxu0 0.0
    %2291 = vmatpush1.msra.mxu0 %v572
    %2292 = vmatprep.subr.mxu0 0.0
    %2293 = vmatpush1.msra.mxu0 0.0
    %2294 = vmatprep.subr.mxu0 0.0
    %2295 = vmatpush1.msra.mxu0 0.0
    %2296 = vmatprep.subr.mxu0 0.0
    %2297 = vmatpush1.msra.mxu0 0.0
    %2298 = vmatprep.subr.mxu0 0.0
    %2299 = vmatpush1.msra.mxu0 0.0
    %2300 = vmatprep.subr.mxu0 0.0
    %2301 = vmatpush1.msra.mxu0 0.0
    %2302 = vmatprep.subr.mxu0 0.0
    %2303 = vmatpush1.msra.mxu0 0.0
    %2304 = vmatprep.subr.mxu0 0.0
    %2305 = vmatpush1.msra.mxu0 0.0
    %2306 = vmatprep.subr.mxu0 0.0
    %2307 = vmatpush1.msra.mxu0 0.0
    %2308 = vmatprep.subr.mxu0 0.0
    %2309 = vmatpush1.msra.mxu0 0.0
    %2310 = vmatprep.subr.mxu0 0.0
    %2311 = vmatpush1.msra.mxu0 0.0
    %2312 = vmatprep.subr.mxu0 0.0
    %2313 = vmatpush1.msra.mxu0 0.0
    %2314 = vmatprep.subr.mxu0 0.0
    %2315 = vmatpush1.msra.mxu0 0.0
    %2316 = vmatprep.subr.mxu0 0.0
    %2317 = vmatpush1.msra.mxu0 0.0
    %2318 = vmatprep.subr.mxu0 0.0
    %2319 = vmatpush1.msra.mxu0 0.0
    %2320 = vmatprep.subr.mxu0 0.0
    %2321 = vmatpush1.msra.mxu0 0.0
    %2322 = vmatprep.subr.mxu0 0.0
    %2323 = vmatpush1.msra.mxu0 0.0
    %2324 = vmatprep.subr.mxu0 0.0
    %2325 = vmatpush1.msra.mxu0 0.0
    %2326 = vmatprep.subr.mxu0 0.0
    %2327 = vmatpush1.msra.mxu0 0.0
    %2328 = vmatprep.subr.mxu0 0.0
    %2329 = vmatpush1.msra.mxu0 0.0
    %2330 = vmatprep.subr.mxu0 0.0
    %2331 = vmatpush1.msra.mxu0 0.0
    %2332 = vmatprep.subr.mxu0 0.0
    %2333 = vmatpush1.msra.mxu0 0.0
    %2334 = vmatprep.subr.mxu0 0.0
    %2335 = vmatpush1.msra.mxu0 0.0
    %2336 = vmatprep.subr.mxu0 0.0
    %2337 = vmatpush1.msra.mxu0 0.0
    %2338 = vmatprep.subr.mxu0 0.0
    %2339 = vmatpush1.msra.mxu0 0.0
    %2340 = vmatprep.subr.mxu0 0.0
    %2341 = vmatpush1.msra.mxu0 0.0
    %2342 = vmatprep.subr.mxu0 0.0
    %2343 = vmatpush1.msra.mxu0 0.0
    %2344 = vmatprep.subr.mxu0 0.0
    %2345 = vmatpush1.msra.mxu0 0.0
    %2346 = vmatprep.subr.mxu0 0.0
    %2347 = vmatpush1.msra.mxu0 0.0
    %2348 = vmatprep.mubr.f32.mxu0 0.0
    %2349 = vmatmul.mubr.f32.gmra.mrb[0].mxu0 %v2282
    %v2350 = vpop.f32.mrb[0].mxu0
    %v2351 = vadd.f32 0.0, %v2350
    %v2352 = vpop.f32.mrb[0].mxu0
    %2353 = vdwg.mxu0
    %v2354 = vadd.f32 %v2280, %v2351
    %v2355 = vxor.u32 %v2354, 2147483648
    %v2356 = vmul.f32 %v2355, 1.442695
    %v2357 = vpow.pop %v2356
    %v2358 = vadd.f32 %v2357, 1.0
    %v2359 = vrcp.pop %v2358
    %v2360 = vmul.f32 1.0, %v2359
    %s2361 = scalar_lea.vmem [#allocation3], 14
    %v2362 = vld [vmem:[%s2361] sm:$0x3]
    %2363 = vmatprep.subr.mxu0 0.0
    %2364 = vmatpush1.msra.mxu0 %v573
    %2365 = vmatprep.subr.mxu0 0.0
    %2366 = vmatpush1.msra.mxu0 %v574
    %2367 = vmatprep.subr.mxu0 0.0
    %2368 = vmatpush1.msra.mxu0 %v575
    %2369 = vmatprep.subr.mxu0 0.0
    %2370 = vmatpush1.msra.mxu0 %v576
    %2371 = vmatprep.subr.mxu0 0.0
    %2372 = vmatpush1.msra.mxu0 0.0
    %2373 = vmatprep.subr.mxu0 0.0
    %2374 = vmatpush1.msra.mxu0 0.0
    %2375 = vmatprep.subr.mxu0 0.0
    %2376 = vmatpush1.msra.mxu0 0.0
    %2377 = vmatprep.subr.mxu0 0.0
    %2378 = vmatpush1.msra.mxu0 0.0
    %2379 = vmatprep.subr.mxu0 0.0
    %2380 = vmatpush1.msra.mxu0 0.0
    %2381 = vmatprep.subr.mxu0 0.0
    %2382 = vmatpush1.msra.mxu0 0.0
    %2383 = vmatprep.subr.mxu0 0.0
    %2384 = vmatpush1.msra.mxu0 0.0
    %2385 = vmatprep.subr.mxu0 0.0
    %2386 = vmatpush1.msra.mxu0 0.0
    %2387 = vmatprep.subr.mxu0 0.0
    %2388 = vmatpush1.msra.mxu0 0.0
    %2389 = vmatprep.subr.mxu0 0.0
    %2390 = vmatpush1.msra.mxu0 0.0
    %2391 = vmatprep.subr.mxu0 0.0
    %2392 = vmatpush1.msra.mxu0 0.0
    %2393 = vmatprep.subr.mxu0 0.0
    %2394 = vmatpush1.msra.mxu0 0.0
    %2395 = vmatprep.subr.mxu0 0.0
    %2396 = vmatpush1.msra.mxu0 0.0
    %2397 = vmatprep.subr.mxu0 0.0
    %2398 = vmatpush1.msra.mxu0 0.0
    %2399 = vmatprep.subr.mxu0 0.0
    %2400 = vmatpush1.msra.mxu0 0.0
    %2401 = vmatprep.subr.mxu0 0.0
    %2402 = vmatpush1.msra.mxu0 0.0
    %2403 = vmatprep.subr.mxu0 0.0
    %2404 = vmatpush1.msra.mxu0 0.0
    %2405 = vmatprep.subr.mxu0 0.0
    %2406 = vmatpush1.msra.mxu0 0.0
    %2407 = vmatprep.subr.mxu0 0.0
    %2408 = vmatpush1.msra.mxu0 0.0
    %2409 = vmatprep.subr.mxu0 0.0
    %2410 = vmatpush1.msra.mxu0 0.0
    %2411 = vmatprep.subr.mxu0 0.0
    %2412 = vmatpush1.msra.mxu0 0.0
    %2413 = vmatprep.subr.mxu0 0.0
    %2414 = vmatpush1.msra.mxu0 0.0
    %2415 = vmatprep.subr.mxu0 0.0
    %2416 = vmatpush1.msra.mxu0 0.0
    %2417 = vmatprep.subr.mxu0 0.0
    %2418 = vmatpush1.msra.mxu0 0.0
    %2419 = vmatprep.subr.mxu0 0.0
    %2420 = vmatpush1.msra.mxu0 0.0
    %2421 = vmatprep.subr.mxu0 0.0
    %2422 = vmatpush1.msra.mxu0 0.0
    %2423 = vmatprep.subr.mxu0 0.0
    %2424 = vmatpush1.msra.mxu0 0.0
    %2425 = vmatprep.subr.mxu0 0.0
    %2426 = vmatpush1.msra.mxu0 0.0
    %2427 = vmatprep.mubr.f32.mxu0 0.0
    %2428 = vmatmul.mubr.f32.gmra.mrb[0].mxu0 %v2282
    %v2429 = vpop.f32.mrb[0].mxu0
    %v2430 = vadd.f32 0.0, %v2429
    %v2431 = vpop.f32.mrb[0].mxu0
    %2432 = vdwg.mxu0
    %v2433 = vadd.f32 %v2362, %v2430
    %v2434 = vxor.u32 %v2433, 2147483648
    %v2435 = vmul.f32 %v2434, 1.442695
    %v2436 = vpow.pop %v2435
    %v2437 = vadd.f32 %v2436, 1.0
    %v2438 = vrcp.pop %v2437
    %v2439 = vmul.f32 1.0, %v2438
    %2440 = vmatprep.subr.mxu0 0.0
    %2441 = vmatpush1.msra.mxu0 %v577
    %2442 = vmatprep.subr.mxu0 0.0
    %2443 = vmatpush1.msra.mxu0 %v578
    %2444 = vmatprep.subr.mxu0 0.0
    %2445 = vmatpush1.msra.mxu0 %v579
    %2446 = vmatprep.subr.mxu0 0.0
    %2447 = vmatpush1.msra.mxu0 %v580
    %2448 = vmatprep.subr.mxu0 0.0
    %2449 = vmatpush1.msra.mxu0 0.0
    %2450 = vmatprep.subr.mxu0 0.0
    %2451 = vmatpush1.msra.mxu0 0.0
    %2452 = vmatprep.subr.mxu0 0.0
    %2453 = vmatpush1.msra.mxu0 0.0
    %2454 = vmatprep.subr.mxu0 0.0
    %2455 = vmatpush1.msra.mxu0 0.0
    %2456 = vmatprep.subr.mxu0 0.0
    %2457 = vmatpush1.msra.mxu0 0.0
    %2458 = vmatprep.subr.mxu0 0.0
    %2459 = vmatpush1.msra.mxu0 0.0
    %2460 = vmatprep.subr.mxu0 0.0
    %2461 = vmatpush1.msra.mxu0 0.0
    %2462 = vmatprep.subr.mxu0 0.0
    %2463 = vmatpush1.msra.mxu0 0.0
    %2464 = vmatprep.subr.mxu0 0.0
    %2465 = vmatpush1.msra.mxu0 0.0
    %2466 = vmatprep.subr.mxu0 0.0
    %2467 = vmatpush1.msra.mxu0 0.0
    %2468 = vmatprep.subr.mxu0 0.0
    %2469 = vmatpush1.msra.mxu0 0.0
    %2470 = vmatprep.subr.mxu0 0.0
    %2471 = vmatpush1.msra.mxu0 0.0
    %2472 = vmatprep.subr.mxu0 0.0
    %2473 = vmatpush1.msra.mxu0 0.0
    %2474 = vmatprep.subr.mxu0 0.0
    %2475 = vmatpush1.msra.mxu0 0.0
    %2476 = vmatprep.subr.mxu0 0.0
    %2477 = vmatpush1.msra.mxu0 0.0
    %2478 = vmatprep.subr.mxu0 0.0
    %2479 = vmatpush1.msra.mxu0 0.0
    %2480 = vmatprep.subr.mxu0 0.0
    %2481 = vmatpush1.msra.mxu0 0.0
    %2482 = vmatprep.subr.mxu0 0.0
    %2483 = vmatpush1.msra.mxu0 0.0
    %2484 = vmatprep.subr.mxu0 0.0
    %2485 = vmatpush1.msra.mxu0 0.0
    %2486 = vmatprep.subr.mxu0 0.0
    %2487 = vmatpush1.msra.mxu0 0.0
    %2488 = vmatprep.subr.mxu0 0.0
    %2489 = vmatpush1.msra.mxu0 0.0
    %2490 = vmatprep.subr.mxu0 0.0
    %2491 = vmatpush1.msra.mxu0 0.0
    %2492 = vmatprep.subr.mxu0 0.0
    %2493 = vmatpush1.msra.mxu0 0.0
    %2494 = vmatprep.subr.mxu0 0.0
    %2495 = vmatpush1.msra.mxu0 0.0
    %2496 = vmatprep.subr.mxu0 0.0
    %2497 = vmatpush1.msra.mxu0 0.0
    %2498 = vmatprep.subr.mxu0 0.0
    %2499 = vmatpush1.msra.mxu0 0.0
    %2500 = vmatprep.subr.mxu0 0.0
    %2501 = vmatpush1.msra.mxu0 0.0
    %2502 = vmatprep.subr.mxu0 0.0
    %2503 = vmatpush1.msra.mxu0 0.0
    %2504 = vmatprep.mubr.f32.mxu0 0.0
    %2505 = vmatmul.mubr.f32.gmra.mrb[0].mxu0 %v2282
    %v2506 = vpop.f32.mrb[0].mxu0
    %v2507 = vadd.f32 %v586, %v2506
    %v2508 = vpop.f32.mrb[0].mxu0
    %2509 = vdwg.mxu0
    %s2510 = scalar_lea.vmem [#allocation4], 14
    %v2511 = vld [vmem:[%s2510] sm:$0x3]
    %v2512 = vmul.f32 %v2360, %v2507
    %v2513 = vadd.f32 %v2511, %v2512
    %v2514 = vtanh.pop %v2513
    %v2515 = vsub.f32 1.0, %v2439
    %v2516 = vmul.f32 %v2515, %v2514
    %v2517 = vmul.f32 %v2439, %v2276
    %v2518 = vadd.f32 %v2516, %v2517
    %s2519 = scalar_lea.vmem [#allocation5], 14
    %2520 = vst.msk [vmem:[%s2519] sm:$0x3] %vm290, %v2518
    %v2521 = vld [vmem:[#allocation5] sm:$0x3]
    %v2522 = vld [vmem:[#allocation5 + $0x2] sm:$0x3]
    %v2523 = vld [vmem:[#allocation5 + $0x4] sm:$0x3]
    %v2524 = vld [vmem:[#allocation5 + $0x6] sm:$0x3]
    %v2525 = vld [vmem:[#allocation5 + $0x8] sm:$0x3]
    %v2526 = vld [vmem:[#allocation5 + $0xa] sm:$0x3]
    %v2527 = vld [vmem:[#allocation5 + $0xc] sm:$0x3]
    %v2528 = vld [vmem:[#allocation5 + $0xe] sm:$0x3]
    %v2529 = vld [vmem:[%s11] sm:$0xff]
    %v2530 = vld [vmem:[%s11 + $0x8] sm:$0xff]
    %v2531 = vld [vmem:[%s11 + $0x10] sm:$0xff]
    %v2532 = vld [vmem:[%s11 + $0x18] sm:$0xff]
    %v2533 = vld [vmem:[#allocation6] sm:$0x1]
    %v2535 = vlaneseq
    %v2536 = vshrl.u32 %v2535, 7
    %v2537 = vsub.s32 0, %v2536
    %v2538 = vrot.slane %v2533, %v2537
    %v2548 = vcombine.low %v2521, %v2522
    %v2549 = vcombine.low %v2523, %v2524
    %v2551 = vunpack.c.l.s4 1983009808
    %v2552 = vunpack.c.0.s8 %v2551
    %v2553 = vlaneseq
    %v2554 = vshrl.u32 %v2553, 7
    %v2555 = vsub.s32 %v2552, %v2554
    %v2556 = vrot.slane %v2548, %v2555
    %v2558 = vunpack.c.l.s4 1983009808
    %v2559 = vunpack.c.0.s8 %v2558
    %v2560 = vlaneseq
    %v2561 = vshrl.u32 %v2560, 7
    %v2562 = vsub.s32 %v2559, %v2561
    %v2563 = vrot.slane %v2549, %v2562
    %v2564 = vcombine.low %v2556, %v2563
    %v2565 = vcombine.low %v2525, %v2526
    %v2566 = vcombine.low %v2527, %v2528
    %v2568 = vunpack.c.l.s4 1983009808
    %v2569 = vunpack.c.0.s8 %v2568
    %v2570 = vlaneseq
    %v2571 = vshrl.u32 %v2570, 7
    %v2572 = vsub.s32 %v2569, %v2571
    %v2573 = vrot.slane %v2565, %v2572
    %v2575 = vunpack.c.l.s4 1983009808
    %v2576 = vunpack.c.0.s8 %v2575
    %v2577 = vlaneseq
    %v2578 = vshrl.u32 %v2577, 7
    %v2579 = vsub.s32 %v2576, %v2578
    %v2580 = vrot.slane %v2566, %v2579
    %v2581 = vcombine.low %v2573, %v2580
    %v2582 = vsel %vm589, %v2564, 0
    %v2584 = vsel %vm589, %v2581, 0
    %2586 = vmatprep.subr.mxu0 0.0
    %2587 = vmatpush1.msra.mxu0 %v2529
    %2588 = vmatprep.subr.mxu0 0.0
    %2589 = vmatpush1.msra.mxu0 %v2530
    %2590 = vmatprep.subr.mxu0 0.0
    %2591 = vmatpush1.msra.mxu0 %v2531
    %2592 = vmatprep.subr.mxu0 0.0
    %2593 = vmatpush1.msra.mxu0 %v2532
    %2594 = vmatprep.subr.mxu0 0.0
    %2595 = vmatpush1.msra.mxu0 0.0
    %2596 = vmatprep.subr.mxu0 0.0
    %2597 = vmatpush1.msra.mxu0 0.0
    %2598 = vmatprep.subr.mxu0 0.0
    %2599 = vmatpush1.msra.mxu0 0.0
    %2600 = vmatprep.subr.mxu0 0.0
    %2601 = vmatpush1.msra.mxu0 0.0
    %2602 = vmatprep.subr.mxu0 0.0
    %2603 = vmatpush1.msra.mxu0 0.0
    %2604 = vmatprep.subr.mxu0 0.0
    %2605 = vmatpush1.msra.mxu0 0.0
    %2606 = vmatprep.subr.mxu0 0.0
    %2607 = vmatpush1.msra.mxu0 0.0
    %2608 = vmatprep.subr.mxu0 0.0
    %2609 = vmatpush1.msra.mxu0 0.0
    %2610 = vmatprep.subr.mxu0 0.0
    %2611 = vmatpush1.msra.mxu0 0.0
    %2612 = vmatprep.subr.mxu0 0.0
    %2613 = vmatpush1.msra.mxu0 0.0
    %2614 = vmatprep.subr.mxu0 0.0
    %2615 = vmatpush1.msra.mxu0 0.0
    %2616 = vmatprep.subr.mxu0 0.0
    %2617 = vmatpush1.msra.mxu0 0.0
    %2618 = vmatprep.subr.mxu0 0.0
    %2619 = vmatpush1.msra.mxu0 0.0
    %2620 = vmatprep.subr.mxu0 0.0
    %2621 = vmatpush1.msra.mxu0 0.0
    %2622 = vmatprep.subr.mxu0 0.0
    %2623 = vmatpush1.msra.mxu0 0.0
    %2624 = vmatprep.subr.mxu0 0.0
    %2625 = vmatpush1.msra.mxu0 0.0
    %2626 = vmatprep.subr.mxu0 0.0
    %2627 = vmatpush1.msra.mxu0 0.0
    %2628 = vmatprep.subr.mxu0 0.0
    %2629 = vmatpush1.msra.mxu0 0.0
    %2630 = vmatprep.subr.mxu0 0.0
    %2631 = vmatpush1.msra.mxu0 0.0
    %2632 = vmatprep.subr.mxu0 0.0
    %2633 = vmatpush1.msra.mxu0 0.0
    %2634 = vmatprep.subr.mxu0 0.0
    %2635 = vmatpush1.msra.mxu0 0.0
    %2636 = vmatprep.subr.mxu0 0.0
    %2637 = vmatpush1.msra.mxu0 0.0
    %2638 = vmatprep.subr.mxu0 0.0
    %2639 = vmatpush1.msra.mxu0 0.0
    %2640 = vmatprep.subr.mxu0 0.0
    %2641 = vmatpush1.msra.mxu0 0.0
    %2642 = vmatprep.subr.mxu0 0.0
    %2643 = vmatpush1.msra.mxu0 0.0
    %2644 = vmatprep.subr.mxu0 0.0
    %2645 = vmatpush1.msra.mxu0 0.0
    %2646 = vmatprep.subr.mxu0 0.0
    %2647 = vmatpush1.msra.mxu0 0.0
    %2648 = vmatprep.subr.mxu0 0.0
    %2649 = vmatpush1.msra.mxu0 0.0
    %2650 = vmatprep.mubr.f32.mxu0 0.0
    %2651 = vmatmul.mubr.f32.gmra.mrb[0].mxu0 %v2582
    %v2652 = vpop.f32.mrb[0].mxu0
    %v2653 = vadd.f32 %v2538, %v2652
    %v2654 = vpop.f32.mrb[0].mxu0
    %2655 = vmatprep.mubr.f32.mxu0 0.0
    %2656 = vmatmul.mubr.f32.gmra.mrb[0].mxu0 %v2584
    %v2657 = vpop.f32.mrb[0].mxu0
    %v2658 = vadd.f32 %v2538, %v2657
    %v2659 = vpop.f32.mrb[0].mxu0
    %2660 = vdwg.mxu0
    %v2661 = vxor.u32 %v2653, 2147483648
    %v2662 = vxor.u32 %v2658, 2147483648
    %v2663 = vmul.f32 %v2661, 1.442695
    %v2664 = vpow.pop %v2663
    %v2665 = vmul.f32 %v2662, 1.442695
    %v2666 = vpow.pop %v2665
    %v2667 = vadd.f32 %v2664, 1.0
    %v2668 = vadd.f32 %v2666, 1.0
    %v2669 = vrcp.pop %v2667
    %v2670 = vmul.f32 1.0, %v2669
    %v2671 = vrcp.pop %v2668
    %v2672 = vmul.f32 1.0, %v2671
    %v2675 = vcombine.high %v2670, %v2670
    %v2677 = vunpack.c.l.s4 1983009808
    %v2678 = vunpack.c.0.s8 %v2677
    %v2679 = vlaneseq
    %v2680 = vshrl.u32 %v2679, 7
    %v2681 = vsub.s32 %v2678, %v2680
    %v2682 = vrot.slane %v2670, %v2681
    %v2684 = vunpack.c.l.s4 1983009808
    %v2685 = vunpack.c.0.s8 %v2684
    %v2686 = vlaneseq
    %v2687 = vshrl.u32 %v2686, 7
    %v2688 = vsub.s32 %v2685, %v2687
    %v2689 = vrot.slane %v2675, %v2688
    %v2690 = vcombine.high %v2682, %v2682
    %v2691 = vcombine.high %v2689, %v2689
    %v2692 = vcombine.high %v2672, %v2672
    %v2694 = vunpack.c.l.s4 1983009808
    %v2695 = vunpack.c.0.s8 %v2694
    %v2696 = vlaneseq
    %v2697 = vshrl.u32 %v2696, 7
    %v2698 = vsub.s32 %v2695, %v2697
    %v2699 = vrot.slane %v2672, %v2698
    %v2701 = vunpack.c.l.s4 1983009808
    %v2702 = vunpack.c.0.s8 %v2701
    %v2703 = vlaneseq
    %v2704 = vshrl.u32 %v2703, 7
    %v2705 = vsub.s32 %v2702, %v2704
    %v2706 = vrot.slane %v2692, %v2705
    %v2707 = vcombine.high %v2699, %v2699
    %v2708 = vcombine.high %v2706, %v2706
    %v2710 = vunpack.c.l.s4 1983009808
    %v2711 = vunpack.c.0.s8 %v2710
    %v2712 = vlaneseq
    %v2713 = vshrl.u32 %v2712, 7
    %v2714 = vsub.s32 %v2711, %v2713
    %v2715 = vrot.slane %v2682, %v2714
    %v2717 = vunpack.c.l.s4 1983009808
    %v2718 = vunpack.c.0.s8 %v2717
    %v2719 = vlaneseq
    %v2720 = vshrl.u32 %v2719, 7
    %v2721 = vsub.s32 %v2718, %v2720
    %v2722 = vrot.slane %v2690, %v2721
    %v2724 = vunpack.c.l.s4 1983009808
    %v2725 = vunpack.c.0.s8 %v2724
    %v2726 = vlaneseq
    %v2727 = vshrl.u32 %v2726, 7
    %v2728 = vsub.s32 %v2725, %v2727
    %v2729 = vrot.slane %v2689, %v2728
    %v2731 = vunpack.c.l.s4 1983009808
    %v2732 = vunpack.c.0.s8 %v2731
    %v2733 = vlaneseq
    %v2734 = vshrl.u32 %v2733, 7
    %v2735 = vsub.s32 %v2732, %v2734
    %v2736 = vrot.slane %v2691, %v2735
    %v2738 = vunpack.c.l.s4 1983009808
    %v2739 = vunpack.c.0.s8 %v2738
    %v2740 = vlaneseq
    %v2741 = vshrl.u32 %v2740, 7
    %v2742 = vsub.s32 %v2739, %v2741
    %v2743 = vrot.slane %v2699, %v2742
    %v2745 = vunpack.c.l.s4 1983009808
    %v2746 = vunpack.c.0.s8 %v2745
    %v2747 = vlaneseq
    %v2748 = vshrl.u32 %v2747, 7
    %v2749 = vsub.s32 %v2746, %v2748
    %v2750 = vrot.slane %v2707, %v2749
    %v2752 = vunpack.c.l.s4 1983009808
    %v2753 = vunpack.c.0.s8 %v2752
    %v2754 = vlaneseq
    %v2755 = vshrl.u32 %v2754, 7
    %v2756 = vsub.s32 %v2753, %v2755
    %v2757 = vrot.slane %v2706, %v2756
    %v2759 = vunpack.c.l.s4 1983009808
    %v2760 = vunpack.c.0.s8 %v2759
    %v2761 = vlaneseq
    %v2762 = vshrl.u32 %v2761, 7
    %v2763 = vsub.s32 %v2760, %v2762
    %v2764 = vrot.slane %v2708, %v2763
    %2765 = vset.pattern.permute.xlu0 0
    %2766 = vperm.xlu0 %2765, %v2715
    %v2767 = vpop.permute.xlu0 %2766
    %2768 = vset.pattern.permute.xlu0 0
    %2769 = vperm.xlu0 %2768, %v2722
    %v2770 = vpop.permute.xlu0 %2769
    %2771 = vset.pattern.permute.xlu0 0
    %2772 = vperm.xlu0 %2771, %v2729
    %v2773 = vpop.permute.xlu0 %2772
    %2774 = vset.pattern.permute.xlu0 0
    %2775 = vperm.xlu0 %2774, %v2736
    %v2776 = vpop.permute.xlu0 %2775
    %2777 = vset.pattern.permute.xlu0 0
    %2778 = vperm.xlu0 %2777, %v2743
    %v2779 = vpop.permute.xlu0 %2778
    %2780 = vset.pattern.permute.xlu0 0
    %2781 = vperm.xlu0 %2780, %v2750
    %v2782 = vpop.permute.xlu0 %2781
    %2783 = vset.pattern.permute.xlu0 0
    %2784 = vperm.xlu0 %2783, %v2757
    %v2785 = vpop.permute.xlu0 %2784
    %2786 = vset.pattern.permute.xlu0 0
    %2787 = vperm.xlu0 %2786, %v2764
    %v2788 = vpop.permute.xlu0 %2787
    %v2789 = vlaneseq
    %v2790 = vand.u32 %v2789, 127
    %v2791 = vlaneseq
    %v2792 = vshrl.u32 %v2791, 7
    %v2793 = vsub.s32 %v2790, %v2792
    %v2794 = vrot.slane %v2767, %v2793
    %v2795 = vlaneseq
    %v2796 = vshrl.u32 %v2795, 7
    %v2797 = vsub.s32 %v2790, %v2796
    %v2798 = vrot.slane %v2770, %v2797
    %v2799 = vlaneseq
    %v2800 = vshrl.u32 %v2799, 7
    %v2801 = vsub.s32 %v2790, %v2800
    %v2802 = vrot.slane %v2773, %v2801
    %v2803 = vlaneseq
    %v2804 = vshrl.u32 %v2803, 7
    %v2805 = vsub.s32 %v2790, %v2804
    %v2806 = vrot.slane %v2776, %v2805
    %v2807 = vlaneseq
    %v2808 = vshrl.u32 %v2807, 7
    %v2809 = vsub.s32 %v2790, %v2808
    %v2810 = vrot.slane %v2779, %v2809
    %v2811 = vlaneseq
    %v2812 = vshrl.u32 %v2811, 7
    %v2813 = vsub.s32 %v2790, %v2812
    %v2814 = vrot.slane %v2782, %v2813
    %v2815 = vlaneseq
    %v2816 = vshrl.u32 %v2815, 7
    %v2817 = vsub.s32 %v2790, %v2816
    %v2818 = vrot.slane %v2785, %v2817
    %v2819 = vlaneseq
    %v2820 = vshrl.u32 %v2819, 7
    %v2821 = vsub.s32 %v2790, %v2820
    %v2822 = vrot.slane %v2788, %v2821
    %vm2823 = vcmask 1041409
    %v2824 = vsel %vm2823, %v2798, %v2794
    %vm2825 = vcmask 1042434
    %v2826 = vsel %vm2825, %v2802, %v2824
    %vm2827 = vcmask 1043459
    %v2828 = vsel %vm2827, %v2806, %v2826
    %vm2829 = vcmask 1044484
    %v2830 = vsel %vm2829, %v2810, %v2828
    %vm2831 = vcmask 1045509
    %v2832 = vsel %vm2831, %v2814, %v2830
    %vm2833 = vcmask 1046534
    %v2834 = vsel %vm2833, %v2818, %v2832
    %vm2835 = vcmask 1047559
    %v2836 = vsel %vm2835, %v2822, %v2834
    %vm2838 = vcmask 15360
    %2839 = vst.msk [vmem:[%s13] sm:$0xff] %vm2838, %v2836
    // Predicated region
    $region74: #{tpu_custom_call.1} parent=1 // pred_check
      _
    $region75: #{tpu_custom_call.1} parent=1 // pred_check_branch
      %2841 = sbr.rel (0) target = $region77
    $region76: #{tpu_custom_call.1} parent=1 // pred_region
      _
    $region77: #{tpu_custom_call.1} parent=1 // pred_fallthru
      _
    // Predicated region
    $region78: #{tpu_custom_call.1} parent=1 // pred_check
      _
    $region79: #{tpu_custom_call.1} parent=1 // pred_check_branch
      %2843 = sbr.rel (0) target = $region81
    $region80: #{tpu_custom_call.1} parent=1 // pred_region
      _
    $region81: #{tpu_custom_call.1} parent=1 // pred_fallthru
      _
    %2844 = vsyncpa [#allocation8], 1
    %2845 = vsyncpa [#allocation10], 1
    %2846 = vsyncpa [#allocation13], 1

</llo_original>
